<compile_context>
chip_gen: v7x
topology: tpu7x:2x2x1
jax: 0.10.0
libtpu: 0.0.40
codegen_flags: <defaults>
</compile_context>

<pallas_src>
import functools

import jax
import jax.numpy as jnp
from jax.experimental import pallas as pl
from jax.experimental.pallas import tpu as pltpu


# ----------------------------------------------------------------------------
# Conv2d with "same" padding: single fat matmul per row tile, lane-dense stores.
# ----------------------------------------------------------------------------
_ROW_TILE = 256  # output-pixel rows per grid step (multiple of 128 -> lane dense)


def _conv2d_kernel(xs_ref, w_ref, b_ref, o_ref):
    # xs_ref: (K*Cin, Rt) bf16  im2col columns for Rt output pixels
    # w_ref : (Cout, K*Cin) bf16
    # b_ref : (Cout, 1)     f32
    # o_ref : (Cout, Rt)    f32 / bf16  -- channel-major, lane-dense stores
    acc = jnp.dot(w_ref[...], xs_ref[...], preferred_element_type=jnp.float32)
    o_ref[...] = (acc + b_ref[...]).astype(o_ref.dtype)


def conv2d_same(x_nchw, w, b, kernel_size, *, channel_major_out=False,
                out_dtype=jnp.float32):
    """x_nchw: (N, Cin, H, W); w: (KH*KW, Cin, Cout); b: (Cout,).

    Returns (N, Cout, H, W), or (Cout, N, H*W) if channel_major_out=True.
    """
    KH, KW = kernel_size
    ph, pw = KH // 2, KW // 2
    N, Cin, H, W = x_nchw.shape
    K = KH * KW
    Cout = w.shape[-1]
    R = N * H * W

    # TODO(synk): form the K taps in-kernel from a padded VMEM tile (static slices /
    # pltpu.roll) instead of materializing the K*Cin im2col in HBM.
    xc = jnp.transpose(x_nchw, (1, 0, 2, 3))                       # (Cin, N, H, W)
    xp = jnp.pad(xc, ((0, 0), (0, 0), (ph, ph), (pw, pw)))
    taps = [xp[:, :, kh:kh + H, kw:kw + W].reshape(Cin, R)
            for kh in range(KH) for kw in range(KW)]
    xs = jnp.concatenate(taps, axis=0).astype(jnp.bfloat16)        # (K*Cin, R) tap-major

    Rt = _ROW_TILE
    Rp = -(-R // Rt) * Rt
    if Rp != R:
        xs = jnp.pad(xs, ((0, 0), (0, Rp - R)))

    w2 = jnp.transpose(w.reshape(K * Cin, Cout)).astype(jnp.bfloat16)  # (Cout, K*Cin)
    b2 = b.reshape(Cout, 1).astype(jnp.float32)

    out_cmaj = pl.pallas_call(
        _conv2d_kernel,
        out_shape=jax.ShapeDtypeStruct((Cout, Rp), out_dtype),
        grid=(Rp // Rt,),
        in_specs=[
            pl.BlockSpec((K * Cin, Rt), lambda r: (0, r)),
            pl.BlockSpec((Cout, K * Cin), lambda r: (0, 0)),
            pl.BlockSpec((Cout, 1), lambda r: (0, 0)),
        ],
        out_specs=pl.BlockSpec((Cout, Rt), lambda r: (0, r)),
        compiler_params=pltpu.CompilerParams(dimension_semantics=("parallel",)),
    )(xs, w2, b2)

    out_cmaj = out_cmaj[:, :R]                                     # drop row padding
    if channel_major_out:
        return out_cmaj.reshape(Cout, N, H * W)
    return jnp.transpose(out_cmaj.reshape(Cout, N, H, W), (1, 0, 2, 3))   # NCHW


# ----------------------------------------------------------------------------
# Self-attention over the time axis: energy = Q K^T, softmax(-1), out = A V.
# Consumes the channel-major fused-QKV conv output directly (no JAX transposes).
# ----------------------------------------------------------------------------
def _attn_kernel(q_ref, k_ref, v_ref, o_ref):
    # q/k/v_ref: (Hd, T, S) bf16 for one batch element; o_ref: (Hd, T, S) f32
    q = q_ref[...]
    k = k_ref[...]
    v = v_ref[...]
    energy = jnp.einsum("htd,hsd->hts", q, k,
                        preferred_element_type=jnp.float32)        # (Hd, T, T)
    m = jnp.max(energy, axis=-1, keepdims=True)
    p = jnp.exp(energy - m)
    denom = jnp.sum(p, axis=-1, keepdims=True)
    attn = p * pl.reciprocal(denom, approx=True)                   # EUP slot, ~free
    o_ref[...] = jnp.einsum("hts,hsd->htd", attn.astype(v.dtype), v,
                            preferred_element_type=jnp.float32)


def self_attention_from_qkv(qkv, hidden_dim):
    """qkv: (3*Hd, B, T, S) bf16 (channel-major conv output) -> (B, Hd, T, S) f32."""
    # TODO(synk): for long T, tile the key axis with an online-softmax inner loop so
    # the (Hd, T, T) energy never exceeds VMEM (v7x has only 64 MiB).
    Hd = hidden_dim
    _, B, T, S = qkv.shape

    def in_spec(which):
        # Block index `which` along axis 0 selects the Q / K / V channel slab.
        return pl.BlockSpec((Hd, None, T, S), lambda b, w=which: (w, b, 0, 0))

    return pl.pallas_call(
        _attn_kernel,
        out_shape=jax.ShapeDtypeStruct((B, Hd, T, S), jnp.float32),
        grid=(B,),
        in_specs=[in_spec(0), in_spec(1), in_spec(2)],
        out_specs=pl.BlockSpec((None, Hd, T, S), lambda b: (b, 0, 0, 0)),
        compiler_params=pltpu.CompilerParams(dimension_semantics=("parallel",)),
    )(qkv, qkv, qkv)


# ----------------------------------------------------------------------------
# LayerNorm over [hidden, H, W] per (B, T) element — row-blocked.
# ----------------------------------------------------------------------------
def _layernorm_kernel(x_ref, g_ref, b_ref, o_ref, *, eps):
    x = x_ref[...]                                    # (Rt, D) f32
    mean = jnp.mean(x, axis=-1, keepdims=True)
    xc = x - mean
    var = jnp.mean(xc * xc, axis=-1, keepdims=True)   # biased variance, as in PyTorch
    o_ref[...] = xc * jax.lax.rsqrt(var + eps) * g_ref[...] + b_ref[...]


def layer_norm_rows(x_2d, gamma, beta, eps=1e-5):
    """x_2d: (N, D); gamma, beta: (D,). Many rows per grid step."""
    N, D = x_2d.shape
    Np = -(-N // 8) * 8                               # sublane-align row count
    Rt = Np if Np <= 256 else 256
    Np = -(-Np // Rt) * Rt
    if Np != N:
        x_2d = jnp.pad(x_2d, ((0, Np - N), (0, 0)))
    kern = functools.partial(_layernorm_kernel, eps=eps)
    out = pl.pallas_call(
        kern,
        out_shape=jax.ShapeDtypeStruct((Np, D), jnp.float32),
        grid=(Np // Rt,),
        in_specs=[
            pl.BlockSpec((Rt, D), lambda r: (r, 0)),
            pl.BlockSpec((1, D), lambda r: (0, 0)),
            pl.BlockSpec((1, D), lambda r: (0, 0)),
        ],
        out_specs=pl.BlockSpec((Rt, D), lambda r: (r, 0)),
        compiler_params=pltpu.CompilerParams(dimension_semantics=("parallel",)),
    )(x_2d, gamma.reshape(1, D), beta.reshape(1, D))
    return out[:N]


# ----------------------------------------------------------------------------
# ConvSelfAttentionCell / ConvSelfAttention forward (matches PyTorch semantics)
# ----------------------------------------------------------------------------
def conv_self_attention_cell(p, x_btchw, kernel_size):
    B, T, C, H, W = x_btchw.shape
    HW = H * W
    Hd = p["q_b"].shape[0]
    x_flat = x_btchw.reshape(B * T, C, H, W)

    # Fused Q/K/V projection: one im2col + one matmul, Cout = 3*Hd.
    qkv_w = jnp.concatenate([p["q_w"], p["k_w"], p["v_w"]], axis=-1)   # (K, Cin, 3*Hd)
    qkv_b = jnp.concatenate([p["q_b"], p["k_b"], p["v_b"]])
    qkv = conv2d_same(x_flat, qkv_w, qkv_b, kernel_size,
                      channel_major_out=True, out_dtype=jnp.bfloat16)  # (3*Hd, B*T, HW)
    # Channel-major conv output reshapes straight into the attention layout;
    # this IS PyTorch's .view(B, T, Hd, HW).permute(0, 2, 1, 3) — no transpose needed.
    qkv = qkv.reshape(3 * Hd, B, T, HW)

    out = self_attention_from_qkv(qkv, Hd)                             # (B, Hd, T, HW) f32
    # PyTorch's out.view(B*T, -1, H, W) on the contiguous (B, Hd, T, HW) tensor mixes
    # the Hd/T axes; a row-major reshape reproduces it exactly.
    out = out.reshape(B * T, Hd, H, W)

    cat = jnp.concatenate([x_flat, out], axis=1)                       # (B*T, C+Hd, H, W)
    cc = conv2d_same(cat, p["c_w"], p["c_b"], kernel_size,
                     channel_major_out=True)                           # (Hd, B*T, HW) f32
    cc = jnp.transpose(cc, (1, 0, 2)).reshape(B * T, Hd * HW)

    y = layer_norm_rows(cc, p["ln_g"], p["ln_b"])
    return y.reshape(B, T, Hd, H, W)


def conv_self_attention_forward(params, input_tensor, input_standalone,
                                kernel_sizes, num_layers):
    h = input_tensor
    for i in range(num_layers):
        h = conv_self_attention_cell(params["cells"][i], h, kernel_sizes[i])
    # return_all_layers=False -> use last layer output, last timestep
    conv_out = conv2d_same(h[:, -1], params["conv1_w"], params["conv1_b"], (3, 3))
    standalone_out = conv2d_same(input_standalone,
                                 params["conv2_w"], params["conv2_b"], (3, 3))
    combined = jnp.concatenate([conv_out, standalone_out], axis=1)
    final = conv2d_same(combined, params["conv3_w"], params["conv3_b"], (3, 3))
    return final


# ----------------------------------------------------------------------------
# Deterministic parameter init (synthetic; shapes from the module __init__)
# ----------------------------------------------------------------------------
def init_conv(key, cin, cout, kernel_size):
    kh, kw = kernel_size
    kw_key, kb_key = jax.random.split(key)
    fan_in = cin * kh * kw
    w = jax.random.normal(kw_key, (kh * kw, cin, cout), jnp.float32) / jnp.sqrt(fan_in)
    b = 0.01 * jax.random.normal(kb_key, (cout,), jnp.float32)
    return w, b


def init_params(key, input_dim, hidden_dims, kernel_sizes, num_layers,
                in_channels, out_channels, H, W):
    params = {"cells": []}
    keys = jax.random.split(key, 4 * num_layers + 3)
    ki = 0
    for i in range(num_layers):
        cur_in = input_dim if i == 0 else hidden_dims[i - 1]
        hd = hidden_dims[i]
        ks = kernel_sizes[i]
        q_w, q_b = init_conv(keys[ki], cur_in, hd, ks); ki += 1
        k_w, k_b = init_conv(keys[ki], cur_in, hd, ks); ki += 1
        v_w, v_b = init_conv(keys[ki], cur_in, hd, ks); ki += 1
        c_w, c_b = init_conv(keys[ki], cur_in + hd, hd, ks); ki += 1
        params["cells"].append({
            "q_w": q_w, "q_b": q_b, "k_w": k_w, "k_b": k_b,
            "v_w": v_w, "v_b": v_b, "c_w": c_w, "c_b": c_b,
            "ln_g": jnp.ones((hd * H * W,), jnp.float32),   # PyTorch LayerNorm default
            "ln_b": jnp.zeros((hd * H * W,), jnp.float32),
        })
    params["conv1_w"], params["conv1_b"] = init_conv(keys[ki], in_channels // 2,
                                                     out_channels, (3, 3)); ki += 1
    params["conv2_w"], params["conv2_b"] = init_conv(keys[ki], in_channels,
                                                     out_channels, (3, 3)); ki += 1
    params["conv3_w"], params["conv3_b"] = init_conv(keys[ki], out_channels * 2,
                                                     out_channels, (3, 3)); ki += 1
    return params


if __name__ == "__main__":
    # Small, consistent shapes (H*W = 256 keeps every Pallas store lane-dense):
    B, T = 2, 4
    input_dim = 4
    hidden_dim = 8            # must equal in_channels // 2 (conv1 constraint)
    kernel_size = (3, 3)
    num_layers = 1
    in_channels = 16
    out_channels = 4
    H, W = 16, 16             # tensor_size
    hidden_dims = [hidden_dim] * num_layers
    kernel_sizes = [kernel_size] * num_layers

    key = jax.random.PRNGKey(0)
    k_params, k_x, k_s = jax.random.split(key, 3)

    params = init_params(k_params, input_dim, hidden_dims, kernel_sizes,
                         num_layers, in_channels, out_channels, H, W)

    input_tensor = jax.random.normal(k_x, (B, T, input_dim, H, W), jnp.float32)
    input_standalone = jax.random.normal(k_s, (B, in_channels, H, W), jnp.float32)

    fwd = jax.jit(functools.partial(conv_self_attention_forward,
                                    kernel_sizes=kernel_sizes,
                                    num_layers=num_layers))
    out = fwd(params, input_tensor, input_standalone)
    out = jax.block_until_ready(out)

    assert out.shape == (B, out_channels, H, W), out.shape
    assert jnp.all(jnp.isfinite(out))
    print("KERNEL_OK")
</pallas_src>

<mosaic_0001>
module attributes {stable_mosaic.version = 11 : i64} {
  func.func @_conv2d_kernel(%arg0: i32, %arg1: memref<144x256xbf16, #tpu.memory_space<vmem>>, %arg2: memref<4x144xbf16, #tpu.memory_space<vmem>>, %arg3: memref<4x1xf32, #tpu.memory_space<vmem>>, %arg4: memref<4x256xf32, #tpu.memory_space<vmem>>) attributes {dimension_semantics = [#tpu.dimension_semantics<parallel>], iteration_bounds = array<i64: 2>, scalar_prefetch = 0 : i64, scratch_operands = 0 : i64, tpu.core_type = #tpu.core_type<tc>, window_params = [{transform_indices = @transform_0, window_bounds = array<i64: 144, 256>}, {pipeline_mode = #tpu.pipeline_mode<synchronous>, transform_indices = @transform_1, window_bounds = array<i64: 4, 144>}, {pipeline_mode = #tpu.pipeline_mode<synchronous>, transform_indices = @transform_2, window_bounds = array<i64: 4, 1>}, {transform_indices = @transform_3, window_bounds = array<i64: 4, 256>}]} {
    %c0 = arith.constant 0 : index
    %c0_0 = arith.constant 0 : index
    %0 = vector.load %arg2[%c0, %c0_0] : memref<4x144xbf16, #tpu.memory_space<vmem>>, vector<4x144xbf16>
    %c0_1 = arith.constant 0 : index
    %c0_2 = arith.constant 0 : index
    %1 = vector.load %arg1[%c0_1, %c0_2] : memref<144x256xbf16, #tpu.memory_space<vmem>>, vector<144x256xbf16>
    %cst = arith.constant dense<0.000000e+00> : vector<4x256xf32>
    %2 = tpu.matmul %0, %1, %cst {dimension_numbers = #tpu.dot_dimension_numbers<[1], [0], [0], [1], [0, 0, 1, 1], [], []>} : vector<4x144xbf16>, vector<144x256xbf16>, vector<4x256xf32> -> vector<4x256xf32>
    %c0_3 = arith.constant 0 : index
    %c0_4 = arith.constant 0 : index
    %3 = vector.load %arg3[%c0_3, %c0_4] : memref<4x1xf32, #tpu.memory_space<vmem>>, vector<4x1xf32>
    %4 = vector.broadcast %3 : vector<4x1xf32> to vector<4x256xf32>
    %5 = arith.addf %2, %4 : vector<4x256xf32>
    %c0_5 = arith.constant 0 : index
    %c0_6 = arith.constant 0 : index
    %6 = vector.load %arg4[%c0_5, %c0_6] : memref<4x256xf32, #tpu.memory_space<vmem>>, vector<4x256xf32>
    tpu.vector_store %arg4[%c0_5, %c0_6], %5 {strides = array<i32>} : memref<4x256xf32, #tpu.memory_space<vmem>>, vector<4x256xf32>,
    return
  }
  func.func @transform_0(%arg0: i32) -> (i32, i32) {
    %c0_i32 = arith.constant 0 : i32
    %c0_i32_0 = arith.constant 0 : i32
    return %c0_i32, %arg0 : i32, i32
  }
  func.func @transform_1(%arg0: i32) -> (i32, i32) {
    %c0_i32 = arith.constant 0 : i32
    %c0_i32_0 = arith.constant 0 : i32
    %c0_i32_1 = arith.constant 0 : i32
    return %c0_i32, %c0_i32_0 : i32, i32
  }
  func.func @transform_2(%arg0: i32) -> (i32, i32) {
    %c0_i32 = arith.constant 0 : i32
    %c0_i32_0 = arith.constant 0 : i32
    %c0_i32_1 = arith.constant 0 : i32
    return %c0_i32, %c0_i32_0 : i32, i32
  }
  func.func @transform_3(%arg0: i32) -> (i32, i32) {
    %c0_i32 = arith.constant 0 : i32
    %c0_i32_0 = arith.constant 0 : i32
    return %c0_i32, %arg0 : i32, i32
  }
}

module attributes {stable_mosaic.version = 11 : i64} {
  func.func @_conv2d_kernel(%arg0: i32, %arg1: memref<36x256xbf16, #tpu.memory_space<vmem>>, %arg2: memref<24x36xbf16, #tpu.memory_space<vmem>>, %arg3: memref<24x1xf32, #tpu.memory_space<vmem>>, %arg4: memref<24x256xbf16, #tpu.memory_space<vmem>>) attributes {dimension_semantics = [#tpu.dimension_semantics<parallel>], iteration_bounds = array<i64: 8>, scalar_prefetch = 0 : i64, scratch_operands = 0 : i64, tpu.core_type = #tpu.core_type<tc>, window_params = [{transform_indices = @transform_0, window_bounds = array<i64: 36, 256>}, {pipeline_mode = #tpu.pipeline_mode<synchronous>, transform_indices = @transform_1, window_bounds = array<i64: 24, 36>}, {pipeline_mode = #tpu.pipeline_mode<synchronous>, transform_indices = @transform_2, window_bounds = array<i64: 24, 1>}, {transform_indices = @transform_3, window_bounds = array<i64: 24, 256>}]} {
    %c0 = arith.constant 0 : index
    %c0_0 = arith.constant 0 : index
    %0 = vector.load %arg2[%c0, %c0_0] : memref<24x36xbf16, #tpu.memory_space<vmem>>, vector<24x36xbf16>
    %c0_1 = arith.constant 0 : index
    %c0_2 = arith.constant 0 : index
    %1 = vector.load %arg1[%c0_1, %c0_2] : memref<36x256xbf16, #tpu.memory_space<vmem>>, vector<36x256xbf16>
    %cst = arith.constant dense<0.000000e+00> : vector<24x256xf32>
    %2 = tpu.matmul %0, %1, %cst {dimension_numbers = #tpu.dot_dimension_numbers<[1], [0], [0], [1], [0, 0, 1, 1], [], []>} : vector<24x36xbf16>, vector<36x256xbf16>, vector<24x256xf32> -> vector<24x256xf32>
    %c0_3 = arith.constant 0 : index
    %c0_4 = arith.constant 0 : index
    %3 = vector.load %arg3[%c0_3, %c0_4] : memref<24x1xf32, #tpu.memory_space<vmem>>, vector<24x1xf32>
    %4 = vector.broadcast %3 : vector<24x1xf32> to vector<24x256xf32>
    %5 = arith.addf %2, %4 : vector<24x256xf32>
    %6 = arith.truncf %5 : vector<24x256xf32> to vector<24x256xbf16>
    %c0_5 = arith.constant 0 : index
    %c0_6 = arith.constant 0 : index
    %7 = vector.load %arg4[%c0_5, %c0_6] : memref<24x256xbf16, #tpu.memory_space<vmem>>, vector<24x256xbf16>
    tpu.vector_store %arg4[%c0_5, %c0_6], %6 {strides = array<i32>} : memref<24x256xbf16, #tpu.memory_space<vmem>>, vector<24x256xbf16>,
    return
  }
  func.func @transform_0(%arg0: i32) -> (i32, i32) {
    %c0_i32 = arith.constant 0 : i32
    %c0_i32_0 = arith.constant 0 : i32
    return %c0_i32, %arg0 : i32, i32
  }
  func.func @transform_1(%arg0: i32) -> (i32, i32) {
    %c0_i32 = arith.constant 0 : i32
    %c0_i32_0 = arith.constant 0 : i32
    %c0_i32_1 = arith.constant 0 : i32
    return %c0_i32, %c0_i32_0 : i32, i32
  }
  func.func @transform_2(%arg0: i32) -> (i32, i32) {
    %c0_i32 = arith.constant 0 : i32
    %c0_i32_0 = arith.constant 0 : i32
    %c0_i32_1 = arith.constant 0 : i32
    return %c0_i32, %c0_i32_0 : i32, i32
  }
  func.func @transform_3(%arg0: i32) -> (i32, i32) {
    %c0_i32 = arith.constant 0 : i32
    %c0_i32_0 = arith.constant 0 : i32
    return %c0_i32, %arg0 : i32, i32
  }
}

module attributes {stable_mosaic.version = 11 : i64} {
  func.func @_attn_kernel(%arg0: i32, %arg1: memref<8x1x4x256xbf16, #tpu.memory_space<vmem>>, %arg2: memref<8x1x4x256xbf16, #tpu.memory_space<vmem>>, %arg3: memref<8x1x4x256xbf16, #tpu.memory_space<vmem>>, %arg4: memref<1x8x4x256xf32, #tpu.memory_space<vmem>>) attributes {dimension_semantics = [#tpu.dimension_semantics<parallel>], iteration_bounds = array<i64: 2>, scalar_prefetch = 0 : i64, scratch_operands = 0 : i64, tpu.core_type = #tpu.core_type<tc>, window_params = [{transform_indices = @transform_0, window_bounds = array<i64: 8, 1, 4, 256>}, {transform_indices = @transform_1, window_bounds = array<i64: 8, 1, 4, 256>}, {transform_indices = @transform_2, window_bounds = array<i64: 8, 1, 4, 256>}, {transform_indices = @transform_3, window_bounds = array<i64: 1, 8, 4, 256>}]} {
    %c0 = arith.constant 0 : index
    %c0_0 = arith.constant 0 : index
    %c0_1 = arith.constant 0 : index
    %c0_2 = arith.constant 0 : index
    %0 = vector.load %arg1[%c0, %c0_0, %c0_1, %c0_2] : memref<8x1x4x256xbf16, #tpu.memory_space<vmem>>, vector<8x1x4x256xbf16>
    %1 = vector.shape_cast %0 : vector<8x1x4x256xbf16> to vector<8x4x256xbf16>
    %c0_3 = arith.constant 0 : index
    %c0_4 = arith.constant 0 : index
    %c0_5 = arith.constant 0 : index
    %c0_6 = arith.constant 0 : index
    %2 = vector.load %arg2[%c0_3, %c0_4, %c0_5, %c0_6] : memref<8x1x4x256xbf16, #tpu.memory_space<vmem>>, vector<8x1x4x256xbf16>
    %3 = vector.shape_cast %2 : vector<8x1x4x256xbf16> to vector<8x4x256xbf16>
    %c0_7 = arith.constant 0 : index
    %c0_8 = arith.constant 0 : index
    %c0_9 = arith.constant 0 : index
    %c0_10 = arith.constant 0 : index
    %4 = vector.load %arg3[%c0_7, %c0_8, %c0_9, %c0_10] : memref<8x1x4x256xbf16, #tpu.memory_space<vmem>>, vector<8x1x4x256xbf16>
    %5 = vector.shape_cast %4 : vector<8x1x4x256xbf16> to vector<8x4x256xbf16>
    "tpu.trace_start"() <{level = 10 : i32, message = "htd,hsd->hts"}> : () -> ()
    %cst = arith.constant dense<0.000000e+00> : vector<8x4x4xf32>
    %6 = tpu.matmul %1, %3, %cst {dimension_numbers = #tpu.dot_dimension_numbers<[2], [2], [1], [1], [0, 0, 0, 1, 1, 1], [0], [0]>} : vector<8x4x256xbf16>, vector<8x4x256xbf16>, vector<8x4x4xf32> -> vector<8x4x4xf32>
    "tpu.trace_stop"() : () -> ()
    %cst_11 = arith.constant dense<0xFF800000> : vector<8x4xf32>
    %7 = vector.multi_reduction <maximumf>, %6, %cst_11 [2] : vector<8x4x4xf32> to vector<8x4xf32>
    %8 = vector.shape_cast %7 : vector<8x4xf32> to vector<8x4x1xf32>
    %9 = vector.broadcast %8 : vector<8x4x1xf32> to vector<8x4x4xf32>
    %10 = arith.subf %6, %9 : vector<8x4x4xf32>
    %11 = math.exp %10 : vector<8x4x4xf32>
    %cst_12 = arith.constant dense<0.000000e+00> : vector<8x4xf32>
    %12 = vector.multi_reduction <add>, %11, %cst_12 [2] : vector<8x4x4xf32> to vector<8x4xf32>
    %13 = vector.shape_cast %12 : vector<8x4xf32> to vector<8x4x1xf32>
    %14 = tpu.reciprocal %13 {approx = true} : vector<8x4x1xf32> -> vector<8x4x1xf32>
    %15 = vector.broadcast %14 : vector<8x4x1xf32> to vector<8x4x4xf32>
    %16 = arith.mulf %11, %15 : vector<8x4x4xf32>
    %17 = arith.truncf %16 : vector<8x4x4xf32> to vector<8x4x4xbf16>
    "tpu.trace_start"() <{level = 10 : i32, message = "hts,hsd->htd"}> : () -> ()
    %cst_13 = arith.constant dense<0.000000e+00> : vector<8x4x256xf32>
    %18 = tpu.matmul %17, %5, %cst_13 {dimension_numbers = #tpu.dot_dimension_numbers<[2], [1], [1], [2], [0, 0, 0, 1, 1, 2], [0], [0]>} : vector<8x4x4xbf16>, vector<8x4x256xbf16>, vector<8x4x256xf32> -> vector<8x4x256xf32>
    "tpu.trace_stop"() : () -> ()
    %c0_14 = arith.constant 0 : index
    %c0_15 = arith.constant 0 : index
    %c0_16 = arith.constant 0 : index
    %c0_17 = arith.constant 0 : index
    %19 = vector.load %arg4[%c0_14, %c0_15, %c0_16, %c0_17] : memref<1x8x4x256xf32, #tpu.memory_space<vmem>>, vector<1x8x4x256xf32>
    %20 = vector.shape_cast %19 : vector<1x8x4x256xf32> to vector<8x4x256xf32>
    %21 = vector.shape_cast %18 : vector<8x4x256xf32> to vector<1x8x4x256xf32>
    tpu.vector_store %arg4[%c0_14, %c0_15, %c0_16, %c0_17], %21 {strides = array<i32>} : memref<1x8x4x256xf32, #tpu.memory_space<vmem>>, vector<1x8x4x256xf32>,
    return
  }
  func.func @transform_0(%arg0: i32) -> (i32, i32, i32, i32) {
    %c0_i32 = arith.constant 0 : i32
    %c0_i32_0 = arith.constant 0 : i32
    %c0_i32_1 = arith.constant 0 : i32
    %c0_i32_2 = arith.constant 0 : i32
    return %c0_i32, %arg0, %c0_i32_0, %c0_i32_1 : i32, i32, i32, i32
  }
  func.func @transform_1(%arg0: i32) -> (i32, i32, i32, i32) {
    %c1_i32 = arith.constant 1 : i32
    %c0_i32 = arith.constant 0 : i32
    %c0_i32_0 = arith.constant 0 : i32
    %c0_i32_1 = arith.constant 0 : i32
    return %c1_i32, %arg0, %c0_i32, %c0_i32_0 : i32, i32, i32, i32
  }
  func.func @transform_2(%arg0: i32) -> (i32, i32, i32, i32) {
    %c2_i32 = arith.constant 2 : i32
    %c0_i32 = arith.constant 0 : i32
    %c0_i32_0 = arith.constant 0 : i32
    %c0_i32_1 = arith.constant 0 : i32
    return %c2_i32, %arg0, %c0_i32, %c0_i32_0 : i32, i32, i32, i32
  }
  func.func @transform_3(%arg0: i32) -> (i32, i32, i32, i32) {
    %c0_i32 = arith.constant 0 : i32
    %c0_i32_0 = arith.constant 0 : i32
    %c0_i32_1 = arith.constant 0 : i32
    %c0_i32_2 = arith.constant 0 : i32
    return %arg0, %c0_i32, %c0_i32_0, %c0_i32_1 : i32, i32, i32, i32
  }
}

module attributes {stable_mosaic.version = 11 : i64} {
  func.func @_conv2d_kernel(%arg0: i32, %arg1: memref<108x256xbf16, #tpu.memory_space<vmem>>, %arg2: memref<8x108xbf16, #tpu.memory_space<vmem>>, %arg3: memref<8x1xf32, #tpu.memory_space<vmem>>, %arg4: memref<8x256xf32, #tpu.memory_space<vmem>>) attributes {dimension_semantics = [#tpu.dimension_semantics<parallel>], iteration_bounds = array<i64: 8>, scalar_prefetch = 0 : i64, scratch_operands = 0 : i64, tpu.core_type = #tpu.core_type<tc>, window_params = [{transform_indices = @transform_0, window_bounds = array<i64: 108, 256>}, {pipeline_mode = #tpu.pipeline_mode<synchronous>, transform_indices = @transform_1, window_bounds = array<i64: 8, 108>}, {pipeline_mode = #tpu.pipeline_mode<synchronous>, transform_indices = @transform_2, window_bounds = array<i64: 8, 1>}, {transform_indices = @transform_3, window_bounds = array<i64: 8, 256>}]} {
    %c0 = arith.constant 0 : index
    %c0_0 = arith.constant 0 : index
    %0 = vector.load %arg2[%c0, %c0_0] : memref<8x108xbf16, #tpu.memory_space<vmem>>, vector<8x108xbf16>
    %c0_1 = arith.constant 0 : index
    %c0_2 = arith.constant 0 : index
    %1 = vector.load %arg1[%c0_1, %c0_2] : memref<108x256xbf16, #tpu.memory_space<vmem>>, vector<108x256xbf16>
    %cst = arith.constant dense<0.000000e+00> : vector<8x256xf32>
    %2 = tpu.matmul %0, %1, %cst {dimension_numbers = #tpu.dot_dimension_numbers<[1], [0], [0], [1], [0, 0, 1, 1], [], []>} : vector<8x108xbf16>, vector<108x256xbf16>, vector<8x256xf32> -> vector<8x256xf32>
    %c0_3 = arith.constant 0 : index
    %c0_4 = arith.constant 0 : index
    %3 = vector.load %arg3[%c0_3, %c0_4] : memref<8x1xf32, #tpu.memory_space<vmem>>, vector<8x1xf32>
    %4 = vector.broadcast %3 : vector<8x1xf32> to vector<8x256xf32>
    %5 = arith.addf %2, %4 : vector<8x256xf32>
    %c0_5 = arith.constant 0 : index
    %c0_6 = arith.constant 0 : index
    %6 = vector.load %arg4[%c0_5, %c0_6] : memref<8x256xf32, #tpu.memory_space<vmem>>, vector<8x256xf32>
    tpu.vector_store %arg4[%c0_5, %c0_6], %5 {strides = array<i32>} : memref<8x256xf32, #tpu.memory_space<vmem>>, vector<8x256xf32>,
    return
  }
  func.func @transform_0(%arg0: i32) -> (i32, i32) {
    %c0_i32 = arith.constant 0 : i32
    %c0_i32_0 = arith.constant 0 : i32
    return %c0_i32, %arg0 : i32, i32
  }
  func.func @transform_1(%arg0: i32) -> (i32, i32) {
    %c0_i32 = arith.constant 0 : i32
    %c0_i32_0 = arith.constant 0 : i32
    %c0_i32_1 = arith.constant 0 : i32
    return %c0_i32, %c0_i32_0 : i32, i32
  }
  func.func @transform_2(%arg0: i32) -> (i32, i32) {
    %c0_i32 = arith.constant 0 : i32
    %c0_i32_0 = arith.constant 0 : i32
    %c0_i32_1 = arith.constant 0 : i32
    return %c0_i32, %c0_i32_0 : i32, i32
  }
  func.func @transform_3(%arg0: i32) -> (i32, i32) {
    %c0_i32 = arith.constant 0 : i32
    %c0_i32_0 = arith.constant 0 : i32
    return %c0_i32, %arg0 : i32, i32
  }
}

module attributes {stable_mosaic.version = 11 : i64} {
  func.func @_layernorm_kernel(%arg0: i32, %arg1: memref<8x2048xf32, #tpu.memory_space<vmem>>, %arg2: memref<1x2048xf32, #tpu.memory_space<vmem>>, %arg3: memref<1x2048xf32, #tpu.memory_space<vmem>>, %arg4: memref<8x2048xf32, #tpu.memory_space<vmem>>) attributes {dimension_semantics = [#tpu.dimension_semantics<parallel>], iteration_bounds = array<i64: 1>, scalar_prefetch = 0 : i64, scratch_operands = 0 : i64, tpu.core_type = #tpu.core_type<tc>, window_params = [{transform_indices = @transform_0, window_bounds = array<i64: 8, 2048>}, {pipeline_mode = #tpu.pipeline_mode<synchronous>, transform_indices = @transform_1, window_bounds = array<i64: 1, 2048>}, {pipeline_mode = #tpu.pipeline_mode<synchronous>, transform_indices = @transform_2, window_bounds = array<i64: 1, 2048>}, {transform_indices = @transform_3, window_bounds = array<i64: 8, 2048>}]} {
    %c0 = arith.constant 0 : index
    %c0_0 = arith.constant 0 : index
    %0 = vector.load %arg1[%c0, %c0_0] : memref<8x2048xf32, #tpu.memory_space<vmem>>, vector<8x2048xf32>
    %cst = arith.constant dense<0.000000e+00> : vector<8xf32>
    %1 = vector.multi_reduction <add>, %0, %cst [1] : vector<8x2048xf32> to vector<8xf32>
    %2 = vector.shape_cast %1 : vector<8xf32> to vector<8x1xf32>
    %cst_1 = arith.constant 2.048000e+03 : f32
    %3 = vector.broadcast %cst_1 : f32 to vector<8x1xf32>
    %4 = arith.divf %2, %3 : vector<8x1xf32>
    %5 = vector.broadcast %4 : vector<8x1xf32> to vector<8x2048xf32>
    %6 = arith.subf %0, %5 : vector<8x2048xf32>
    %7 = arith.mulf %6, %6 : vector<8x2048xf32>
    %cst_2 = arith.constant dense<0.000000e+00> : vector<8xf32>
    %8 = vector.multi_reduction <add>, %7, %cst_2 [1] : vector<8x2048xf32> to vector<8xf32>
    %9 = vector.shape_cast %8 : vector<8xf32> to vector<8x1xf32>
    %cst_3 = arith.constant 2.048000e+03 : f32
    %10 = vector.broadcast %cst_3 : f32 to vector<8x1xf32>
    %11 = arith.divf %9, %10 : vector<8x1xf32>
    %cst_4 = arith.constant 9.99999974E-6 : f32
    %12 = vector.broadcast %cst_4 : f32 to vector<8x1xf32>
    %13 = arith.addf %11, %12 : vector<8x1xf32>
    %14 = math.rsqrt %13 : vector<8x1xf32>
    %15 = vector.broadcast %14 : vector<8x1xf32> to vector<8x2048xf32>
    %16 = arith.mulf %6, %15 : vector<8x2048xf32>
    %c0_5 = arith.constant 0 : index
    %c0_6 = arith.constant 0 : index
    %17 = vector.load %arg2[%c0_5, %c0_6] : memref<1x2048xf32, #tpu.memory_space<vmem>>, vector<1x2048xf32>
    %18 = vector.broadcast %17 : vector<1x2048xf32> to vector<8x2048xf32>
    %19 = arith.mulf %16, %18 : vector<8x2048xf32>
    %c0_7 = arith.constant 0 : index
    %c0_8 = arith.constant 0 : index
    %20 = vector.load %arg3[%c0_7, %c0_8] : memref<1x2048xf32, #tpu.memory_space<vmem>>, vector<1x2048xf32>
    %21 = vector.broadcast %20 : vector<1x2048xf32> to vector<8x2048xf32>
    %22 = arith.addf %19, %21 : vector<8x2048xf32>
    %c0_9 = arith.constant 0 : index
    %c0_10 = arith.constant 0 : index
    %23 = vector.load %arg4[%c0_9, %c0_10] : memref<8x2048xf32, #tpu.memory_space<vmem>>, vector<8x2048xf32>
    tpu.vector_store %arg4[%c0_9, %c0_10], %22 {strides = array<i32>} : memref<8x2048xf32, #tpu.memory_space<vmem>>, vector<8x2048xf32>,
    return
  }
  func.func @transform_0(%arg0: i32) -> (i32, i32) {
    %c0_i32 = arith.constant 0 : i32
    %c0_i32_0 = arith.constant 0 : i32
    return %arg0, %c0_i32 : i32, i32
  }
  func.func @transform_1(%arg0: i32) -> (i32, i32) {
    %c0_i32 = arith.constant 0 : i32
    %c0_i32_0 = arith.constant 0 : i32
    %c0_i32_1 = arith.constant 0 : i32
    return %c0_i32, %c0_i32_0 : i32, i32
  }
  func.func @transform_2(%arg0: i32) -> (i32, i32) {
    %c0_i32 = arith.constant 0 : i32
    %c0_i32_0 = arith.constant 0 : i32
    %c0_i32_1 = arith.constant 0 : i32
    return %c0_i32, %c0_i32_0 : i32, i32
  }
  func.func @transform_3(%arg0: i32) -> (i32, i32) {
    %c0_i32 = arith.constant 0 : i32
    %c0_i32_0 = arith.constant 0 : i32
    return %arg0, %c0_i32 : i32, i32
  }
}

module attributes {stable_mosaic.version = 11 : i64} {
  func.func @_conv2d_kernel(%arg0: i32, %arg1: memref<72x256xbf16, #tpu.memory_space<vmem>>, %arg2: memref<4x72xbf16, #tpu.memory_space<vmem>>, %arg3: memref<4x1xf32, #tpu.memory_space<vmem>>, %arg4: memref<4x256xf32, #tpu.memory_space<vmem>>) attributes {dimension_semantics = [#tpu.dimension_semantics<parallel>], iteration_bounds = array<i64: 2>, scalar_prefetch = 0 : i64, scratch_operands = 0 : i64, tpu.core_type = #tpu.core_type<tc>, window_params = [{transform_indices = @transform_0, window_bounds = array<i64: 72, 256>}, {pipeline_mode = #tpu.pipeline_mode<synchronous>, transform_indices = @transform_1, window_bounds = array<i64: 4, 72>}, {pipeline_mode = #tpu.pipeline_mode<synchronous>, transform_indices = @transform_2, window_bounds = array<i64: 4, 1>}, {transform_indices = @transform_3, window_bounds = array<i64: 4, 256>}]} {
    %c0 = arith.constant 0 : index
    %c0_0 = arith.constant 0 : index
    %0 = vector.load %arg2[%c0, %c0_0] : memref<4x72xbf16, #tpu.memory_space<vmem>>, vector<4x72xbf16>
    %c0_1 = arith.constant 0 : index
    %c0_2 = arith.constant 0 : index
    %1 = vector.load %arg1[%c0_1, %c0_2] : memref<72x256xbf16, #tpu.memory_space<vmem>>, vector<72x256xbf16>
    %cst = arith.constant dense<0.000000e+00> : vector<4x256xf32>
    %2 = tpu.matmul %0, %1, %cst {dimension_numbers = #tpu.dot_dimension_numbers<[1], [0], [0], [1], [0, 0, 1, 1], [], []>} : vector<4x72xbf16>, vector<72x256xbf16>, vector<4x256xf32> -> vector<4x256xf32>
    %c0_3 = arith.constant 0 : index
    %c0_4 = arith.constant 0 : index
    %3 = vector.load %arg3[%c0_3, %c0_4] : memref<4x1xf32, #tpu.memory_space<vmem>>, vector<4x1xf32>
    %4 = vector.broadcast %3 : vector<4x1xf32> to vector<4x256xf32>
    %5 = arith.addf %2, %4 : vector<4x256xf32>
    %c0_5 = arith.constant 0 : index
    %c0_6 = arith.constant 0 : index
    %6 = vector.load %arg4[%c0_5, %c0_6] : memref<4x256xf32, #tpu.memory_space<vmem>>, vector<4x256xf32>
    tpu.vector_store %arg4[%c0_5, %c0_6], %5 {strides = array<i32>} : memref<4x256xf32, #tpu.memory_space<vmem>>, vector<4x256xf32>,
    return
  }
  func.func @transform_0(%arg0: i32) -> (i32, i32) {
    %c0_i32 = arith.constant 0 : i32
    %c0_i32_0 = arith.constant 0 : i32
    return %c0_i32, %arg0 : i32, i32
  }
  func.func @transform_1(%arg0: i32) -> (i32, i32) {
    %c0_i32 = arith.constant 0 : i32
    %c0_i32_0 = arith.constant 0 : i32
    %c0_i32_1 = arith.constant 0 : i32
    return %c0_i32, %c0_i32_0 : i32, i32
  }
  func.func @transform_2(%arg0: i32) -> (i32, i32) {
    %c0_i32 = arith.constant 0 : i32
    %c0_i32_0 = arith.constant 0 : i32
    %c0_i32_1 = arith.constant 0 : i32
    return %c0_i32, %c0_i32_0 : i32, i32
  }
  func.func @transform_3(%arg0: i32) -> (i32, i32) {
    %c0_i32 = arith.constant 0 : i32
    %c0_i32_0 = arith.constant 0 : i32
    return %c0_i32, %arg0 : i32, i32
  }
}

</mosaic_0001>

<llo_original>
// kernel: conv_self_attention_forward.12
$region0: #{conv_self_attention_forward.12}
  #allocation0 [shape = 'u32[]', space=smem, size = 0x4, offset = 0x4, fixed_abs, tag = 'smem constant byte address 0x4 - core index']
  #allocation1 [shape = 'u32[144,128]{1,0:T(1,128)}', space=vmem, size = 0x12000, scoped, tag = 'internal scratch']
  %s0 = inlined_call_operand.vmem [shape: bf16[144,512], index: 0, kind: input, shape index: {}]
  %s1 = inlined_call_operand.vmem [shape: bf16[4,144], index: 1, kind: input, shape index: {}]
  %s2 = inlined_call_operand.vmem [shape: f32[4,1], index: 2, kind: input, shape index: {}]
  %s3 = inlined_call_operand.vmem [shape: f32[4,512], index: 3, kind: output, shape index: {}]
  %s4 = sld [smem:[#allocation0]]
  $region83: #{conv_self_attention_forward.12} parent=0
    _
  %s6 = ssub.s32 1, %s4
  %s7 = scalar_select 0, %s6, %s4
  $region1: #{conv_self_attention_forward.12} parent=0
    #allocation2 [shape = 'u8[147456]{0}', space=vmem, size = 0x24000, scoped, tag = 'input window, operand 0']
    loop: start=0, step=1, limit=4
    $region2: #{conv_self_attention_forward.12} parent=1 // loop_pre_header
      _
    $region3: #{conv_self_attention_forward.12} parent=1 // loop_header
      %s9 = sphi 0, %s13
      %p10 = scmp.ge.s32.totalorder %s9, 4
      %s19 = sphi 0, %s21
      %s22 = sphi 0, %s19
      %s23 = sphi 0, %s22
      %s39 = sphi 0, %s23
      %s43 = sphi 0, %s43
      %s45 = sphi 0, %s43
      %s46 = sphi 0, %s45
      %s60 = sphi 0, %s46
      %s64 = sphi 0, %s64
      %s66 = sphi 0, %s64
      %s67 = sphi 0, %s66
      %s81 = sphi 0, %s67
      %s87 = sphi 0, %s89
      %s90 = sphi 0, %s87
      %s91 = sphi 0, %s90
      %s107 = sphi 0, %s91
    $region4: #{conv_self_attention_forward.12} parent=1 // loop_header_branch
      %12 = sbr.rel (%p10) target = $region8
    $region5: #{conv_self_attention_forward.12} parent=1 // loop_body
      %s14 = ssub.s32 %s9, 1
      %s15 = ssub.s32 %s9, 2
      %s16 = sadd.s32 %s9, 1
      %s17 = ssub.s32 %s9, %s16
      %p18 = scmp.eq.s32.totalorder %s17, 0
      %s20 = sadd.s32 %s19, 1
      %s21 = scalar_select %p18, %s19, %s20
      %p24 = pneg %p18
      %p25 = scmp.eq.s32.totalorder %s9, 1
      %p26 = por %p24, %p25
      %p27 = scmp.ne.s32.totalorder %s19, %s22
      %p28 = scmp.eq.s32.totalorder %s9, 0
      %p29 = por %p27, %p28
      %p30 = scmp.ne.s32.totalorder %s19, %s22
      %p31 = scmp.eq.s32.totalorder %s14, 1
      %p32 = por %p30, %p31
      %p33 = scmp.ne.s32.totalorder %s22, %s23
      %p34 = scmp.eq.s32.totalorder %s14, 0
      %p35 = por %p33, %p34
      %p36 = scmp.ne.s32.totalorder %s22, %s23
      %p37 = scmp.eq.s32.totalorder %s15, 1
      %p38 = por %p36, %p37
      %p40 = scmp.ne.s32.totalorder %s23, %s39
      %p41 = scmp.eq.s32.totalorder %s15, 0
      %p42 = por %p40, %p41
      %s44 = sadd.s32 %s43, 1
      %p47 = scmp.eq.s32.totalorder %s9, 1
      %p48 = scmp.ne.s32.totalorder %s43, %s45
      %p49 = scmp.eq.s32.totalorder %s9, 0
      %p50 = por %p48, %p49
      %p51 = scmp.ne.s32.totalorder %s43, %s45
      %p52 = scmp.eq.s32.totalorder %s14, 1
      %p53 = por %p51, %p52
      %p54 = scmp.ne.s32.totalorder %s45, %s46
      %p55 = scmp.eq.s32.totalorder %s14, 0
      %p56 = por %p54, %p55
      %p57 = scmp.ne.s32.totalorder %s45, %s46
      %p58 = scmp.eq.s32.totalorder %s15, 1
      %p59 = por %p57, %p58
      %p61 = scmp.ne.s32.totalorder %s46, %s60
      %p62 = scmp.eq.s32.totalorder %s15, 0
      %p63 = por %p61, %p62
      %s65 = sadd.s32 %s64, 1
      %p68 = scmp.eq.s32.totalorder %s9, 1
      %p69 = scmp.ne.s32.totalorder %s64, %s66
      %p70 = scmp.eq.s32.totalorder %s9, 0
      %p71 = por %p69, %p70
      %p72 = scmp.ne.s32.totalorder %s64, %s66
      %p73 = scmp.eq.s32.totalorder %s14, 1
      %p74 = por %p72, %p73
      %p75 = scmp.ne.s32.totalorder %s66, %s67
      %p76 = scmp.eq.s32.totalorder %s14, 0
      %p77 = por %p75, %p76
      %p78 = scmp.ne.s32.totalorder %s66, %s67
      %p79 = scmp.eq.s32.totalorder %s15, 1
      %p80 = por %p78, %p79
      %p82 = scmp.ne.s32.totalorder %s67, %s81
      %p83 = scmp.eq.s32.totalorder %s15, 0
      %p84 = por %p82, %p83
      %s85 = ssub.s32 %s9, %s16
      %p86 = scmp.eq.s32.totalorder %s85, 0
      %s88 = sadd.s32 %s87, 1
      %s89 = scalar_select %p86, %s87, %s88
      %p92 = pneg %p86
      %p93 = scmp.eq.s32.totalorder %s9, 1
      %p94 = por %p92, %p93
      %p95 = scmp.ne.s32.totalorder %s87, %s90
      %p96 = scmp.eq.s32.totalorder %s9, 0
      %p97 = por %p95, %p96
      %p98 = scmp.ne.s32.totalorder %s87, %s90
      %p99 = scmp.eq.s32.totalorder %s14, 1
      %p100 = por %p98, %p99
      %p101 = scmp.ne.s32.totalorder %s90, %s91
      %p102 = scmp.eq.s32.totalorder %s14, 0
      %p103 = por %p101, %p102
      %p104 = scmp.ne.s32.totalorder %s90, %s91
      %p105 = scmp.eq.s32.totalorder %s15, 1
      %p106 = por %p104, %p105
      %p108 = scmp.ne.s32.totalorder %s91, %s107
      %p109 = scmp.eq.s32.totalorder %s15, 0
      %p110 = por %p108, %p109
      %p111 = scmp.le.s32.totalorder 1, %s9
      %p112 = scmp.lt.s32.totalorder %s9, 3
      %p113 = pnand %p111, %p112
      %p114 = pneg %p113
      // Predicated region
      $region9: #{conv_self_attention_forward.12} parent=5 // pred_check
        _
      $region10: #{conv_self_attention_forward.12} parent=5 // pred_check_branch
        %116 = sbr.rel (%p113) target = $region12
      $region11: #{conv_self_attention_forward.12} parent=5 // pred_region
        %s117 = ssub.s32 %s9, 1
        // Predicated region
        $region13: #{conv_self_attention_forward.12} parent=11 // pred_check
          %p118 = pneg %p56
        $region14: #{conv_self_attention_forward.12} parent=11 // pred_check_branch
          %120 = sbr.rel (%p118) target = $region16
        $region15: #{conv_self_attention_forward.12} parent=11 // pred_region
          _
        $region16: #{conv_self_attention_forward.12} parent=11 // pred_fallthru
          _
        // Predicated region
        $region17: #{conv_self_attention_forward.12} parent=11 // pred_check
          %p121 = pneg %p77
        $region18: #{conv_self_attention_forward.12} parent=11 // pred_check_branch
          %123 = sbr.rel (%p121) target = $region20
        $region19: #{conv_self_attention_forward.12} parent=11 // pred_region
          _
        $region20: #{conv_self_attention_forward.12} parent=11 // pred_fallthru
          _
      $region12: #{conv_self_attention_forward.12} parent=5 // pred_fallthru
        _
      %p124 = scmp.lt.s32.totalorder %s9, 2
      // Predicated region
      $region21: #{conv_self_attention_forward.12} parent=5 // pred_check
        %p125 = pneg %p124
      $region22: #{conv_self_attention_forward.12} parent=5 // pred_check_branch
        %127 = sbr.rel (%p125) target = $region24
      $region23: #{conv_self_attention_forward.12} parent=5 // pred_region
        // Predicated region
        $region25: #{conv_self_attention_forward.12} parent=23 // pred_check
          %p128 = pneg %p29
        $region26: #{conv_self_attention_forward.12} parent=23 // pred_check_branch
          %130 = sbr.rel (%p128) target = $region28
        $region27: #{conv_self_attention_forward.12} parent=23 // pred_region
          %s131 = sand.u32 %s19, 1
          %s132 = sand.u32 %s19, 1
          %s133 = smul.addr %s132, 144
          %s134 = scalar_lea.vmem [#allocation2], %s133
          %s135 = smul.u32 2, %s9
          %s136 = smul.addr %s135, 4
          %s137 = scalar_lea.vmem %s0, %s136
          // Predicated region
          $region29: #{conv_self_attention_forward.12} parent=27 // pred_check
            _
          $region30: #{conv_self_attention_forward.12} parent=27 // pred_check_branch
            %139 = sbr.rel (0) target = $region32
          $region31: #{conv_self_attention_forward.12} parent=27 // pred_region
            // Predicated region
            $region33: #{conv_self_attention_forward.12} parent=31 // pred_check
              _
            $region34: #{conv_self_attention_forward.12} parent=31 // pred_check_branch
              %141 = sbr.rel (0) target = $region36
            $region35: #{conv_self_attention_forward.12} parent=31 // pred_region
              // Predicated region
              $region48: #{conv_self_attention_forward.12} parent=35 // pred_check
                _
              $region49: #{conv_self_attention_forward.12} parent=35 // pred_check_branch
                %190 = sbr.rel (0) target = $region51
              $region50: #{conv_self_attention_forward.12} parent=35 // pred_region
                loop: start=0, step=1, limit=1
                $region52: #{conv_self_attention_forward.12} parent=50 // loop_pre_header
                  _
                $region53: #{conv_self_attention_forward.12} parent=50 // loop_header
                  %s192 = sphi 0, %s196
                  %p193 = scmp.ge.s32.totalorder %s192, 1
                  %s197 = sphi %s137, %s137
                  %s198 = sphi %s134, %s134
                $region54: #{conv_self_attention_forward.12} parent=50 // loop_header_branch
                  %195 = sbr.rel (%p193) target = $region58
                $region55: #{conv_self_attention_forward.12} parent=50 // loop_body
                  %v199 = vld [vmem:[%s197] sm:$0xff]
                  %200 = vst [vmem:[%s198] sm:$0xff] %v199
                  %v201 = vld [vmem:[%s197 + $0x10] sm:$0xff]
                  %202 = vst [vmem:[%s198 + $0x8] sm:$0xff] %v201
                  %v203 = vld [vmem:[%s197 + $0x20] sm:$0xff]
                  %204 = vst [vmem:[%s198 + $0x10] sm:$0xff] %v203
                  %v205 = vld [vmem:[%s197 + $0x30] sm:$0xff]
                  %206 = vst [vmem:[%s198 + $0x18] sm:$0xff] %v205
                  %v207 = vld [vmem:[%s197 + $0x40] sm:$0xff]
                  %208 = vst [vmem:[%s198 + $0x20] sm:$0xff] %v207
                  %v209 = vld [vmem:[%s197 + $0x50] sm:$0xff]
                  %210 = vst [vmem:[%s198 + $0x28] sm:$0xff] %v209
                  %v211 = vld [vmem:[%s197 + $0x60] sm:$0xff]
                  %212 = vst [vmem:[%s198 + $0x30] sm:$0xff] %v211
                  %v213 = vld [vmem:[%s197 + $0x70] sm:$0xff]
                  %214 = vst [vmem:[%s198 + $0x38] sm:$0xff] %v213
                  %v215 = vld [vmem:[%s197 + $0x80] sm:$0xff]
                  %216 = vst [vmem:[%s198 + $0x40] sm:$0xff] %v215
                  %v217 = vld [vmem:[%s197 + $0x90] sm:$0xff]
                  %218 = vst [vmem:[%s198 + $0x48] sm:$0xff] %v217
                  %v219 = vld [vmem:[%s197 + $0xa0] sm:$0xff]
                  %220 = vst [vmem:[%s198 + $0x50] sm:$0xff] %v219
                  %v221 = vld [vmem:[%s197 + $0xb0] sm:$0xff]
                  %222 = vst [vmem:[%s198 + $0x58] sm:$0xff] %v221
                  %v223 = vld [vmem:[%s197 + $0xc0] sm:$0xff]
                  %224 = vst [vmem:[%s198 + $0x60] sm:$0xff] %v223
                  %v225 = vld [vmem:[%s197 + $0xd0] sm:$0xff]
                  %226 = vst [vmem:[%s198 + $0x68] sm:$0xff] %v225
                  %v227 = vld [vmem:[%s197 + $0xe0] sm:$0xff]
                  %228 = vst [vmem:[%s198 + $0x70] sm:$0xff] %v227
                  %v229 = vld [vmem:[%s197 + $0xf0] sm:$0xff]
                  %230 = vst [vmem:[%s198 + $0x78] sm:$0xff] %v229
                  %v231 = vld [vmem:[%s197 + $0x100] sm:$0xff]
                  %232 = vst [vmem:[%s198 + $0x80] sm:$0xff] %v231
                  %v233 = vld [vmem:[%s197 + $0x110] sm:$0xff]
                  %234 = vst [vmem:[%s198 + $0x88] sm:$0xff] %v233
                $region56: #{conv_self_attention_forward.12} parent=50 // loop_footer
                  %s196 = sadd.s32 1, %s192
                $region57: #{conv_self_attention_forward.12} parent=50 // loop_footer_branch
                  %191 = sbr.rel target = $region53
                $region58: #{conv_self_attention_forward.12} parent=50 // loop_exit
                  _
              $region51: #{conv_self_attention_forward.12} parent=35 // pred_fallthru
                _
              // Predicated region
              $region59: #{conv_self_attention_forward.12} parent=35 // pred_check
                _
              $region60: #{conv_self_attention_forward.12} parent=35 // pred_check_branch
                %236 = sbr.rel target = $region62
              $region61: #{conv_self_attention_forward.12} parent=35 // pred_region
                _
              $region62: #{conv_self_attention_forward.12} parent=35 // pred_fallthru
                _
            $region36: #{conv_self_attention_forward.12} parent=31 // pred_fallthru
              _
            // Predicated region
            $region37: #{conv_self_attention_forward.12} parent=31 // pred_check
              _
            $region38: #{conv_self_attention_forward.12} parent=31 // pred_check_branch
              %143 = sbr.rel target = $region40
            $region39: #{conv_self_attention_forward.12} parent=31 // pred_region
              loop: start=0, step=1, limit=1
              $region41: #{conv_self_attention_forward.12} parent=39 // loop_pre_header
                _
              $region42: #{conv_self_attention_forward.12} parent=39 // loop_header
                %s146 = sphi 0, %s150
                %p147 = scmp.ge.s32.totalorder %s146, 1
                %s151 = sphi %s137, %s137
                %s152 = sphi %s134, %s134
              $region43: #{conv_self_attention_forward.12} parent=39 // loop_header_branch
                %149 = sbr.rel (%p147) target = $region47
              $region44: #{conv_self_attention_forward.12} parent=39 // loop_body
                %v153 = vld [vmem:[%s151] sm:$0xff]
                %154 = vst [vmem:[%s152] sm:$0xff] %v153
                %v155 = vld [vmem:[%s151 + $0x10] sm:$0xff]
                %156 = vst [vmem:[%s152 + $0x8] sm:$0xff] %v155
                %v157 = vld [vmem:[%s151 + $0x20] sm:$0xff]
                %158 = vst [vmem:[%s152 + $0x10] sm:$0xff] %v157
                %v159 = vld [vmem:[%s151 + $0x30] sm:$0xff]
                %160 = vst [vmem:[%s152 + $0x18] sm:$0xff] %v159
                %v161 = vld [vmem:[%s151 + $0x40] sm:$0xff]
                %162 = vst [vmem:[%s152 + $0x20] sm:$0xff] %v161
                %v163 = vld [vmem:[%s151 + $0x50] sm:$0xff]
                %164 = vst [vmem:[%s152 + $0x28] sm:$0xff] %v163
                %v165 = vld [vmem:[%s151 + $0x60] sm:$0xff]
                %166 = vst [vmem:[%s152 + $0x30] sm:$0xff] %v165
                %v167 = vld [vmem:[%s151 + $0x70] sm:$0xff]
                %168 = vst [vmem:[%s152 + $0x38] sm:$0xff] %v167
                %v169 = vld [vmem:[%s151 + $0x80] sm:$0xff]
                %170 = vst [vmem:[%s152 + $0x40] sm:$0xff] %v169
                %v171 = vld [vmem:[%s151 + $0x90] sm:$0xff]
                %172 = vst [vmem:[%s152 + $0x48] sm:$0xff] %v171
                %v173 = vld [vmem:[%s151 + $0xa0] sm:$0xff]
                %174 = vst [vmem:[%s152 + $0x50] sm:$0xff] %v173
                %v175 = vld [vmem:[%s151 + $0xb0] sm:$0xff]
                %176 = vst [vmem:[%s152 + $0x58] sm:$0xff] %v175
                %v177 = vld [vmem:[%s151 + $0xc0] sm:$0xff]
                %178 = vst [vmem:[%s152 + $0x60] sm:$0xff] %v177
                %v179 = vld [vmem:[%s151 + $0xd0] sm:$0xff]
                %180 = vst [vmem:[%s152 + $0x68] sm:$0xff] %v179
                %v181 = vld [vmem:[%s151 + $0xe0] sm:$0xff]
                %182 = vst [vmem:[%s152 + $0x70] sm:$0xff] %v181
                %v183 = vld [vmem:[%s151 + $0xf0] sm:$0xff]
                %184 = vst [vmem:[%s152 + $0x78] sm:$0xff] %v183
                %v185 = vld [vmem:[%s151 + $0x100] sm:$0xff]
                %186 = vst [vmem:[%s152 + $0x80] sm:$0xff] %v185
                %v187 = vld [vmem:[%s151 + $0x110] sm:$0xff]
                %188 = vst [vmem:[%s152 + $0x88] sm:$0xff] %v187
              $region45: #{conv_self_attention_forward.12} parent=39 // loop_footer
                %s150 = sadd.s32 1, %s146
              $region46: #{conv_self_attention_forward.12} parent=39 // loop_footer_branch
                %145 = sbr.rel target = $region42
              $region47: #{conv_self_attention_forward.12} parent=39 // loop_exit
                _
            $region40: #{conv_self_attention_forward.12} parent=31 // pred_fallthru
              _
          $region32: #{conv_self_attention_forward.12} parent=27 // pred_fallthru
            _
          %237 = vnop
        $region28: #{conv_self_attention_forward.12} parent=23 // pred_fallthru
          _
      $region24: #{conv_self_attention_forward.12} parent=5 // pred_fallthru
        _
      %p238 = scmp.le.s32.totalorder 1, %s9
      %p239 = scmp.lt.s32.totalorder %s9, 3
      %p240 = pnand %p238, %p239
      %p241 = pneg %p240
      // Predicated region
      $region63: #{conv_self_attention_forward.12} parent=5 // pred_check
        _
      $region64: #{conv_self_attention_forward.12} parent=5 // pred_check_branch
        %243 = sbr.rel (%p240) target = $region66
      $region65: #{conv_self_attention_forward.12} parent=5 // pred_region
        %s244 = ssub.s32 %s9, 1
        %s245 = sand.u32 %s22, 1
        %s246 = sand.u32 %s22, 1
        %s247 = smul.addr %s246, 144
        %s248 = scalar_lea.vmem [#allocation2], %s247
        // Predicated region
        $region67: #{conv_self_attention_forward.12} parent=65 // pred_check
          %p249 = pneg %p35
        $region68: #{conv_self_attention_forward.12} parent=65 // pred_check_branch
          %251 = sbr.rel (%p249) target = $region70
        $region69: #{conv_self_attention_forward.12} parent=65 // pred_region
          _
        $region70: #{conv_self_attention_forward.12} parent=65 // pred_fallthru
          _
        %s252 = sand.u32 %s22, 1
        %s253 = sand.u32 %s22, 1
        %s254 = smul.addr %s253, 144
        %s255 = scalar_lea.vmem [#allocation2], %s254
        %p256 = pneg %p35
        %p257 = pneg %p32
        %p258 = pneg %p56
        %p259 = pneg %p53
        %p260 = pneg %p77
        %p261 = pneg %p74
        %p262 = pneg %p103
        %p263 = pneg %p100
        %s264 = smul.u32 2, %s14
        %p265 = scmp.lt.s32.totalorder %s264, 3
        %s266 = scalar_select %p265, %s264, 3
        %s267 = smul.addr %s266, 4
        %s268 = scalar_lea.vmem %s3, %s267
        %s269 = smul.u32 2, %s14
        %s270 = smul.u32 2, %s14
        %p271 = scmp.lt.s32.totalorder %s270, 3
        %s272 = scalar_select %p271, %s270, 3
        %s273 = smul.addr %s272, 4
        %s274 = scalar_lea.vmem %s3, %s273
        %s275 = smul.u32 2, %s14
        %v277 = vld [vmem:[%s1] sm:$0xf]
        %v278 = vld [vmem:[%s248] sm:$0xff]
        %v279 = vld [vmem:[%s248 + $0x8] sm:$0xff]
        %v280 = vld [vmem:[%s248 + $0x10] sm:$0xff]
        %v281 = vld [vmem:[%s248 + $0x18] sm:$0xff]
        %v282 = vld [vmem:[%s248 + $0x20] sm:$0xff]
        %v283 = vld [vmem:[%s248 + $0x28] sm:$0xff]
        %v284 = vld [vmem:[%s248 + $0x30] sm:$0xff]
        %v285 = vld [vmem:[%s248 + $0x38] sm:$0xff]
        %v286 = vld [vmem:[%s248 + $0x40] sm:$0xff]
        %v287 = vld [vmem:[%s248 + $0x48] sm:$0xff]
        %v288 = vld [vmem:[%s248 + $0x50] sm:$0xff]
        %v289 = vld [vmem:[%s248 + $0x58] sm:$0xff]
        %v290 = vld [vmem:[%s248 + $0x60] sm:$0xff]
        %v291 = vld [vmem:[%s248 + $0x68] sm:$0xff]
        %v292 = vld [vmem:[%s248 + $0x70] sm:$0xff]
        %v293 = vld [vmem:[%s248 + $0x78] sm:$0xff]
        %v294 = vld [vmem:[%s248 + $0x80] sm:$0xff]
        %v295 = vld [vmem:[%s248 + $0x88] sm:$0xff]
        %v296 = vld [vmem:[%s2] sm:$0xf]
        %298 = vset.pattern.permute.xlu0 0
        %299 = vperm.xlu0 %298, %v296
        %v300 = vpop.permute.xlu0 %299
        %v304 = vunpack.c.l.s4 1983009808
        %v305 = vunpack.c.0.s8 %v304
        %v306 = vlaneseq
        %v307 = vshrl.u32 %v306, 7
        %v308 = vsub.s32 %v305, %v307
        %v309 = vrot.slane %v277, %v308
        %v310 = vcombine.high %v309, %v309
        %v330 = vunpack.c.l.b16 %v278
        %v331 = vunpack.c.h.b16 %v278
        %v332 = vunpack.c.l.b16 %v279
        %v333 = vunpack.c.h.b16 %v279
        %v334 = vunpack.c.l.b16 %v280
        %v335 = vunpack.c.h.b16 %v280
        %v336 = vunpack.c.l.b16 %v281
        %v337 = vunpack.c.h.b16 %v281
        %v338 = vunpack.c.l.b16 %v282
        %v339 = vunpack.c.h.b16 %v282
        %v340 = vunpack.c.l.b16 %v283
        %v341 = vunpack.c.h.b16 %v283
        %v342 = vunpack.c.l.b16 %v284
        %v343 = vunpack.c.h.b16 %v284
        %v344 = vunpack.c.l.b16 %v285
        %v345 = vunpack.c.h.b16 %v285
        %v346 = vunpack.c.l.b16 %v286
        %v347 = vunpack.c.h.b16 %v286
        %v348 = vunpack.c.l.b16 %v287
        %v349 = vunpack.c.h.b16 %v287
        %v350 = vunpack.c.l.b16 %v288
        %v351 = vunpack.c.h.b16 %v288
        %v352 = vunpack.c.l.b16 %v289
        %v353 = vunpack.c.h.b16 %v289
        %v354 = vunpack.c.l.b16 %v290
        %v355 = vunpack.c.h.b16 %v290
        %v356 = vunpack.c.l.b16 %v291
        %v357 = vunpack.c.h.b16 %v291
        %v358 = vunpack.c.l.b16 %v292
        %v359 = vunpack.c.h.b16 %v292
        %v360 = vunpack.c.l.b16 %v293
        %v361 = vunpack.c.h.b16 %v293
        %v362 = vunpack.c.l.b16 %v294
        %v363 = vunpack.c.h.b16 %v294
        %v364 = vunpack.c.l.b16 %v295
        %v365 = vunpack.c.h.b16 %v295
        %v366 = vpack.c.b16 %v332, %v330
        %v367 = vpack.c.b16 %v333, %v331
        %v368 = vpack.c.b16 %v336, %v334
        %v369 = vpack.c.b16 %v337, %v335
        %v370 = vpack.c.b16 %v340, %v338
        %v371 = vpack.c.b16 %v341, %v339
        %v372 = vpack.c.b16 %v344, %v342
        %v373 = vpack.c.b16 %v345, %v343
        %v374 = vpack.c.b16 %v348, %v346
        %v375 = vpack.c.b16 %v349, %v347
        %v376 = vpack.c.b16 %v352, %v350
        %v377 = vpack.c.b16 %v353, %v351
        %v378 = vpack.c.b16 %v356, %v354
        %v379 = vpack.c.b16 %v357, %v355
        %v380 = vpack.c.b16 %v360, %v358
        %v381 = vpack.c.b16 %v361, %v359
        %v382 = vpack.c.b16 %v364, %v362
        %v383 = vpack.c.b16 %v365, %v363
        %vm402 = vcmask 130048
        %v404 = vsel %vm402, %v310, 0
        %406 = vmatprep.subr.bf16.mxu0 %v367
        %407 = vmatpush1.bf16.msra.mxu0 %v366
        %408 = vmatprep.subr.bf16.mxu0 %v369
        %409 = vmatpush1.bf16.msra.mxu0 %v368
        %410 = vmatprep.subr.bf16.mxu0 %v371
        %411 = vmatpush1.bf16.msra.mxu0 %v370
        %412 = vmatprep.subr.bf16.mxu0 %v373
        %413 = vmatpush1.bf16.msra.mxu0 %v372
        %414 = vmatprep.subr.bf16.mxu0 %v375
        %415 = vmatpush1.bf16.msra.mxu0 %v374
        %416 = vmatprep.subr.bf16.mxu0 %v377
        %417 = vmatpush1.bf16.msra.mxu0 %v376
        %418 = vmatprep.subr.bf16.mxu0 %v379
        %419 = vmatpush1.bf16.msra.mxu0 %v378
        %420 = vmatprep.subr.bf16.mxu0 %v381
        %421 = vmatpush1.bf16.msra.mxu0 %v380
        %422 = vmatprep.subr.bf16.mxu0 %v383
        %423 = vmatpush1.bf16.msra.mxu0 %v382
        %424 = vmatprep.subr.bf16.mxu0 0
        %425 = vmatpush1.bf16.msra.mxu0 0
        %426 = vmatprep.subr.bf16.mxu0 0
        %427 = vmatpush1.bf16.msra.mxu0 0
        %428 = vmatprep.subr.bf16.mxu0 0
        %429 = vmatpush1.bf16.msra.mxu0 0
        %430 = vmatprep.subr.bf16.mxu0 0
        %431 = vmatpush1.bf16.msra.mxu0 0
        %432 = vmatprep.subr.bf16.mxu0 0
        %433 = vmatpush1.bf16.msra.mxu0 0
        %434 = vmatprep.subr.bf16.mxu0 0
        %435 = vmatpush1.bf16.msra.mxu0 0
        %436 = vmatprep.subr.bf16.mxu0 0
        %437 = vmatpush1.bf16.msra.mxu0 0
        %438 = vmatprep.mubr.bf16.mxu0 %v404
        %439 = vmatmul.mubr.bf16.gmra.mrb[0].mxu0 %v309
        %v440 = vpop.f32.mrb[0].mxu0
        %v441 = vadd.f32 %v300, %v440
        %v442 = vpop.f32.mrb[0].mxu0
        %v443 = vadd.f32 %v300, %v442
        %v444 = vpop.f32.mrb[0].mxu0
        %v445 = vpop.f32.mrb[0].mxu0
        %446 = vdwg.mxu0
        %v449 = vcombine.low %v441, %v443
        %451 = vst [vmem:[%s274] sm:$0xff] %v449
        %s452 = smul.u32 2, %s14
        %p453 = scmp.lt.s32.totalorder %s452, 3
        %s454 = scalar_select %p453, %s452, 3
        %s455 = smul.addr %s454, 4
        %s456 = scalar_lea.vmem %s3, %s455
        // Predicated region
        $region71: #{conv_self_attention_forward.12} parent=65 // pred_check
          %p457 = pneg %p100
        $region72: #{conv_self_attention_forward.12} parent=65 // pred_check_branch
          %459 = sbr.rel (%p457) target = $region74
        $region73: #{conv_self_attention_forward.12} parent=65 // pred_region
          %s460 = smul.u32 2, %s14
        $region74: #{conv_self_attention_forward.12} parent=65 // pred_fallthru
          _
      $region66: #{conv_self_attention_forward.12} parent=5 // pred_fallthru
        _
      %p461 = scmp.le.s32.totalorder 2, %s9
      // Predicated region
      $region75: #{conv_self_attention_forward.12} parent=5 // pred_check
        %p462 = pneg %p461
      $region76: #{conv_self_attention_forward.12} parent=5 // pred_check_branch
        %464 = sbr.rel (%p462) target = $region78
      $region77: #{conv_self_attention_forward.12} parent=5 // pred_region
        %s465 = ssub.s32 %s9, 2
        // Predicated region
        $region79: #{conv_self_attention_forward.12} parent=77 // pred_check
          %p466 = pneg %p106
        $region80: #{conv_self_attention_forward.12} parent=77 // pred_check_branch
          %468 = sbr.rel (%p466) target = $region82
        $region81: #{conv_self_attention_forward.12} parent=77 // pred_region
          %s469 = smul.u32 2, %s15
          %p470 = scmp.lt.s32.totalorder %s469, 3
          %s471 = scalar_select %p470, %s469, 3
          %s472 = smul.addr %s471, 4
          %s473 = scalar_lea.vmem %s3, %s472
        $region82: #{conv_self_attention_forward.12} parent=77 // pred_fallthru
          _
      $region78: #{conv_self_attention_forward.12} parent=5 // pred_fallthru
        _
    $region6: #{conv_self_attention_forward.12} parent=1 // loop_footer
      %s13 = sadd.s32 1, %s9
    $region7: #{conv_self_attention_forward.12} parent=1 // loop_footer_branch
      %8 = sbr.rel target = $region3
    $region8: #{conv_self_attention_forward.12} parent=1 // loop_exit
      _

// kernel: conv_self_attention_forward.7
$region0: #{conv_self_attention_forward.7}
  #allocation0 [shape = 'u32[]', space=smem, size = 0x4, offset = 0x4, fixed_abs, tag = 'smem constant byte address 0x4 - core index']
  #allocation1 [shape = 'u32[144,128]{1,0:T(1,128)}', space=vmem, size = 0x12000, scoped, tag = 'internal scratch']
  %s0 = inlined_call_operand.vmem [shape: bf16[36,2048], index: 0, kind: input, shape index: {}]
  %s1 = inlined_call_operand.vmem [shape: bf16[24,36], index: 1, kind: input, shape index: {}]
  %s2 = inlined_call_operand.vmem [shape: f32[24,1], index: 2, kind: input, shape index: {}]
  %s3 = inlined_call_operand.vmem [shape: bf16[24,2048], index: 3, kind: output, shape index: {}]
  %s4 = sld [smem:[#allocation0]]
  $region117: #{conv_self_attention_forward.7} parent=0
    _
  %s6 = ssub.s32 1, %s4
  %s7 = scalar_select 0, %s6, %s4
  $region1: #{conv_self_attention_forward.7} parent=0
    #allocation2 [shape = 'u8[40960]{0}', space=vmem, size = 0xa000, scoped, tag = 'input window, operand 0']
    #allocation3 [shape = 'u8[24576]{0}', space=vmem, size = 0x6000, scoped, tag = 'output window, operand 0']
    loop: start=0, step=1, limit=10
    $region2: #{conv_self_attention_forward.7} parent=1 // loop_pre_header
      _
    $region3: #{conv_self_attention_forward.7} parent=1 // loop_header
      %s9 = sphi 0, %s13
      %p10 = scmp.ge.s32.totalorder %s9, 10
      %s19 = sphi 0, %s21
      %s22 = sphi 0, %s19
      %s23 = sphi 0, %s22
      %s39 = sphi 0, %s23
      %s43 = sphi 0, %s43
      %s45 = sphi 0, %s43
      %s46 = sphi 0, %s45
      %s60 = sphi 0, %s46
      %s64 = sphi 0, %s64
      %s66 = sphi 0, %s64
      %s67 = sphi 0, %s66
      %s81 = sphi 0, %s67
      %s87 = sphi 0, %s89
      %s90 = sphi 0, %s87
      %s91 = sphi 0, %s90
      %s107 = sphi 0, %s91
    $region4: #{conv_self_attention_forward.7} parent=1 // loop_header_branch
      %12 = sbr.rel (%p10) target = $region8
    $region5: #{conv_self_attention_forward.7} parent=1 // loop_body
      %s14 = ssub.s32 %s9, 1
      %s15 = ssub.s32 %s9, 2
      %s16 = sadd.s32 %s9, 1
      %s17 = ssub.s32 %s9, %s16
      %p18 = scmp.eq.s32.totalorder %s17, 0
      %s20 = sadd.s32 %s19, 1
      %s21 = scalar_select %p18, %s19, %s20
      %p24 = pneg %p18
      %p25 = scmp.eq.s32.totalorder %s9, 7
      %p26 = por %p24, %p25
      %p27 = scmp.ne.s32.totalorder %s19, %s22
      %p28 = scmp.eq.s32.totalorder %s9, 0
      %p29 = por %p27, %p28
      %p30 = scmp.ne.s32.totalorder %s19, %s22
      %p31 = scmp.eq.s32.totalorder %s14, 7
      %p32 = por %p30, %p31
      %p33 = scmp.ne.s32.totalorder %s22, %s23
      %p34 = scmp.eq.s32.totalorder %s14, 0
      %p35 = por %p33, %p34
      %p36 = scmp.ne.s32.totalorder %s22, %s23
      %p37 = scmp.eq.s32.totalorder %s15, 7
      %p38 = por %p36, %p37
      %p40 = scmp.ne.s32.totalorder %s23, %s39
      %p41 = scmp.eq.s32.totalorder %s15, 0
      %p42 = por %p40, %p41
      %s44 = sadd.s32 %s43, 1
      %p47 = scmp.eq.s32.totalorder %s9, 7
      %p48 = scmp.ne.s32.totalorder %s43, %s45
      %p49 = scmp.eq.s32.totalorder %s9, 0
      %p50 = por %p48, %p49
      %p51 = scmp.ne.s32.totalorder %s43, %s45
      %p52 = scmp.eq.s32.totalorder %s14, 7
      %p53 = por %p51, %p52
      %p54 = scmp.ne.s32.totalorder %s45, %s46
      %p55 = scmp.eq.s32.totalorder %s14, 0
      %p56 = por %p54, %p55
      %p57 = scmp.ne.s32.totalorder %s45, %s46
      %p58 = scmp.eq.s32.totalorder %s15, 7
      %p59 = por %p57, %p58
      %p61 = scmp.ne.s32.totalorder %s46, %s60
      %p62 = scmp.eq.s32.totalorder %s15, 0
      %p63 = por %p61, %p62
      %s65 = sadd.s32 %s64, 1
      %p68 = scmp.eq.s32.totalorder %s9, 7
      %p69 = scmp.ne.s32.totalorder %s64, %s66
      %p70 = scmp.eq.s32.totalorder %s9, 0
      %p71 = por %p69, %p70
      %p72 = scmp.ne.s32.totalorder %s64, %s66
      %p73 = scmp.eq.s32.totalorder %s14, 7
      %p74 = por %p72, %p73
      %p75 = scmp.ne.s32.totalorder %s66, %s67
      %p76 = scmp.eq.s32.totalorder %s14, 0
      %p77 = por %p75, %p76
      %p78 = scmp.ne.s32.totalorder %s66, %s67
      %p79 = scmp.eq.s32.totalorder %s15, 7
      %p80 = por %p78, %p79
      %p82 = scmp.ne.s32.totalorder %s67, %s81
      %p83 = scmp.eq.s32.totalorder %s15, 0
      %p84 = por %p82, %p83
      %s85 = ssub.s32 %s9, %s16
      %p86 = scmp.eq.s32.totalorder %s85, 0
      %s88 = sadd.s32 %s87, 1
      %s89 = scalar_select %p86, %s87, %s88
      %p92 = pneg %p86
      %p93 = scmp.eq.s32.totalorder %s9, 7
      %p94 = por %p92, %p93
      %p95 = scmp.ne.s32.totalorder %s87, %s90
      %p96 = scmp.eq.s32.totalorder %s9, 0
      %p97 = por %p95, %p96
      %p98 = scmp.ne.s32.totalorder %s87, %s90
      %p99 = scmp.eq.s32.totalorder %s14, 7
      %p100 = por %p98, %p99
      %p101 = scmp.ne.s32.totalorder %s90, %s91
      %p102 = scmp.eq.s32.totalorder %s14, 0
      %p103 = por %p101, %p102
      %p104 = scmp.ne.s32.totalorder %s90, %s91
      %p105 = scmp.eq.s32.totalorder %s15, 7
      %p106 = por %p104, %p105
      %p108 = scmp.ne.s32.totalorder %s91, %s107
      %p109 = scmp.eq.s32.totalorder %s15, 0
      %p110 = por %p108, %p109
      %p111 = scmp.le.s32.totalorder 1, %s9
      %p112 = scmp.lt.s32.totalorder %s9, 9
      %p113 = pnand %p111, %p112
      %p114 = pneg %p113
      // Predicated region
      $region9: #{conv_self_attention_forward.7} parent=5 // pred_check
        _
      $region10: #{conv_self_attention_forward.7} parent=5 // pred_check_branch
        %116 = sbr.rel (%p113) target = $region12
      $region11: #{conv_self_attention_forward.7} parent=5 // pred_region
        %s117 = ssub.s32 %s9, 1
        // Predicated region
        $region13: #{conv_self_attention_forward.7} parent=11 // pred_check
          %p118 = pneg %p56
        $region14: #{conv_self_attention_forward.7} parent=11 // pred_check_branch
          %120 = sbr.rel (%p118) target = $region16
        $region15: #{conv_self_attention_forward.7} parent=11 // pred_region
          _
        $region16: #{conv_self_attention_forward.7} parent=11 // pred_fallthru
          _
        // Predicated region
        $region17: #{conv_self_attention_forward.7} parent=11 // pred_check
          %p121 = pneg %p77
        $region18: #{conv_self_attention_forward.7} parent=11 // pred_check_branch
          %123 = sbr.rel (%p121) target = $region20
        $region19: #{conv_self_attention_forward.7} parent=11 // pred_region
          _
        $region20: #{conv_self_attention_forward.7} parent=11 // pred_fallthru
          _
      $region12: #{conv_self_attention_forward.7} parent=5 // pred_fallthru
        _
      %p124 = scmp.lt.s32.totalorder %s9, 8
      // Predicated region
      $region21: #{conv_self_attention_forward.7} parent=5 // pred_check
        %p125 = pneg %p124
      $region22: #{conv_self_attention_forward.7} parent=5 // pred_check_branch
        %127 = sbr.rel (%p125) target = $region24
      $region23: #{conv_self_attention_forward.7} parent=5 // pred_region
        // Predicated region
        $region25: #{conv_self_attention_forward.7} parent=23 // pred_check
          %p128 = pneg %p29
        $region26: #{conv_self_attention_forward.7} parent=23 // pred_check_branch
          %130 = sbr.rel (%p128) target = $region28
        $region27: #{conv_self_attention_forward.7} parent=23 // pred_region
          %s131 = sand.u32 %s19, 1
          %s132 = sand.u32 %s19, 1
          %s133 = smul.addr %s132, 40
          %s134 = scalar_lea.vmem [#allocation2], %s133
          %s135 = smul.u32 2, %s9
          %s136 = smul.addr %s135, 4
          %s137 = scalar_lea.vmem %s0, %s136
          // Predicated region
          $region29: #{conv_self_attention_forward.7} parent=27 // pred_check
            _
          $region30: #{conv_self_attention_forward.7} parent=27 // pred_check_branch
            %139 = sbr.rel (0) target = $region32
          $region31: #{conv_self_attention_forward.7} parent=27 // pred_region
            // Predicated region
            $region33: #{conv_self_attention_forward.7} parent=31 // pred_check
              _
            $region34: #{conv_self_attention_forward.7} parent=31 // pred_check_branch
              %141 = sbr.rel (0) target = $region36
            $region35: #{conv_self_attention_forward.7} parent=31 // pred_region
              // Predicated region
              $region48: #{conv_self_attention_forward.7} parent=35 // pred_check
                _
              $region49: #{conv_self_attention_forward.7} parent=35 // pred_check_branch
                %164 = sbr.rel (0) target = $region51
              $region50: #{conv_self_attention_forward.7} parent=35 // pred_region
                loop: start=0, step=1, limit=1
                $region52: #{conv_self_attention_forward.7} parent=50 // loop_pre_header
                  _
                $region53: #{conv_self_attention_forward.7} parent=50 // loop_header
                  %s166 = sphi 0, %s170
                  %p167 = scmp.ge.s32.totalorder %s166, 1
                  %s171 = sphi %s137, %s137
                  %s172 = sphi %s134, %s134
                $region54: #{conv_self_attention_forward.7} parent=50 // loop_header_branch
                  %169 = sbr.rel (%p167) target = $region58
                $region55: #{conv_self_attention_forward.7} parent=50 // loop_body
                  %v173 = vld [vmem:[%s171] sm:$0xff]
                  %174 = vst [vmem:[%s172] sm:$0xff] %v173
                  %v175 = vld [vmem:[%s171 + $0x40] sm:$0xff]
                  %176 = vst [vmem:[%s172 + $0x8] sm:$0xff] %v175
                  %v177 = vld [vmem:[%s171 + $0x80] sm:$0xff]
                  %178 = vst [vmem:[%s172 + $0x10] sm:$0xff] %v177
                  %v179 = vld [vmem:[%s171 + $0xc0] sm:$0xff]
                  %180 = vst [vmem:[%s172 + $0x18] sm:$0xff] %v179
                  %v181 = vld [vmem:[%s171 + $0x100] sm:$0xff]
                  %182 = vst [vmem:[%s172 + $0x20] sm:$0xff] %v181
                $region56: #{conv_self_attention_forward.7} parent=50 // loop_footer
                  %s170 = sadd.s32 1, %s166
                $region57: #{conv_self_attention_forward.7} parent=50 // loop_footer_branch
                  %165 = sbr.rel target = $region53
                $region58: #{conv_self_attention_forward.7} parent=50 // loop_exit
                  _
              $region51: #{conv_self_attention_forward.7} parent=35 // pred_fallthru
                _
              // Predicated region
              $region59: #{conv_self_attention_forward.7} parent=35 // pred_check
                _
              $region60: #{conv_self_attention_forward.7} parent=35 // pred_check_branch
                %184 = sbr.rel target = $region62
              $region61: #{conv_self_attention_forward.7} parent=35 // pred_region
                _
              $region62: #{conv_self_attention_forward.7} parent=35 // pred_fallthru
                _
            $region36: #{conv_self_attention_forward.7} parent=31 // pred_fallthru
              _
            // Predicated region
            $region37: #{conv_self_attention_forward.7} parent=31 // pred_check
              _
            $region38: #{conv_self_attention_forward.7} parent=31 // pred_check_branch
              %143 = sbr.rel target = $region40
            $region39: #{conv_self_attention_forward.7} parent=31 // pred_region
              loop: start=0, step=1, limit=1
              $region41: #{conv_self_attention_forward.7} parent=39 // loop_pre_header
                _
              $region42: #{conv_self_attention_forward.7} parent=39 // loop_header
                %s146 = sphi 0, %s150
                %p147 = scmp.ge.s32.totalorder %s146, 1
                %s151 = sphi %s137, %s137
                %s152 = sphi %s134, %s134
              $region43: #{conv_self_attention_forward.7} parent=39 // loop_header_branch
                %149 = sbr.rel (%p147) target = $region47
              $region44: #{conv_self_attention_forward.7} parent=39 // loop_body
                %v153 = vld [vmem:[%s151] sm:$0xff]
                %154 = vst [vmem:[%s152] sm:$0xff] %v153
                %v155 = vld [vmem:[%s151 + $0x40] sm:$0xff]
                %156 = vst [vmem:[%s152 + $0x8] sm:$0xff] %v155
                %v157 = vld [vmem:[%s151 + $0x80] sm:$0xff]
                %158 = vst [vmem:[%s152 + $0x10] sm:$0xff] %v157
                %v159 = vld [vmem:[%s151 + $0xc0] sm:$0xff]
                %160 = vst [vmem:[%s152 + $0x18] sm:$0xff] %v159
                %v161 = vld [vmem:[%s151 + $0x100] sm:$0xff]
                %162 = vst [vmem:[%s152 + $0x20] sm:$0xff] %v161
              $region45: #{conv_self_attention_forward.7} parent=39 // loop_footer
                %s150 = sadd.s32 1, %s146
              $region46: #{conv_self_attention_forward.7} parent=39 // loop_footer_branch
                %145 = sbr.rel target = $region42
              $region47: #{conv_self_attention_forward.7} parent=39 // loop_exit
                _
            $region40: #{conv_self_attention_forward.7} parent=31 // pred_fallthru
              _
          $region32: #{conv_self_attention_forward.7} parent=27 // pred_fallthru
            _
          %185 = vnop
        $region28: #{conv_self_attention_forward.7} parent=23 // pred_fallthru
          _
      $region24: #{conv_self_attention_forward.7} parent=5 // pred_fallthru
        _
      %p186 = scmp.le.s32.totalorder 1, %s9
      %p187 = scmp.lt.s32.totalorder %s9, 9
      %p188 = pnand %p186, %p187
      %p189 = pneg %p188
      // Predicated region
      $region63: #{conv_self_attention_forward.7} parent=5 // pred_check
        _
      $region64: #{conv_self_attention_forward.7} parent=5 // pred_check_branch
        %191 = sbr.rel (%p188) target = $region66
      $region65: #{conv_self_attention_forward.7} parent=5 // pred_region
        %s192 = ssub.s32 %s9, 1
        %s193 = sand.u32 %s22, 1
        %s194 = sand.u32 %s22, 1
        %s195 = smul.addr %s194, 40
        %s196 = scalar_lea.vmem [#allocation2], %s195
        // Predicated region
        $region67: #{conv_self_attention_forward.7} parent=65 // pred_check
          %p197 = pneg %p35
        $region68: #{conv_self_attention_forward.7} parent=65 // pred_check_branch
          %199 = sbr.rel (%p197) target = $region70
        $region69: #{conv_self_attention_forward.7} parent=65 // pred_region
          _
        $region70: #{conv_self_attention_forward.7} parent=65 // pred_fallthru
          _
        %s200 = sand.u32 %s22, 1
        %s201 = sand.u32 %s22, 1
        %s202 = smul.addr %s201, 40
        %s203 = scalar_lea.vmem [#allocation2], %s202
        %p204 = pneg %p35
        %p205 = pneg %p32
        %p206 = pneg %p56
        %p207 = pneg %p53
        %p208 = pneg %p77
        %p209 = pneg %p74
        %p210 = pneg %p103
        %p211 = pneg %p100
        %s212 = sand.u32 %s90, 1
        %s213 = sand.u32 %s90, 1
        %s214 = smul.addr %s213, 24
        %s215 = scalar_lea.vmem [#allocation3], %s214
        %s216 = smul.u32 2, %s14
        %s217 = smul.u32 2, %s14
        %v219 = vld [vmem:[%s1] sm:$0xf]
        %v220 = vld [vmem:[%s1 + $0x4] sm:$0xf]
        %v221 = vld [vmem:[%s1 + $0x8] sm:$0xf]
        %v222 = vld [vmem:[%s196] sm:$0xff]
        %v223 = vld [vmem:[%s196 + $0x8] sm:$0xff]
        %v224 = vld [vmem:[%s196 + $0x10] sm:$0xff]
        %v225 = vld [vmem:[%s196 + $0x18] sm:$0xff]
        %v226 = vld [vmem:[%s196 + $0x20] sm:$0x33]
        %v227 = vld [vmem:[%s2] sm:$0xff]
        %v228 = vld [vmem:[%s2 + $0x8] sm:$0xff]
        %v229 = vld [vmem:[%s2 + $0x10] sm:$0xff]
        %231 = vset.pattern.permute.xlu0 0
        %232 = vperm.xlu0 %231, %v227
        %v233 = vpop.permute.xlu0 %232
        %236 = vset.pattern.permute.xlu0 0
        %237 = vperm.xlu0 %236, %v228
        %v238 = vpop.permute.xlu0 %237
        %241 = vset.pattern.permute.xlu0 0
        %242 = vperm.xlu0 %241, %v229
        %v243 = vpop.permute.xlu0 %242
        %v248 = vunpack.c.l.b16 %v219
        %v249 = vunpack.c.l.b16 %v220
        %v250 = vunpack.c.l.b16 %v221
        %v251 = vpack.c.b16 %v249, %v248
        %v252 = vpack.c.b16 %v250, %v250
        %v258 = vunpack.c.l.b16 %v222
        %v259 = vunpack.c.h.b16 %v222
        %v260 = vunpack.c.l.b16 %v223
        %v261 = vunpack.c.h.b16 %v223
        %v262 = vunpack.c.l.b16 %v224
        %v263 = vunpack.c.h.b16 %v224
        %v264 = vunpack.c.l.b16 %v225
        %v265 = vunpack.c.h.b16 %v225
        %v266 = vunpack.c.l.b16 %v226
        %v267 = vunpack.c.h.b16 %v226
        %v268 = vpack.c.b16 %v260, %v258
        %v269 = vpack.c.b16 %v261, %v259
        %v270 = vpack.c.b16 %v264, %v262
        %v271 = vpack.c.b16 %v265, %v263
        %v272 = vpack.c.b16 %v266, %v266
        %v273 = vpack.c.b16 %v267, %v267
        %vm278 = vcmask 293888
        %v280 = vsel %vm278, %v251, 0
        %v283 = vsel %vm278, %v252, 0
        %vm285 = vcmask 1041408
        %v287 = vsel %vm285, %v272, 0
        %v290 = vsel %vm285, %v273, 0
        %292 = vmatprep.subr.bf16.mxu0 %v269
        %293 = vmatpush1.bf16.msra.mxu0 %v268
        %294 = vmatprep.subr.bf16.mxu0 %v271
        %295 = vmatpush1.bf16.msra.mxu0 %v270
        %296 = vmatprep.subr.bf16.mxu0 %v290
        %297 = vmatpush1.bf16.msra.mxu0 %v287
        %298 = vmatprep.subr.bf16.mxu0 0
        %299 = vmatpush1.bf16.msra.mxu0 0
        %300 = vmatprep.subr.bf16.mxu0 0
        %301 = vmatpush1.bf16.msra.mxu0 0
        %302 = vmatprep.subr.bf16.mxu0 0
        %303 = vmatpush1.bf16.msra.mxu0 0
        %304 = vmatprep.subr.bf16.mxu0 0
        %305 = vmatpush1.bf16.msra.mxu0 0
        %306 = vmatprep.subr.bf16.mxu0 0
        %307 = vmatpush1.bf16.msra.mxu0 0
        %308 = vmatprep.subr.bf16.mxu0 0
        %309 = vmatpush1.bf16.msra.mxu0 0
        %310 = vmatprep.subr.bf16.mxu0 0
        %311 = vmatpush1.bf16.msra.mxu0 0
        %312 = vmatprep.subr.bf16.mxu0 0
        %313 = vmatpush1.bf16.msra.mxu0 0
        %314 = vmatprep.subr.bf16.mxu0 0
        %315 = vmatpush1.bf16.msra.mxu0 0
        %316 = vmatprep.subr.bf16.mxu0 0
        %317 = vmatpush1.bf16.msra.mxu0 0
        %318 = vmatprep.subr.bf16.mxu0 0
        %319 = vmatpush1.bf16.msra.mxu0 0
        %320 = vmatprep.subr.bf16.mxu0 0
        %321 = vmatpush1.bf16.msra.mxu0 0
        %322 = vmatprep.subr.bf16.mxu0 0
        %323 = vmatpush1.bf16.msra.mxu0 0
        %324 = vmatprep.mubr.bf16.mxu0 0
        %325 = vmatmul.mubr.bf16.gmra.mrb[0].mxu0 %v280
        %v326 = vpop.f32.mrb[0].mxu0
        %v327 = vadd.f32 %v233, %v326
        %v328 = vpop.f32.mrb[0].mxu0
        %v329 = vadd.f32 %v233, %v328
        %v330 = vpop.f32.mrb[0].mxu0
        %v331 = vadd.f32 %v238, %v330
        %v332 = vpop.f32.mrb[0].mxu0
        %v333 = vadd.f32 %v238, %v332
        %334 = vmatprep.mubr.bf16.mxu0 0
        %335 = vmatmul.mubr.bf16.gmra.mrb[0].mxu0 %v283
        %v336 = vpop.f32.mrb[0].mxu0
        %v337 = vadd.f32 %v243, %v336
        %v338 = vpop.f32.mrb[0].mxu0
        %v339 = vadd.f32 %v243, %v338
        %v340 = vpop.f32.mrb[0].mxu0
        %v341 = vpop.f32.mrb[0].mxu0
        %342 = vdwg.mxu0
        %v343 = vpack.c.bf16 %v331, %v327
        %v344 = vpack.c.bf16 %v333, %v329
        %v345 = vpack.c.bf16 %v337, %v337
        %v346 = vpack.c.bf16 %v339, %v339
        %v351 = vunpack.c.l.b16 %v343
        %v352 = vunpack.c.l.b16 %v344
        %v353 = vunpack.c.h.b16 %v343
        %v354 = vunpack.c.h.b16 %v344
        %v355 = vunpack.c.l.b16 %v345
        %v356 = vunpack.c.l.b16 %v346
        %v357 = vpack.c.b16 %v352, %v351
        %v358 = vpack.c.b16 %v354, %v353
        %v359 = vpack.c.b16 %v356, %v355
        %363 = vst [vmem:[%s215] sm:$0xff] %v357
        %364 = vst [vmem:[%s215 + $0x8] sm:$0xff] %v358
        %365 = vst [vmem:[%s215 + $0x10] sm:$0xff] %v359
        %s366 = sand.u32 %s90, 1
        %s367 = sand.u32 %s90, 1
        %s368 = smul.addr %s367, 24
        %s369 = scalar_lea.vmem [#allocation3], %s368
        // Predicated region
        $region71: #{conv_self_attention_forward.7} parent=65 // pred_check
          %p370 = pneg %p100
        $region72: #{conv_self_attention_forward.7} parent=65 // pred_check_branch
          %372 = sbr.rel (%p370) target = $region74
        $region73: #{conv_self_attention_forward.7} parent=65 // pred_region
          %s373 = smul.u32 2, %s14
          %s374 = smul.addr %s373, 4
          %s375 = scalar_lea.vmem %s3, %s374
          // Predicated region
          $region75: #{conv_self_attention_forward.7} parent=73 // pred_check
            _
          $region76: #{conv_self_attention_forward.7} parent=73 // pred_check_branch
            %377 = sbr.rel (0) target = $region78
          $region77: #{conv_self_attention_forward.7} parent=73 // pred_region
            // Predicated region
            $region79: #{conv_self_attention_forward.7} parent=77 // pred_check
              _
            $region80: #{conv_self_attention_forward.7} parent=77 // pred_check_branch
              %379 = sbr.rel (0) target = $region82
            $region81: #{conv_self_attention_forward.7} parent=77 // pred_region
              // Predicated region
              $region94: #{conv_self_attention_forward.7} parent=81 // pred_check
                _
              $region95: #{conv_self_attention_forward.7} parent=81 // pred_check_branch
                %398 = sbr.rel (0) target = $region97
              $region96: #{conv_self_attention_forward.7} parent=81 // pred_region
                loop: start=0, step=1, limit=1
                $region98: #{conv_self_attention_forward.7} parent=96 // loop_pre_header
                  _
                $region99: #{conv_self_attention_forward.7} parent=96 // loop_header
                  %s400 = sphi 0, %s404
                  %p401 = scmp.ge.s32.totalorder %s400, 1
                  %s405 = sphi %s369, %s369
                  %s406 = sphi %s375, %s375
                $region100: #{conv_self_attention_forward.7} parent=96 // loop_header_branch
                  %403 = sbr.rel (%p401) target = $region104
                $region101: #{conv_self_attention_forward.7} parent=96 // loop_body
                  %v407 = vld [vmem:[%s405] sm:$0xff]
                  %408 = vst [vmem:[%s406] sm:$0xff] %v407
                  %v409 = vld [vmem:[%s405 + $0x8] sm:$0xff]
                  %410 = vst [vmem:[%s406 + $0x40] sm:$0xff] %v409
                  %v411 = vld [vmem:[%s405 + $0x10] sm:$0xff]
                  %412 = vst [vmem:[%s406 + $0x80] sm:$0xff] %v411
                $region102: #{conv_self_attention_forward.7} parent=96 // loop_footer
                  %s404 = sadd.s32 1, %s400
                $region103: #{conv_self_attention_forward.7} parent=96 // loop_footer_branch
                  %399 = sbr.rel target = $region99
                $region104: #{conv_self_attention_forward.7} parent=96 // loop_exit
                  _
              $region97: #{conv_self_attention_forward.7} parent=81 // pred_fallthru
                _
              // Predicated region
              $region105: #{conv_self_attention_forward.7} parent=81 // pred_check
                _
              $region106: #{conv_self_attention_forward.7} parent=81 // pred_check_branch
                %414 = sbr.rel target = $region108
              $region107: #{conv_self_attention_forward.7} parent=81 // pred_region
                _
              $region108: #{conv_self_attention_forward.7} parent=81 // pred_fallthru
                _
            $region82: #{conv_self_attention_forward.7} parent=77 // pred_fallthru
              _
            // Predicated region
            $region83: #{conv_self_attention_forward.7} parent=77 // pred_check
              _
            $region84: #{conv_self_attention_forward.7} parent=77 // pred_check_branch
              %381 = sbr.rel target = $region86
            $region85: #{conv_self_attention_forward.7} parent=77 // pred_region
              loop: start=0, step=1, limit=1
              $region87: #{conv_self_attention_forward.7} parent=85 // loop_pre_header
                _
              $region88: #{conv_self_attention_forward.7} parent=85 // loop_header
                %s384 = sphi 0, %s388
                %p385 = scmp.ge.s32.totalorder %s384, 1
                %s389 = sphi %s369, %s369
                %s390 = sphi %s375, %s375
              $region89: #{conv_self_attention_forward.7} parent=85 // loop_header_branch
                %387 = sbr.rel (%p385) target = $region93
              $region90: #{conv_self_attention_forward.7} parent=85 // loop_body
                %v391 = vld [vmem:[%s389] sm:$0xff]
                %392 = vst [vmem:[%s390] sm:$0xff] %v391
                %v393 = vld [vmem:[%s389 + $0x8] sm:$0xff]
                %394 = vst [vmem:[%s390 + $0x40] sm:$0xff] %v393
                %v395 = vld [vmem:[%s389 + $0x10] sm:$0xff]
                %396 = vst [vmem:[%s390 + $0x80] sm:$0xff] %v395
              $region91: #{conv_self_attention_forward.7} parent=85 // loop_footer
                %s388 = sadd.s32 1, %s384
              $region92: #{conv_self_attention_forward.7} parent=85 // loop_footer_branch
                %383 = sbr.rel target = $region88
              $region93: #{conv_self_attention_forward.7} parent=85 // loop_exit
                _
            $region86: #{conv_self_attention_forward.7} parent=77 // pred_fallthru
              _
          $region78: #{conv_self_attention_forward.7} parent=73 // pred_fallthru
            _
          %415 = vnop
        $region74: #{conv_self_attention_forward.7} parent=65 // pred_fallthru
          _
      $region66: #{conv_self_attention_forward.7} parent=5 // pred_fallthru
        _
      %p416 = scmp.le.s32.totalorder 2, %s9
      // Predicated region
      $region109: #{conv_self_attention_forward.7} parent=5 // pred_check
        %p417 = pneg %p416
      $region110: #{conv_self_attention_forward.7} parent=5 // pred_check_branch
        %419 = sbr.rel (%p417) target = $region112
      $region111: #{conv_self_attention_forward.7} parent=5 // pred_region
        %s420 = ssub.s32 %s9, 2
        // Predicated region
        $region113: #{conv_self_attention_forward.7} parent=111 // pred_check
          %p421 = pneg %p106
        $region114: #{conv_self_attention_forward.7} parent=111 // pred_check_branch
          %423 = sbr.rel (%p421) target = $region116
        $region115: #{conv_self_attention_forward.7} parent=111 // pred_region
          %s424 = sand.u32 %s91, 1
          %s425 = sand.u32 %s91, 1
          %s426 = smul.addr %s425, 24
          %s427 = scalar_lea.vmem [#allocation3], %s426
        $region116: #{conv_self_attention_forward.7} parent=111 // pred_fallthru
          _
      $region112: #{conv_self_attention_forward.7} parent=5 // pred_fallthru
        _
    $region6: #{conv_self_attention_forward.7} parent=1 // loop_footer
      %s13 = sadd.s32 1, %s9
    $region7: #{conv_self_attention_forward.7} parent=1 // loop_footer_branch
      %8 = sbr.rel target = $region3
    $region8: #{conv_self_attention_forward.7} parent=1 // loop_exit
      _

// kernel: conv_self_attention_forward.8
$region0: #{conv_self_attention_forward.8}
  #allocation0 [shape = 'u32[]', space=smem, size = 0x4, offset = 0x4, fixed_abs, tag = 'smem constant byte address 0x4 - core index']
  #allocation1 [shape = 'u32[144,128]{1,0:T(1,128)}', space=vmem, size = 0x12000, scoped, tag = 'internal scratch']
  %s0 = inlined_call_operand.vmem [shape: bf16[24,2,4,256], index: 0, kind: input, shape index: {}, may-alias: {0,1,2}]
  %s1 = inlined_call_operand.vmem [shape: bf16[24,2,4,256], index: 1, kind: input, shape index: {}, may-alias: {0,1,2}]
  %s2 = inlined_call_operand.vmem [shape: bf16[24,2,4,256], index: 2, kind: input, shape index: {}, may-alias: {0,1,2}]
  %s3 = inlined_call_operand.vmem [shape: f32[2,8,4,256], index: 3, kind: output, shape index: {}]
  %s4 = sld [smem:[#allocation0]]
  $region168: #{conv_self_attention_forward.8} parent=0
    _
  %s6 = ssub.s32 1, %s4
  %s7 = scalar_select 0, %s6, %s4
  $region1: #{conv_self_attention_forward.8} parent=0
    #allocation2 [shape = 'u8[32768]{0}', space=vmem, size = 0x8000, scoped, tag = 'input window, operand 0']
    #allocation3 [shape = 'u8[32768]{0}', space=vmem, size = 0x8000, scoped, tag = 'input window, operand 1']
    #allocation4 [shape = 'u8[32768]{0}', space=vmem, size = 0x8000, scoped, tag = 'input window, operand 2']
    loop: start=0, step=1, limit=4
    $region2: #{conv_self_attention_forward.8} parent=1 // loop_pre_header
      _
    $region3: #{conv_self_attention_forward.8} parent=1 // loop_header
      %s9 = sphi 0, %s13
      %p10 = scmp.ge.s32.totalorder %s9, 4
      %s19 = sphi 0, %s21
      %s22 = sphi 0, %s19
      %s23 = sphi 0, %s22
      %s39 = sphi 0, %s23
      %s45 = sphi 0, %s47
      %s48 = sphi 0, %s45
      %s49 = sphi 0, %s48
      %s65 = sphi 0, %s49
      %s71 = sphi 0, %s73
      %s74 = sphi 0, %s71
      %s75 = sphi 0, %s74
      %s91 = sphi 0, %s75
      %s97 = sphi 0, %s99
      %s100 = sphi 0, %s97
      %s101 = sphi 0, %s100
      %s117 = sphi 0, %s101
    $region4: #{conv_self_attention_forward.8} parent=1 // loop_header_branch
      %12 = sbr.rel (%p10) target = $region8
    $region5: #{conv_self_attention_forward.8} parent=1 // loop_body
      %s14 = ssub.s32 %s9, 1
      %s15 = ssub.s32 %s9, 2
      %s16 = sadd.s32 %s9, 1
      %s17 = ssub.s32 %s9, %s16
      %p18 = scmp.eq.s32.totalorder %s17, 0
      %s20 = sadd.s32 %s19, 1
      %s21 = scalar_select %p18, %s19, %s20
      %p24 = pneg %p18
      %p25 = scmp.eq.s32.totalorder %s9, 1
      %p26 = por %p24, %p25
      %p27 = scmp.ne.s32.totalorder %s19, %s22
      %p28 = scmp.eq.s32.totalorder %s9, 0
      %p29 = por %p27, %p28
      %p30 = scmp.ne.s32.totalorder %s19, %s22
      %p31 = scmp.eq.s32.totalorder %s14, 1
      %p32 = por %p30, %p31
      %p33 = scmp.ne.s32.totalorder %s22, %s23
      %p34 = scmp.eq.s32.totalorder %s14, 0
      %p35 = por %p33, %p34
      %p36 = scmp.ne.s32.totalorder %s22, %s23
      %p37 = scmp.eq.s32.totalorder %s15, 1
      %p38 = por %p36, %p37
      %p40 = scmp.ne.s32.totalorder %s23, %s39
      %p41 = scmp.eq.s32.totalorder %s15, 0
      %p42 = por %p40, %p41
      %s43 = ssub.s32 %s9, %s16
      %p44 = scmp.eq.s32.totalorder %s43, 0
      %s46 = sadd.s32 %s45, 1
      %s47 = scalar_select %p44, %s45, %s46
      %p50 = pneg %p44
      %p51 = scmp.eq.s32.totalorder %s9, 1
      %p52 = por %p50, %p51
      %p53 = scmp.ne.s32.totalorder %s45, %s48
      %p54 = scmp.eq.s32.totalorder %s9, 0
      %p55 = por %p53, %p54
      %p56 = scmp.ne.s32.totalorder %s45, %s48
      %p57 = scmp.eq.s32.totalorder %s14, 1
      %p58 = por %p56, %p57
      %p59 = scmp.ne.s32.totalorder %s48, %s49
      %p60 = scmp.eq.s32.totalorder %s14, 0
      %p61 = por %p59, %p60
      %p62 = scmp.ne.s32.totalorder %s48, %s49
      %p63 = scmp.eq.s32.totalorder %s15, 1
      %p64 = por %p62, %p63
      %p66 = scmp.ne.s32.totalorder %s49, %s65
      %p67 = scmp.eq.s32.totalorder %s15, 0
      %p68 = por %p66, %p67
      %s69 = ssub.s32 %s9, %s16
      %p70 = scmp.eq.s32.totalorder %s69, 0
      %s72 = sadd.s32 %s71, 1
      %s73 = scalar_select %p70, %s71, %s72
      %p76 = pneg %p70
      %p77 = scmp.eq.s32.totalorder %s9, 1
      %p78 = por %p76, %p77
      %p79 = scmp.ne.s32.totalorder %s71, %s74
      %p80 = scmp.eq.s32.totalorder %s9, 0
      %p81 = por %p79, %p80
      %p82 = scmp.ne.s32.totalorder %s71, %s74
      %p83 = scmp.eq.s32.totalorder %s14, 1
      %p84 = por %p82, %p83
      %p85 = scmp.ne.s32.totalorder %s74, %s75
      %p86 = scmp.eq.s32.totalorder %s14, 0
      %p87 = por %p85, %p86
      %p88 = scmp.ne.s32.totalorder %s74, %s75
      %p89 = scmp.eq.s32.totalorder %s15, 1
      %p90 = por %p88, %p89
      %p92 = scmp.ne.s32.totalorder %s75, %s91
      %p93 = scmp.eq.s32.totalorder %s15, 0
      %p94 = por %p92, %p93
      %s95 = ssub.s32 %s9, %s16
      %p96 = scmp.eq.s32.totalorder %s95, 0
      %s98 = sadd.s32 %s97, 1
      %s99 = scalar_select %p96, %s97, %s98
      %p102 = pneg %p96
      %p103 = scmp.eq.s32.totalorder %s9, 1
      %p104 = por %p102, %p103
      %p105 = scmp.ne.s32.totalorder %s97, %s100
      %p106 = scmp.eq.s32.totalorder %s9, 0
      %p107 = por %p105, %p106
      %p108 = scmp.ne.s32.totalorder %s97, %s100
      %p109 = scmp.eq.s32.totalorder %s14, 1
      %p110 = por %p108, %p109
      %p111 = scmp.ne.s32.totalorder %s100, %s101
      %p112 = scmp.eq.s32.totalorder %s14, 0
      %p113 = por %p111, %p112
      %p114 = scmp.ne.s32.totalorder %s100, %s101
      %p115 = scmp.eq.s32.totalorder %s15, 1
      %p116 = por %p114, %p115
      %p118 = scmp.ne.s32.totalorder %s101, %s117
      %p119 = scmp.eq.s32.totalorder %s15, 0
      %p120 = por %p118, %p119
      %p121 = scmp.le.s32.totalorder 1, %s9
      %p122 = scmp.lt.s32.totalorder %s9, 3
      %p123 = pnand %p121, %p122
      %p124 = pneg %p123
      // Predicated region
      $region9: #{conv_self_attention_forward.8} parent=5 // pred_check
        _
      $region10: #{conv_self_attention_forward.8} parent=5 // pred_check_branch
        %126 = sbr.rel (%p123) target = $region12
      $region11: #{conv_self_attention_forward.8} parent=5 // pred_region
        %s127 = ssub.s32 %s9, 1
      $region12: #{conv_self_attention_forward.8} parent=5 // pred_fallthru
        _
      %p128 = scmp.lt.s32.totalorder %s9, 2
      // Predicated region
      $region13: #{conv_self_attention_forward.8} parent=5 // pred_check
        %p129 = pneg %p128
      $region14: #{conv_self_attention_forward.8} parent=5 // pred_check_branch
        %131 = sbr.rel (%p129) target = $region16
      $region15: #{conv_self_attention_forward.8} parent=5 // pred_region
        // Predicated region
        $region17: #{conv_self_attention_forward.8} parent=15 // pred_check
          %p132 = pneg %p29
        $region18: #{conv_self_attention_forward.8} parent=15 // pred_check_branch
          %134 = sbr.rel (%p132) target = $region20
        $region19: #{conv_self_attention_forward.8} parent=15 // pred_region
          %s135 = sand.u32 %s19, 1
          %s136 = sand.u32 %s19, 1
          %s137 = smul.addr %s136, 32
          %s138 = scalar_lea.vmem [#allocation2], %s137
          %s139 = smul.addr %s9, 2
          %s140 = smul.addr %s139, 2
          %s141 = scalar_lea.vmem %s0, %s140
          // Predicated region
          $region21: #{conv_self_attention_forward.8} parent=19 // pred_check
            _
          $region22: #{conv_self_attention_forward.8} parent=19 // pred_check_branch
            %143 = sbr.rel (0) target = $region24
          $region23: #{conv_self_attention_forward.8} parent=19 // pred_region
            // Predicated region
            $region25: #{conv_self_attention_forward.8} parent=23 // pred_check
              _
            $region26: #{conv_self_attention_forward.8} parent=23 // pred_check_branch
              %145 = sbr.rel target = $region28
            $region27: #{conv_self_attention_forward.8} parent=23 // pred_region
              // Predicated region
              $region40: #{conv_self_attention_forward.8} parent=27 // pred_check
                _
              $region41: #{conv_self_attention_forward.8} parent=27 // pred_check_branch
                %174 = sbr.rel (0) target = $region43
              $region42: #{conv_self_attention_forward.8} parent=27 // pred_region
                loop: start=0, step=1, limit=1
                $region44: #{conv_self_attention_forward.8} parent=42 // loop_pre_header
                  _
                $region45: #{conv_self_attention_forward.8} parent=42 // loop_header
                  %s176 = sphi 0, %s180
                  %p177 = scmp.ge.s32.totalorder %s176, 1
                  %s181 = sphi %s141, %s141
                  %s182 = sphi %s138, %s138
                $region46: #{conv_self_attention_forward.8} parent=42 // loop_header_branch
                  %179 = sbr.rel (%p177) target = $region50
                $region47: #{conv_self_attention_forward.8} parent=42 // loop_body
                  _
                $region48: #{conv_self_attention_forward.8} parent=42 // loop_footer
                  %s180 = sadd.s32 1, %s176
                $region49: #{conv_self_attention_forward.8} parent=42 // loop_footer_branch
                  %175 = sbr.rel target = $region45
                $region50: #{conv_self_attention_forward.8} parent=42 // loop_exit
                  _
                loop: start=0, step=1, limit=1
                $region51: #{conv_self_attention_forward.8} parent=42 // loop_pre_header
                  _
                $region52: #{conv_self_attention_forward.8} parent=42 // loop_header
                  %s185 = sphi 0, %s189
                  %p186 = scmp.ge.s32.totalorder %s185, 1
                  %s190 = sphi %s141, %s141
                  %s191 = sphi %s138, %s138
                $region53: #{conv_self_attention_forward.8} parent=42 // loop_header_branch
                  %188 = sbr.rel (%p186) target = $region57
                $region54: #{conv_self_attention_forward.8} parent=42 // loop_body
                  %v192 = vld [vmem:[%s190] sm:$0xf]
                  %193 = vst [vmem:[%s191] sm:$0xf] %v192
                  %v194 = vld [vmem:[%s190 + $0x8] sm:$0xf]
                  %195 = vst [vmem:[%s191 + $0x4] sm:$0xf] %v194
                  %v196 = vld [vmem:[%s190 + $0x10] sm:$0xf]
                  %197 = vst [vmem:[%s191 + $0x8] sm:$0xf] %v196
                  %v198 = vld [vmem:[%s190 + $0x18] sm:$0xf]
                  %199 = vst [vmem:[%s191 + $0xc] sm:$0xf] %v198
                  %v200 = vld [vmem:[%s190 + $0x20] sm:$0xf]
                  %201 = vst [vmem:[%s191 + $0x10] sm:$0xf] %v200
                  %v202 = vld [vmem:[%s190 + $0x28] sm:$0xf]
                  %203 = vst [vmem:[%s191 + $0x14] sm:$0xf] %v202
                  %v204 = vld [vmem:[%s190 + $0x30] sm:$0xf]
                  %205 = vst [vmem:[%s191 + $0x18] sm:$0xf] %v204
                  %v206 = vld [vmem:[%s190 + $0x38] sm:$0xf]
                  %207 = vst [vmem:[%s191 + $0x1c] sm:$0xf] %v206
                $region55: #{conv_self_attention_forward.8} parent=42 // loop_footer
                  %s189 = sadd.s32 1, %s185
                $region56: #{conv_self_attention_forward.8} parent=42 // loop_footer_branch
                  %184 = sbr.rel target = $region52
                $region57: #{conv_self_attention_forward.8} parent=42 // loop_exit
                  _
              $region43: #{conv_self_attention_forward.8} parent=27 // pred_fallthru
                _
            $region28: #{conv_self_attention_forward.8} parent=23 // pred_fallthru
              _
            // Predicated region
            $region29: #{conv_self_attention_forward.8} parent=23 // pred_check
              _
            $region30: #{conv_self_attention_forward.8} parent=23 // pred_check_branch
              %147 = sbr.rel (0) target = $region32
            $region31: #{conv_self_attention_forward.8} parent=23 // pred_region
              loop: start=0, step=1, limit=1
              $region33: #{conv_self_attention_forward.8} parent=31 // loop_pre_header
                _
              $region34: #{conv_self_attention_forward.8} parent=31 // loop_header
                %s150 = sphi 0, %s154
                %p151 = scmp.ge.s32.totalorder %s150, 1
                %s155 = sphi %s141, %s141
                %s156 = sphi %s138, %s138
              $region35: #{conv_self_attention_forward.8} parent=31 // loop_header_branch
                %153 = sbr.rel (%p151) target = $region39
              $region36: #{conv_self_attention_forward.8} parent=31 // loop_body
                %v157 = vld [vmem:[%s155] sm:$0xf]
                %158 = vst [vmem:[%s156] sm:$0xf] %v157
                %v159 = vld [vmem:[%s155 + $0x8] sm:$0xf]
                %160 = vst [vmem:[%s156 + $0x4] sm:$0xf] %v159
                %v161 = vld [vmem:[%s155 + $0x10] sm:$0xf]
                %162 = vst [vmem:[%s156 + $0x8] sm:$0xf] %v161
                %v163 = vld [vmem:[%s155 + $0x18] sm:$0xf]
                %164 = vst [vmem:[%s156 + $0xc] sm:$0xf] %v163
                %v165 = vld [vmem:[%s155 + $0x20] sm:$0xf]
                %166 = vst [vmem:[%s156 + $0x10] sm:$0xf] %v165
                %v167 = vld [vmem:[%s155 + $0x28] sm:$0xf]
                %168 = vst [vmem:[%s156 + $0x14] sm:$0xf] %v167
                %v169 = vld [vmem:[%s155 + $0x30] sm:$0xf]
                %170 = vst [vmem:[%s156 + $0x18] sm:$0xf] %v169
                %v171 = vld [vmem:[%s155 + $0x38] sm:$0xf]
                %172 = vst [vmem:[%s156 + $0x1c] sm:$0xf] %v171
              $region37: #{conv_self_attention_forward.8} parent=31 // loop_footer
                %s154 = sadd.s32 1, %s150
              $region38: #{conv_self_attention_forward.8} parent=31 // loop_footer_branch
                %149 = sbr.rel target = $region34
              $region39: #{conv_self_attention_forward.8} parent=31 // loop_exit
                _
            $region32: #{conv_self_attention_forward.8} parent=23 // pred_fallthru
              _
          $region24: #{conv_self_attention_forward.8} parent=19 // pred_fallthru
            _
          %208 = vnop
        $region20: #{conv_self_attention_forward.8} parent=15 // pred_fallthru
          _
        // Predicated region
        $region58: #{conv_self_attention_forward.8} parent=15 // pred_check
          %p209 = pneg %p55
        $region59: #{conv_self_attention_forward.8} parent=15 // pred_check_branch
          %211 = sbr.rel (%p209) target = $region61
        $region60: #{conv_self_attention_forward.8} parent=15 // pred_region
          %s212 = sand.u32 %s45, 1
          %s213 = sand.u32 %s45, 1
          %s214 = smul.addr %s213, 32
          %s215 = scalar_lea.vmem [#allocation3], %s214
          %s216 = smul.addr %s9, 2
          %s217 = sadd.s32 %s216, 32
          %s218 = smul.addr %s217, 2
          %s219 = scalar_lea.vmem %s1, %s218
          // Predicated region
          $region62: #{conv_self_attention_forward.8} parent=60 // pred_check
            _
          $region63: #{conv_self_attention_forward.8} parent=60 // pred_check_branch
            %221 = sbr.rel (0) target = $region65
          $region64: #{conv_self_attention_forward.8} parent=60 // pred_region
            // Predicated region
            $region66: #{conv_self_attention_forward.8} parent=64 // pred_check
              _
            $region67: #{conv_self_attention_forward.8} parent=64 // pred_check_branch
              %223 = sbr.rel target = $region69
            $region68: #{conv_self_attention_forward.8} parent=64 // pred_region
              // Predicated region
              $region81: #{conv_self_attention_forward.8} parent=68 // pred_check
                _
              $region82: #{conv_self_attention_forward.8} parent=68 // pred_check_branch
                %252 = sbr.rel (0) target = $region84
              $region83: #{conv_self_attention_forward.8} parent=68 // pred_region
                loop: start=0, step=1, limit=1
                $region85: #{conv_self_attention_forward.8} parent=83 // loop_pre_header
                  _
                $region86: #{conv_self_attention_forward.8} parent=83 // loop_header
                  %s254 = sphi 0, %s258
                  %p255 = scmp.ge.s32.totalorder %s254, 1
                  %s259 = sphi %s219, %s219
                  %s260 = sphi %s215, %s215
                $region87: #{conv_self_attention_forward.8} parent=83 // loop_header_branch
                  %257 = sbr.rel (%p255) target = $region91
                $region88: #{conv_self_attention_forward.8} parent=83 // loop_body
                  _
                $region89: #{conv_self_attention_forward.8} parent=83 // loop_footer
                  %s258 = sadd.s32 1, %s254
                $region90: #{conv_self_attention_forward.8} parent=83 // loop_footer_branch
                  %253 = sbr.rel target = $region86
                $region91: #{conv_self_attention_forward.8} parent=83 // loop_exit
                  _
                loop: start=0, step=1, limit=1
                $region92: #{conv_self_attention_forward.8} parent=83 // loop_pre_header
                  _
                $region93: #{conv_self_attention_forward.8} parent=83 // loop_header
                  %s263 = sphi 0, %s267
                  %p264 = scmp.ge.s32.totalorder %s263, 1
                  %s268 = sphi %s219, %s219
                  %s269 = sphi %s215, %s215
                $region94: #{conv_self_attention_forward.8} parent=83 // loop_header_branch
                  %266 = sbr.rel (%p264) target = $region98
                $region95: #{conv_self_attention_forward.8} parent=83 // loop_body
                  %v270 = vld [vmem:[%s268] sm:$0xf]
                  %271 = vst [vmem:[%s269] sm:$0xf] %v270
                  %v272 = vld [vmem:[%s268 + $0x8] sm:$0xf]
                  %273 = vst [vmem:[%s269 + $0x4] sm:$0xf] %v272
                  %v274 = vld [vmem:[%s268 + $0x10] sm:$0xf]
                  %275 = vst [vmem:[%s269 + $0x8] sm:$0xf] %v274
                  %v276 = vld [vmem:[%s268 + $0x18] sm:$0xf]
                  %277 = vst [vmem:[%s269 + $0xc] sm:$0xf] %v276
                  %v278 = vld [vmem:[%s268 + $0x20] sm:$0xf]
                  %279 = vst [vmem:[%s269 + $0x10] sm:$0xf] %v278
                  %v280 = vld [vmem:[%s268 + $0x28] sm:$0xf]
                  %281 = vst [vmem:[%s269 + $0x14] sm:$0xf] %v280
                  %v282 = vld [vmem:[%s268 + $0x30] sm:$0xf]
                  %283 = vst [vmem:[%s269 + $0x18] sm:$0xf] %v282
                  %v284 = vld [vmem:[%s268 + $0x38] sm:$0xf]
                  %285 = vst [vmem:[%s269 + $0x1c] sm:$0xf] %v284
                $region96: #{conv_self_attention_forward.8} parent=83 // loop_footer
                  %s267 = sadd.s32 1, %s263
                $region97: #{conv_self_attention_forward.8} parent=83 // loop_footer_branch
                  %262 = sbr.rel target = $region93
                $region98: #{conv_self_attention_forward.8} parent=83 // loop_exit
                  _
              $region84: #{conv_self_attention_forward.8} parent=68 // pred_fallthru
                _
            $region69: #{conv_self_attention_forward.8} parent=64 // pred_fallthru
              _
            // Predicated region
            $region70: #{conv_self_attention_forward.8} parent=64 // pred_check
              _
            $region71: #{conv_self_attention_forward.8} parent=64 // pred_check_branch
              %225 = sbr.rel (0) target = $region73
            $region72: #{conv_self_attention_forward.8} parent=64 // pred_region
              loop: start=0, step=1, limit=1
              $region74: #{conv_self_attention_forward.8} parent=72 // loop_pre_header
                _
              $region75: #{conv_self_attention_forward.8} parent=72 // loop_header
                %s228 = sphi 0, %s232
                %p229 = scmp.ge.s32.totalorder %s228, 1
                %s233 = sphi %s219, %s219
                %s234 = sphi %s215, %s215
              $region76: #{conv_self_attention_forward.8} parent=72 // loop_header_branch
                %231 = sbr.rel (%p229) target = $region80
              $region77: #{conv_self_attention_forward.8} parent=72 // loop_body
                %v235 = vld [vmem:[%s233] sm:$0xf]
                %236 = vst [vmem:[%s234] sm:$0xf] %v235
                %v237 = vld [vmem:[%s233 + $0x8] sm:$0xf]
                %238 = vst [vmem:[%s234 + $0x4] sm:$0xf] %v237
                %v239 = vld [vmem:[%s233 + $0x10] sm:$0xf]
                %240 = vst [vmem:[%s234 + $0x8] sm:$0xf] %v239
                %v241 = vld [vmem:[%s233 + $0x18] sm:$0xf]
                %242 = vst [vmem:[%s234 + $0xc] sm:$0xf] %v241
                %v243 = vld [vmem:[%s233 + $0x20] sm:$0xf]
                %244 = vst [vmem:[%s234 + $0x10] sm:$0xf] %v243
                %v245 = vld [vmem:[%s233 + $0x28] sm:$0xf]
                %246 = vst [vmem:[%s234 + $0x14] sm:$0xf] %v245
                %v247 = vld [vmem:[%s233 + $0x30] sm:$0xf]
                %248 = vst [vmem:[%s234 + $0x18] sm:$0xf] %v247
                %v249 = vld [vmem:[%s233 + $0x38] sm:$0xf]
                %250 = vst [vmem:[%s234 + $0x1c] sm:$0xf] %v249
              $region78: #{conv_self_attention_forward.8} parent=72 // loop_footer
                %s232 = sadd.s32 1, %s228
              $region79: #{conv_self_attention_forward.8} parent=72 // loop_footer_branch
                %227 = sbr.rel target = $region75
              $region80: #{conv_self_attention_forward.8} parent=72 // loop_exit
                _
            $region73: #{conv_self_attention_forward.8} parent=64 // pred_fallthru
              _
          $region65: #{conv_self_attention_forward.8} parent=60 // pred_fallthru
            _
          %286 = vnop
        $region61: #{conv_self_attention_forward.8} parent=15 // pred_fallthru
          _
        // Predicated region
        $region99: #{conv_self_attention_forward.8} parent=15 // pred_check
          %p287 = pneg %p81
        $region100: #{conv_self_attention_forward.8} parent=15 // pred_check_branch
          %289 = sbr.rel (%p287) target = $region102
        $region101: #{conv_self_attention_forward.8} parent=15 // pred_region
          %s290 = sand.u32 %s71, 1
          %s291 = sand.u32 %s71, 1
          %s292 = smul.addr %s291, 32
          %s293 = scalar_lea.vmem [#allocation4], %s292
          %s294 = smul.addr %s9, 2
          %s295 = sadd.s32 %s294, 64
          %s296 = smul.addr %s295, 2
          %s297 = scalar_lea.vmem %s2, %s296
          // Predicated region
          $region103: #{conv_self_attention_forward.8} parent=101 // pred_check
            _
          $region104: #{conv_self_attention_forward.8} parent=101 // pred_check_branch
            %299 = sbr.rel (0) target = $region106
          $region105: #{conv_self_attention_forward.8} parent=101 // pred_region
            // Predicated region
            $region107: #{conv_self_attention_forward.8} parent=105 // pred_check
              _
            $region108: #{conv_self_attention_forward.8} parent=105 // pred_check_branch
              %301 = sbr.rel target = $region110
            $region109: #{conv_self_attention_forward.8} parent=105 // pred_region
              // Predicated region
              $region122: #{conv_self_attention_forward.8} parent=109 // pred_check
                _
              $region123: #{conv_self_attention_forward.8} parent=109 // pred_check_branch
                %330 = sbr.rel (0) target = $region125
              $region124: #{conv_self_attention_forward.8} parent=109 // pred_region
                loop: start=0, step=1, limit=1
                $region126: #{conv_self_attention_forward.8} parent=124 // loop_pre_header
                  _
                $region127: #{conv_self_attention_forward.8} parent=124 // loop_header
                  %s332 = sphi 0, %s336
                  %p333 = scmp.ge.s32.totalorder %s332, 1
                  %s337 = sphi %s297, %s297
                  %s338 = sphi %s293, %s293
                $region128: #{conv_self_attention_forward.8} parent=124 // loop_header_branch
                  %335 = sbr.rel (%p333) target = $region132
                $region129: #{conv_self_attention_forward.8} parent=124 // loop_body
                  _
                $region130: #{conv_self_attention_forward.8} parent=124 // loop_footer
                  %s336 = sadd.s32 1, %s332
                $region131: #{conv_self_attention_forward.8} parent=124 // loop_footer_branch
                  %331 = sbr.rel target = $region127
                $region132: #{conv_self_attention_forward.8} parent=124 // loop_exit
                  _
                loop: start=0, step=1, limit=1
                $region133: #{conv_self_attention_forward.8} parent=124 // loop_pre_header
                  _
                $region134: #{conv_self_attention_forward.8} parent=124 // loop_header
                  %s341 = sphi 0, %s345
                  %p342 = scmp.ge.s32.totalorder %s341, 1
                  %s346 = sphi %s297, %s297
                  %s347 = sphi %s293, %s293
                $region135: #{conv_self_attention_forward.8} parent=124 // loop_header_branch
                  %344 = sbr.rel (%p342) target = $region139
                $region136: #{conv_self_attention_forward.8} parent=124 // loop_body
                  %v348 = vld [vmem:[%s346] sm:$0xf]
                  %349 = vst [vmem:[%s347] sm:$0xf] %v348
                  %v350 = vld [vmem:[%s346 + $0x8] sm:$0xf]
                  %351 = vst [vmem:[%s347 + $0x4] sm:$0xf] %v350
                  %v352 = vld [vmem:[%s346 + $0x10] sm:$0xf]
                  %353 = vst [vmem:[%s347 + $0x8] sm:$0xf] %v352
                  %v354 = vld [vmem:[%s346 + $0x18] sm:$0xf]
                  %355 = vst [vmem:[%s347 + $0xc] sm:$0xf] %v354
                  %v356 = vld [vmem:[%s346 + $0x20] sm:$0xf]
                  %357 = vst [vmem:[%s347 + $0x10] sm:$0xf] %v356
                  %v358 = vld [vmem:[%s346 + $0x28] sm:$0xf]
                  %359 = vst [vmem:[%s347 + $0x14] sm:$0xf] %v358
                  %v360 = vld [vmem:[%s346 + $0x30] sm:$0xf]
                  %361 = vst [vmem:[%s347 + $0x18] sm:$0xf] %v360
                  %v362 = vld [vmem:[%s346 + $0x38] sm:$0xf]
                  %363 = vst [vmem:[%s347 + $0x1c] sm:$0xf] %v362
                $region137: #{conv_self_attention_forward.8} parent=124 // loop_footer
                  %s345 = sadd.s32 1, %s341
                $region138: #{conv_self_attention_forward.8} parent=124 // loop_footer_branch
                  %340 = sbr.rel target = $region134
                $region139: #{conv_self_attention_forward.8} parent=124 // loop_exit
                  _
              $region125: #{conv_self_attention_forward.8} parent=109 // pred_fallthru
                _
            $region110: #{conv_self_attention_forward.8} parent=105 // pred_fallthru
              _
            // Predicated region
            $region111: #{conv_self_attention_forward.8} parent=105 // pred_check
              _
            $region112: #{conv_self_attention_forward.8} parent=105 // pred_check_branch
              %303 = sbr.rel (0) target = $region114
            $region113: #{conv_self_attention_forward.8} parent=105 // pred_region
              loop: start=0, step=1, limit=1
              $region115: #{conv_self_attention_forward.8} parent=113 // loop_pre_header
                _
              $region116: #{conv_self_attention_forward.8} parent=113 // loop_header
                %s306 = sphi 0, %s310
                %p307 = scmp.ge.s32.totalorder %s306, 1
                %s311 = sphi %s297, %s297
                %s312 = sphi %s293, %s293
              $region117: #{conv_self_attention_forward.8} parent=113 // loop_header_branch
                %309 = sbr.rel (%p307) target = $region121
              $region118: #{conv_self_attention_forward.8} parent=113 // loop_body
                %v313 = vld [vmem:[%s311] sm:$0xf]
                %314 = vst [vmem:[%s312] sm:$0xf] %v313
                %v315 = vld [vmem:[%s311 + $0x8] sm:$0xf]
                %316 = vst [vmem:[%s312 + $0x4] sm:$0xf] %v315
                %v317 = vld [vmem:[%s311 + $0x10] sm:$0xf]
                %318 = vst [vmem:[%s312 + $0x8] sm:$0xf] %v317
                %v319 = vld [vmem:[%s311 + $0x18] sm:$0xf]
                %320 = vst [vmem:[%s312 + $0xc] sm:$0xf] %v319
                %v321 = vld [vmem:[%s311 + $0x20] sm:$0xf]
                %322 = vst [vmem:[%s312 + $0x10] sm:$0xf] %v321
                %v323 = vld [vmem:[%s311 + $0x28] sm:$0xf]
                %324 = vst [vmem:[%s312 + $0x14] sm:$0xf] %v323
                %v325 = vld [vmem:[%s311 + $0x30] sm:$0xf]
                %326 = vst [vmem:[%s312 + $0x18] sm:$0xf] %v325
                %v327 = vld [vmem:[%s311 + $0x38] sm:$0xf]
                %328 = vst [vmem:[%s312 + $0x1c] sm:$0xf] %v327
              $region119: #{conv_self_attention_forward.8} parent=113 // loop_footer
                %s310 = sadd.s32 1, %s306
              $region120: #{conv_self_attention_forward.8} parent=113 // loop_footer_branch
                %305 = sbr.rel target = $region116
              $region121: #{conv_self_attention_forward.8} parent=113 // loop_exit
                _
            $region114: #{conv_self_attention_forward.8} parent=105 // pred_fallthru
              _
          $region106: #{conv_self_attention_forward.8} parent=101 // pred_fallthru
            _
          %364 = vnop
        $region102: #{conv_self_attention_forward.8} parent=15 // pred_fallthru
          _
      $region16: #{conv_self_attention_forward.8} parent=5 // pred_fallthru
        _
      %p365 = scmp.le.s32.totalorder 1, %s9
      %p366 = scmp.lt.s32.totalorder %s9, 3
      %p367 = pnand %p365, %p366
      %p368 = pneg %p367
      // Predicated region
      $region140: #{conv_self_attention_forward.8} parent=5 // pred_check
        _
      $region141: #{conv_self_attention_forward.8} parent=5 // pred_check_branch
        %370 = sbr.rel (%p367) target = $region143
      $region142: #{conv_self_attention_forward.8} parent=5 // pred_region
        %s371 = ssub.s32 %s9, 1
        %s372 = sand.u32 %s22, 1
        %s373 = sand.u32 %s22, 1
        %s374 = smul.addr %s373, 32
        %s375 = scalar_lea.vmem [#allocation2], %s374
        // Predicated region
        $region144: #{conv_self_attention_forward.8} parent=142 // pred_check
          %p376 = pneg %p35
        $region145: #{conv_self_attention_forward.8} parent=142 // pred_check_branch
          %378 = sbr.rel (%p376) target = $region147
        $region146: #{conv_self_attention_forward.8} parent=142 // pred_region
          _
        $region147: #{conv_self_attention_forward.8} parent=142 // pred_fallthru
          _
        %s379 = sand.u32 %s48, 1
        %s380 = sand.u32 %s48, 1
        %s381 = smul.addr %s380, 32
        %s382 = scalar_lea.vmem [#allocation3], %s381
        // Predicated region
        $region148: #{conv_self_attention_forward.8} parent=142 // pred_check
          %p383 = pneg %p61
        $region149: #{conv_self_attention_forward.8} parent=142 // pred_check_branch
          %385 = sbr.rel (%p383) target = $region151
        $region150: #{conv_self_attention_forward.8} parent=142 // pred_region
          _
        $region151: #{conv_self_attention_forward.8} parent=142 // pred_fallthru
          _
        %s386 = sand.u32 %s74, 1
        %s387 = sand.u32 %s74, 1
        %s388 = smul.addr %s387, 32
        %s389 = scalar_lea.vmem [#allocation4], %s388
        // Predicated region
        $region152: #{conv_self_attention_forward.8} parent=142 // pred_check
          %p390 = pneg %p87
        $region153: #{conv_self_attention_forward.8} parent=142 // pred_check_branch
          %392 = sbr.rel (%p390) target = $region155
        $region154: #{conv_self_attention_forward.8} parent=142 // pred_region
          _
        $region155: #{conv_self_attention_forward.8} parent=142 // pred_fallthru
          _
        %s393 = sand.u32 %s22, 1
        %s394 = sand.u32 %s22, 1
        %s395 = smul.addr %s394, 32
        %s396 = scalar_lea.vmem [#allocation2], %s395
        %p397 = pneg %p35
        %p398 = pneg %p32
        %s399 = sand.u32 %s48, 1
        %s400 = sand.u32 %s48, 1
        %s401 = smul.addr %s400, 32
        %s402 = scalar_lea.vmem [#allocation3], %s401
        %p403 = pneg %p61
        %p404 = pneg %p58
        %s405 = sand.u32 %s74, 1
        %s406 = sand.u32 %s74, 1
        %s407 = smul.addr %s406, 32
        %s408 = scalar_lea.vmem [#allocation4], %s407
        %p409 = pneg %p87
        %p410 = pneg %p84
        %p411 = pneg %p113
        %p412 = pneg %p110
        %p413 = scmp.lt.s32.totalorder %s14, 1
        %s414 = scalar_select %p413, %s14, 1
        %s415 = smul.addr %s414, 16
        %s416 = smul.addr %s415, 4
        %s417 = scalar_lea.vmem %s3, %s416
        %p418 = scmp.lt.s32.totalorder %s14, 1
        %s419 = scalar_select %p418, %s14, 1
        %s420 = smul.addr %s419, 16
        %s421 = smul.addr %s420, 4
        %s422 = scalar_lea.vmem %s3, %s421
        %v424 = vld [vmem:[%s375] sm:$0xf]
        %v425 = vld [vmem:[%s375 + $0x4] sm:$0xf]
        %v426 = vld [vmem:[%s375 + $0x8] sm:$0xf]
        %v427 = vld [vmem:[%s375 + $0xc] sm:$0xf]
        %v428 = vld [vmem:[%s375 + $0x10] sm:$0xf]
        %v429 = vld [vmem:[%s375 + $0x14] sm:$0xf]
        %v430 = vld [vmem:[%s375 + $0x18] sm:$0xf]
        %v431 = vld [vmem:[%s375 + $0x1c] sm:$0xf]
        %v432 = vld [vmem:[%s382] sm:$0xf]
        %v433 = vld [vmem:[%s382 + $0x4] sm:$0xf]
        %v434 = vld [vmem:[%s382 + $0x8] sm:$0xf]
        %v435 = vld [vmem:[%s382 + $0xc] sm:$0xf]
        %v436 = vld [vmem:[%s382 + $0x10] sm:$0xf]
        %v437 = vld [vmem:[%s382 + $0x14] sm:$0xf]
        %v438 = vld [vmem:[%s382 + $0x18] sm:$0xf]
        %v439 = vld [vmem:[%s382 + $0x1c] sm:$0xf]
        %v440 = vld [vmem:[%s389] sm:$0xf]
        %v441 = vld [vmem:[%s389 + $0x4] sm:$0xf]
        %v442 = vld [vmem:[%s389 + $0x8] sm:$0xf]
        %v443 = vld [vmem:[%s389 + $0xc] sm:$0xf]
        %v444 = vld [vmem:[%s389 + $0x10] sm:$0xf]
        %v445 = vld [vmem:[%s389 + $0x14] sm:$0xf]
        %v446 = vld [vmem:[%s389 + $0x18] sm:$0xf]
        %v447 = vld [vmem:[%s389 + $0x1c] sm:$0xf]
        %v450 = vunpack.c.l.s4 1983009808
        %v451 = vunpack.c.0.s8 %v450
        %v452 = vlaneseq
        %v453 = vshrl.u32 %v452, 7
        %v454 = vsub.s32 %v451, %v453
        %v455 = vrot.slane %v424, %v454
        %v456 = vcombine.high %v455, %v455
        %v461 = vunpack.c.l.s4 1983009808
        %v462 = vunpack.c.0.s8 %v461
        %v463 = vlaneseq
        %v464 = vshrl.u32 %v463, 7
        %v465 = vsub.s32 %v462, %v464
        %v466 = vrot.slane %v432, %v465
        %v467 = vcombine.high %v466, %v466
        %470 = vmatprep.subr.bf16.mxu0 %v467
        %471 = vmatpush1.bf16.xpose.msra.mxu0 %v466
        %472 = vmatprep.subr.bf16.mxu0 0
        %473 = vmatpush1.bf16.xpose.msra.mxu0 0
        %474 = vmatprep.subr.bf16.mxu0 0
        %475 = vmatpush1.bf16.xpose.msra.mxu0 0
        %476 = vmatprep.subr.bf16.mxu0 0
        %477 = vmatpush1.bf16.xpose.msra.mxu0 0
        %478 = vmatprep.subr.bf16.mxu0 0
        %479 = vmatpush1.bf16.xpose.msra.mxu0 0
        %480 = vmatprep.subr.bf16.mxu0 0
        %481 = vmatpush1.bf16.xpose.msra.mxu0 0
        %482 = vmatprep.subr.bf16.mxu0 0
        %483 = vmatpush1.bf16.xpose.msra.mxu0 0
        %484 = vmatprep.subr.bf16.mxu0 0
        %485 = vmatpush1.bf16.xpose.msra.mxu0 0
        %486 = vmatprep.subr.bf16.mxu0 0
        %487 = vmatpush1.bf16.xpose.msra.mxu0 0
        %488 = vmatprep.subr.bf16.mxu0 0
        %489 = vmatpush1.bf16.xpose.msra.mxu0 0
        %490 = vmatprep.subr.bf16.mxu0 0
        %491 = vmatpush1.bf16.xpose.msra.mxu0 0
        %492 = vmatprep.subr.bf16.mxu0 0
        %493 = vmatpush1.bf16.xpose.msra.mxu0 0
        %494 = vmatprep.subr.bf16.mxu0 0
        %495 = vmatpush1.bf16.xpose.msra.mxu0 0
        %496 = vmatprep.subr.bf16.mxu0 0
        %497 = vmatpush1.bf16.xpose.msra.mxu0 0
        %498 = vmatprep.subr.bf16.mxu0 0
        %499 = vmatpush1.bf16.xpose.msra.mxu0 0
        %500 = vmatprep.subr.bf16.mxu0 0
        %501 = vmatpush1.bf16.xpose.msra.mxu0 0
        %502 = vmatprep.mubr.bf16.mxu0 %v456
        %503 = vmatmul.mubr.bf16.gmra.mrb[0].mxu0 %v455
        %v504 = vpop.f32.mrb[0].mxu0
        %v505 = vadd.f32 0.0, %v504
        %v506 = vpop.f32.mrb[0].mxu0
        %v507 = vpop.f32.mrb[0].mxu0
        %v508 = vpop.f32.mrb[0].mxu0
        %509 = vdwg.mxu0
        %v512 = vunpack.c.l.s4 1983009808
        %v513 = vunpack.c.0.s8 %v512
        %v514 = vlaneseq
        %v515 = vshrl.u32 %v514, 7
        %v516 = vsub.s32 %v513, %v515
        %v517 = vrot.slane %v425, %v516
        %v518 = vcombine.high %v517, %v517
        %v523 = vunpack.c.l.s4 1983009808
        %v524 = vunpack.c.0.s8 %v523
        %v525 = vlaneseq
        %v526 = vshrl.u32 %v525, 7
        %v527 = vsub.s32 %v524, %v526
        %v528 = vrot.slane %v433, %v527
        %v529 = vcombine.high %v528, %v528
        %532 = vmatprep.subr.bf16.mxu0 %v529
        %533 = vmatpush1.bf16.xpose.msra.mxu0 %v528
        %534 = vmatprep.subr.bf16.mxu0 0
        %535 = vmatpush1.bf16.xpose.msra.mxu0 0
        %536 = vmatprep.subr.bf16.mxu0 0
        %537 = vmatpush1.bf16.xpose.msra.mxu0 0
        %538 = vmatprep.subr.bf16.mxu0 0
        %539 = vmatpush1.bf16.xpose.msra.mxu0 0
        %540 = vmatprep.subr.bf16.mxu0 0
        %541 = vmatpush1.bf16.xpose.msra.mxu0 0
        %542 = vmatprep.subr.bf16.mxu0 0
        %543 = vmatpush1.bf16.xpose.msra.mxu0 0
        %544 = vmatprep.subr.bf16.mxu0 0
        %545 = vmatpush1.bf16.xpose.msra.mxu0 0
        %546 = vmatprep.subr.bf16.mxu0 0
        %547 = vmatpush1.bf16.xpose.msra.mxu0 0
        %548 = vmatprep.subr.bf16.mxu0 0
        %549 = vmatpush1.bf16.xpose.msra.mxu0 0
        %550 = vmatprep.subr.bf16.mxu0 0
        %551 = vmatpush1.bf16.xpose.msra.mxu0 0
        %552 = vmatprep.subr.bf16.mxu0 0
        %553 = vmatpush1.bf16.xpose.msra.mxu0 0
        %554 = vmatprep.subr.bf16.mxu0 0
        %555 = vmatpush1.bf16.xpose.msra.mxu0 0
        %556 = vmatprep.subr.bf16.mxu0 0
        %557 = vmatpush1.bf16.xpose.msra.mxu0 0
        %558 = vmatprep.subr.bf16.mxu0 0
        %559 = vmatpush1.bf16.xpose.msra.mxu0 0
        %560 = vmatprep.subr.bf16.mxu0 0
        %561 = vmatpush1.bf16.xpose.msra.mxu0 0
        %562 = vmatprep.subr.bf16.mxu0 0
        %563 = vmatpush1.bf16.xpose.msra.mxu0 0
        %564 = vmatprep.mubr.bf16.mxu0 %v518
        %565 = vmatmul.mubr.bf16.gmra.mrb[0].mxu0 %v517
        %v566 = vpop.f32.mrb[0].mxu0
        %v567 = vadd.f32 0.0, %v566
        %v568 = vpop.f32.mrb[0].mxu0
        %v569 = vpop.f32.mrb[0].mxu0
        %v570 = vpop.f32.mrb[0].mxu0
        %571 = vdwg.mxu0
        %v574 = vunpack.c.l.s4 1983009808
        %v575 = vunpack.c.0.s8 %v574
        %v576 = vlaneseq
        %v577 = vshrl.u32 %v576, 7
        %v578 = vsub.s32 %v575, %v577
        %v579 = vrot.slane %v426, %v578
        %v580 = vcombine.high %v579, %v579
        %v585 = vunpack.c.l.s4 1983009808
        %v586 = vunpack.c.0.s8 %v585
        %v587 = vlaneseq
        %v588 = vshrl.u32 %v587, 7
        %v589 = vsub.s32 %v586, %v588
        %v590 = vrot.slane %v434, %v589
        %v591 = vcombine.high %v590, %v590
        %594 = vmatprep.subr.bf16.mxu0 %v591
        %595 = vmatpush1.bf16.xpose.msra.mxu0 %v590
        %596 = vmatprep.subr.bf16.mxu0 0
        %597 = vmatpush1.bf16.xpose.msra.mxu0 0
        %598 = vmatprep.subr.bf16.mxu0 0
        %599 = vmatpush1.bf16.xpose.msra.mxu0 0
        %600 = vmatprep.subr.bf16.mxu0 0
        %601 = vmatpush1.bf16.xpose.msra.mxu0 0
        %602 = vmatprep.subr.bf16.mxu0 0
        %603 = vmatpush1.bf16.xpose.msra.mxu0 0
        %604 = vmatprep.subr.bf16.mxu0 0
        %605 = vmatpush1.bf16.xpose.msra.mxu0 0
        %606 = vmatprep.subr.bf16.mxu0 0
        %607 = vmatpush1.bf16.xpose.msra.mxu0 0
        %608 = vmatprep.subr.bf16.mxu0 0
        %609 = vmatpush1.bf16.xpose.msra.mxu0 0
        %610 = vmatprep.subr.bf16.mxu0 0
        %611 = vmatpush1.bf16.xpose.msra.mxu0 0
        %612 = vmatprep.subr.bf16.mxu0 0
        %613 = vmatpush1.bf16.xpose.msra.mxu0 0
        %614 = vmatprep.subr.bf16.mxu0 0
        %615 = vmatpush1.bf16.xpose.msra.mxu0 0
        %616 = vmatprep.subr.bf16.mxu0 0
        %617 = vmatpush1.bf16.xpose.msra.mxu0 0
        %618 = vmatprep.subr.bf16.mxu0 0
        %619 = vmatpush1.bf16.xpose.msra.mxu0 0
        %620 = vmatprep.subr.bf16.mxu0 0
        %621 = vmatpush1.bf16.xpose.msra.mxu0 0
        %622 = vmatprep.subr.bf16.mxu0 0
        %623 = vmatpush1.bf16.xpose.msra.mxu0 0
        %624 = vmatprep.subr.bf16.mxu0 0
        %625 = vmatpush1.bf16.xpose.msra.mxu0 0
        %626 = vmatprep.mubr.bf16.mxu0 %v580
        %627 = vmatmul.mubr.bf16.gmra.mrb[0].mxu0 %v579
        %v628 = vpop.f32.mrb[0].mxu0
        %v629 = vadd.f32 0.0, %v628
        %v630 = vpop.f32.mrb[0].mxu0
        %v631 = vpop.f32.mrb[0].mxu0
        %v632 = vpop.f32.mrb[0].mxu0
        %633 = vdwg.mxu0
        %v636 = vunpack.c.l.s4 1983009808
        %v637 = vunpack.c.0.s8 %v636
        %v638 = vlaneseq
        %v639 = vshrl.u32 %v638, 7
        %v640 = vsub.s32 %v637, %v639
        %v641 = vrot.slane %v427, %v640
        %v642 = vcombine.high %v641, %v641
        %v647 = vunpack.c.l.s4 1983009808
        %v648 = vunpack.c.0.s8 %v647
        %v649 = vlaneseq
        %v650 = vshrl.u32 %v649, 7
        %v651 = vsub.s32 %v648, %v650
        %v652 = vrot.slane %v435, %v651
        %v653 = vcombine.high %v652, %v652
        %656 = vmatprep.subr.bf16.mxu0 %v653
        %657 = vmatpush1.bf16.xpose.msra.mxu0 %v652
        %658 = vmatprep.subr.bf16.mxu0 0
        %659 = vmatpush1.bf16.xpose.msra.mxu0 0
        %660 = vmatprep.subr.bf16.mxu0 0
        %661 = vmatpush1.bf16.xpose.msra.mxu0 0
        %662 = vmatprep.subr.bf16.mxu0 0
        %663 = vmatpush1.bf16.xpose.msra.mxu0 0
        %664 = vmatprep.subr.bf16.mxu0 0
        %665 = vmatpush1.bf16.xpose.msra.mxu0 0
        %666 = vmatprep.subr.bf16.mxu0 0
        %667 = vmatpush1.bf16.xpose.msra.mxu0 0
        %668 = vmatprep.subr.bf16.mxu0 0
        %669 = vmatpush1.bf16.xpose.msra.mxu0 0
        %670 = vmatprep.subr.bf16.mxu0 0
        %671 = vmatpush1.bf16.xpose.msra.mxu0 0
        %672 = vmatprep.subr.bf16.mxu0 0
        %673 = vmatpush1.bf16.xpose.msra.mxu0 0
        %674 = vmatprep.subr.bf16.mxu0 0
        %675 = vmatpush1.bf16.xpose.msra.mxu0 0
        %676 = vmatprep.subr.bf16.mxu0 0
        %677 = vmatpush1.bf16.xpose.msra.mxu0 0
        %678 = vmatprep.subr.bf16.mxu0 0
        %679 = vmatpush1.bf16.xpose.msra.mxu0 0
        %680 = vmatprep.subr.bf16.mxu0 0
        %681 = vmatpush1.bf16.xpose.msra.mxu0 0
        %682 = vmatprep.subr.bf16.mxu0 0
        %683 = vmatpush1.bf16.xpose.msra.mxu0 0
        %684 = vmatprep.subr.bf16.mxu0 0
        %685 = vmatpush1.bf16.xpose.msra.mxu0 0
        %686 = vmatprep.subr.bf16.mxu0 0
        %687 = vmatpush1.bf16.xpose.msra.mxu0 0
        %688 = vmatprep.mubr.bf16.mxu0 %v642
        %689 = vmatmul.mubr.bf16.gmra.mrb[0].mxu0 %v641
        %v690 = vpop.f32.mrb[0].mxu0
        %v691 = vadd.f32 0.0, %v690
        %v692 = vpop.f32.mrb[0].mxu0
        %v693 = vpop.f32.mrb[0].mxu0
        %v694 = vpop.f32.mrb[0].mxu0
        %695 = vdwg.mxu0
        %v698 = vunpack.c.l.s4 1983009808
        %v699 = vunpack.c.0.s8 %v698
        %v700 = vlaneseq
        %v701 = vshrl.u32 %v700, 7
        %v702 = vsub.s32 %v699, %v701
        %v703 = vrot.slane %v428, %v702
        %v704 = vcombine.high %v703, %v703
        %v709 = vunpack.c.l.s4 1983009808
        %v710 = vunpack.c.0.s8 %v709
        %v711 = vlaneseq
        %v712 = vshrl.u32 %v711, 7
        %v713 = vsub.s32 %v710, %v712
        %v714 = vrot.slane %v436, %v713
        %v715 = vcombine.high %v714, %v714
        %718 = vmatprep.subr.bf16.mxu0 %v715
        %719 = vmatpush1.bf16.xpose.msra.mxu0 %v714
        %720 = vmatprep.subr.bf16.mxu0 0
        %721 = vmatpush1.bf16.xpose.msra.mxu0 0
        %722 = vmatprep.subr.bf16.mxu0 0
        %723 = vmatpush1.bf16.xpose.msra.mxu0 0
        %724 = vmatprep.subr.bf16.mxu0 0
        %725 = vmatpush1.bf16.xpose.msra.mxu0 0
        %726 = vmatprep.subr.bf16.mxu0 0
        %727 = vmatpush1.bf16.xpose.msra.mxu0 0
        %728 = vmatprep.subr.bf16.mxu0 0
        %729 = vmatpush1.bf16.xpose.msra.mxu0 0
        %730 = vmatprep.subr.bf16.mxu0 0
        %731 = vmatpush1.bf16.xpose.msra.mxu0 0
        %732 = vmatprep.subr.bf16.mxu0 0
        %733 = vmatpush1.bf16.xpose.msra.mxu0 0
        %734 = vmatprep.subr.bf16.mxu0 0
        %735 = vmatpush1.bf16.xpose.msra.mxu0 0
        %736 = vmatprep.subr.bf16.mxu0 0
        %737 = vmatpush1.bf16.xpose.msra.mxu0 0
        %738 = vmatprep.subr.bf16.mxu0 0
        %739 = vmatpush1.bf16.xpose.msra.mxu0 0
        %740 = vmatprep.subr.bf16.mxu0 0
        %741 = vmatpush1.bf16.xpose.msra.mxu0 0
        %742 = vmatprep.subr.bf16.mxu0 0
        %743 = vmatpush1.bf16.xpose.msra.mxu0 0
        %744 = vmatprep.subr.bf16.mxu0 0
        %745 = vmatpush1.bf16.xpose.msra.mxu0 0
        %746 = vmatprep.subr.bf16.mxu0 0
        %747 = vmatpush1.bf16.xpose.msra.mxu0 0
        %748 = vmatprep.subr.bf16.mxu0 0
        %749 = vmatpush1.bf16.xpose.msra.mxu0 0
        %750 = vmatprep.mubr.bf16.mxu0 %v704
        %751 = vmatmul.mubr.bf16.gmra.mrb[0].mxu0 %v703
        %v752 = vpop.f32.mrb[0].mxu0
        %v753 = vadd.f32 0.0, %v752
        %v754 = vpop.f32.mrb[0].mxu0
        %v755 = vpop.f32.mrb[0].mxu0
        %v756 = vpop.f32.mrb[0].mxu0
        %757 = vdwg.mxu0
        %v760 = vunpack.c.l.s4 1983009808
        %v761 = vunpack.c.0.s8 %v760
        %v762 = vlaneseq
        %v763 = vshrl.u32 %v762, 7
        %v764 = vsub.s32 %v761, %v763
        %v765 = vrot.slane %v429, %v764
        %v766 = vcombine.high %v765, %v765
        %v771 = vunpack.c.l.s4 1983009808
        %v772 = vunpack.c.0.s8 %v771
        %v773 = vlaneseq
        %v774 = vshrl.u32 %v773, 7
        %v775 = vsub.s32 %v772, %v774
        %v776 = vrot.slane %v437, %v775
        %v777 = vcombine.high %v776, %v776
        %780 = vmatprep.subr.bf16.mxu0 %v777
        %781 = vmatpush1.bf16.xpose.msra.mxu0 %v776
        %782 = vmatprep.subr.bf16.mxu0 0
        %783 = vmatpush1.bf16.xpose.msra.mxu0 0
        %784 = vmatprep.subr.bf16.mxu0 0
        %785 = vmatpush1.bf16.xpose.msra.mxu0 0
        %786 = vmatprep.subr.bf16.mxu0 0
        %787 = vmatpush1.bf16.xpose.msra.mxu0 0
        %788 = vmatprep.subr.bf16.mxu0 0
        %789 = vmatpush1.bf16.xpose.msra.mxu0 0
        %790 = vmatprep.subr.bf16.mxu0 0
        %791 = vmatpush1.bf16.xpose.msra.mxu0 0
        %792 = vmatprep.subr.bf16.mxu0 0
        %793 = vmatpush1.bf16.xpose.msra.mxu0 0
        %794 = vmatprep.subr.bf16.mxu0 0
        %795 = vmatpush1.bf16.xpose.msra.mxu0 0
        %796 = vmatprep.subr.bf16.mxu0 0
        %797 = vmatpush1.bf16.xpose.msra.mxu0 0
        %798 = vmatprep.subr.bf16.mxu0 0
        %799 = vmatpush1.bf16.xpose.msra.mxu0 0
        %800 = vmatprep.subr.bf16.mxu0 0
        %801 = vmatpush1.bf16.xpose.msra.mxu0 0
        %802 = vmatprep.subr.bf16.mxu0 0
        %803 = vmatpush1.bf16.xpose.msra.mxu0 0
        %804 = vmatprep.subr.bf16.mxu0 0
        %805 = vmatpush1.bf16.xpose.msra.mxu0 0
        %806 = vmatprep.subr.bf16.mxu0 0
        %807 = vmatpush1.bf16.xpose.msra.mxu0 0
        %808 = vmatprep.subr.bf16.mxu0 0
        %809 = vmatpush1.bf16.xpose.msra.mxu0 0
        %810 = vmatprep.subr.bf16.mxu0 0
        %811 = vmatpush1.bf16.xpose.msra.mxu0 0
        %812 = vmatprep.mubr.bf16.mxu0 %v766
        %813 = vmatmul.mubr.bf16.gmra.mrb[0].mxu0 %v765
        %v814 = vpop.f32.mrb[0].mxu0
        %v815 = vadd.f32 0.0, %v814
        %v816 = vpop.f32.mrb[0].mxu0
        %v817 = vpop.f32.mrb[0].mxu0
        %v818 = vpop.f32.mrb[0].mxu0
        %819 = vdwg.mxu0
        %v822 = vunpack.c.l.s4 1983009808
        %v823 = vunpack.c.0.s8 %v822
        %v824 = vlaneseq
        %v825 = vshrl.u32 %v824, 7
        %v826 = vsub.s32 %v823, %v825
        %v827 = vrot.slane %v430, %v826
        %v828 = vcombine.high %v827, %v827
        %v833 = vunpack.c.l.s4 1983009808
        %v834 = vunpack.c.0.s8 %v833
        %v835 = vlaneseq
        %v836 = vshrl.u32 %v835, 7
        %v837 = vsub.s32 %v834, %v836
        %v838 = vrot.slane %v438, %v837
        %v839 = vcombine.high %v838, %v838
        %842 = vmatprep.subr.bf16.mxu0 %v839
        %843 = vmatpush1.bf16.xpose.msra.mxu0 %v838
        %844 = vmatprep.subr.bf16.mxu0 0
        %845 = vmatpush1.bf16.xpose.msra.mxu0 0
        %846 = vmatprep.subr.bf16.mxu0 0
        %847 = vmatpush1.bf16.xpose.msra.mxu0 0
        %848 = vmatprep.subr.bf16.mxu0 0
        %849 = vmatpush1.bf16.xpose.msra.mxu0 0
        %850 = vmatprep.subr.bf16.mxu0 0
        %851 = vmatpush1.bf16.xpose.msra.mxu0 0
        %852 = vmatprep.subr.bf16.mxu0 0
        %853 = vmatpush1.bf16.xpose.msra.mxu0 0
        %854 = vmatprep.subr.bf16.mxu0 0
        %855 = vmatpush1.bf16.xpose.msra.mxu0 0
        %856 = vmatprep.subr.bf16.mxu0 0
        %857 = vmatpush1.bf16.xpose.msra.mxu0 0
        %858 = vmatprep.subr.bf16.mxu0 0
        %859 = vmatpush1.bf16.xpose.msra.mxu0 0
        %860 = vmatprep.subr.bf16.mxu0 0
        %861 = vmatpush1.bf16.xpose.msra.mxu0 0
        %862 = vmatprep.subr.bf16.mxu0 0
        %863 = vmatpush1.bf16.xpose.msra.mxu0 0
        %864 = vmatprep.subr.bf16.mxu0 0
        %865 = vmatpush1.bf16.xpose.msra.mxu0 0
        %866 = vmatprep.subr.bf16.mxu0 0
        %867 = vmatpush1.bf16.xpose.msra.mxu0 0
        %868 = vmatprep.subr.bf16.mxu0 0
        %869 = vmatpush1.bf16.xpose.msra.mxu0 0
        %870 = vmatprep.subr.bf16.mxu0 0
        %871 = vmatpush1.bf16.xpose.msra.mxu0 0
        %872 = vmatprep.subr.bf16.mxu0 0
        %873 = vmatpush1.bf16.xpose.msra.mxu0 0
        %874 = vmatprep.mubr.bf16.mxu0 %v828
        %875 = vmatmul.mubr.bf16.gmra.mrb[0].mxu0 %v827
        %v876 = vpop.f32.mrb[0].mxu0
        %v877 = vadd.f32 0.0, %v876
        %v878 = vpop.f32.mrb[0].mxu0
        %v879 = vpop.f32.mrb[0].mxu0
        %v880 = vpop.f32.mrb[0].mxu0
        %881 = vdwg.mxu0
        %v884 = vunpack.c.l.s4 1983009808
        %v885 = vunpack.c.0.s8 %v884
        %v886 = vlaneseq
        %v887 = vshrl.u32 %v886, 7
        %v888 = vsub.s32 %v885, %v887
        %v889 = vrot.slane %v431, %v888
        %v890 = vcombine.high %v889, %v889
        %v895 = vunpack.c.l.s4 1983009808
        %v896 = vunpack.c.0.s8 %v895
        %v897 = vlaneseq
        %v898 = vshrl.u32 %v897, 7
        %v899 = vsub.s32 %v896, %v898
        %v900 = vrot.slane %v439, %v899
        %v901 = vcombine.high %v900, %v900
        %904 = vmatprep.subr.bf16.mxu0 %v901
        %905 = vmatpush1.bf16.xpose.msra.mxu0 %v900
        %906 = vmatprep.subr.bf16.mxu0 0
        %907 = vmatpush1.bf16.xpose.msra.mxu0 0
        %908 = vmatprep.subr.bf16.mxu0 0
        %909 = vmatpush1.bf16.xpose.msra.mxu0 0
        %910 = vmatprep.subr.bf16.mxu0 0
        %911 = vmatpush1.bf16.xpose.msra.mxu0 0
        %912 = vmatprep.subr.bf16.mxu0 0
        %913 = vmatpush1.bf16.xpose.msra.mxu0 0
        %914 = vmatprep.subr.bf16.mxu0 0
        %915 = vmatpush1.bf16.xpose.msra.mxu0 0
        %916 = vmatprep.subr.bf16.mxu0 0
        %917 = vmatpush1.bf16.xpose.msra.mxu0 0
        %918 = vmatprep.subr.bf16.mxu0 0
        %919 = vmatpush1.bf16.xpose.msra.mxu0 0
        %920 = vmatprep.subr.bf16.mxu0 0
        %921 = vmatpush1.bf16.xpose.msra.mxu0 0
        %922 = vmatprep.subr.bf16.mxu0 0
        %923 = vmatpush1.bf16.xpose.msra.mxu0 0
        %924 = vmatprep.subr.bf16.mxu0 0
        %925 = vmatpush1.bf16.xpose.msra.mxu0 0
        %926 = vmatprep.subr.bf16.mxu0 0
        %927 = vmatpush1.bf16.xpose.msra.mxu0 0
        %928 = vmatprep.subr.bf16.mxu0 0
        %929 = vmatpush1.bf16.xpose.msra.mxu0 0
        %930 = vmatprep.subr.bf16.mxu0 0
        %931 = vmatpush1.bf16.xpose.msra.mxu0 0
        %932 = vmatprep.subr.bf16.mxu0 0
        %933 = vmatpush1.bf16.xpose.msra.mxu0 0
        %934 = vmatprep.subr.bf16.mxu0 0
        %935 = vmatpush1.bf16.xpose.msra.mxu0 0
        %936 = vmatprep.mubr.bf16.mxu0 %v890
        %937 = vmatmul.mubr.bf16.gmra.mrb[0].mxu0 %v889
        %v938 = vpop.f32.mrb[0].mxu0
        %v939 = vadd.f32 0.0, %v938
        %v940 = vpop.f32.mrb[0].mxu0
        %v941 = vpop.f32.mrb[0].mxu0
        %v942 = vpop.f32.mrb[0].mxu0
        %943 = vdwg.mxu0
        %vm944 = vcmask 27648
        %v945 = vsel %vm944, %v505, -inf
        %946 = vmax.xlane.f32.xlu0 %v945
        %v947 = vpop.xlane.xlu0 %946
        %v948 = vsel %vm944, %v567, -inf
        %949 = vmax.xlane.f32.xlu0 %v948
        %v950 = vpop.xlane.xlu0 %949
        %v951 = vsel %vm944, %v629, -inf
        %952 = vmax.xlane.f32.xlu0 %v951
        %v953 = vpop.xlane.xlu0 %952
        %v954 = vsel %vm944, %v691, -inf
        %955 = vmax.xlane.f32.xlu0 %v954
        %v956 = vpop.xlane.xlu0 %955
        %v957 = vsel %vm944, %v753, -inf
        %958 = vmax.xlane.f32.xlu0 %v957
        %v959 = vpop.xlane.xlu0 %958
        %v960 = vsel %vm944, %v815, -inf
        %961 = vmax.xlane.f32.xlu0 %v960
        %v962 = vpop.xlane.xlu0 %961
        %v963 = vsel %vm944, %v877, -inf
        %964 = vmax.xlane.f32.xlu0 %v963
        %v965 = vpop.xlane.xlu0 %964
        %v966 = vsel %vm944, %v939, -inf
        %967 = vmax.xlane.f32.xlu0 %v966
        %v968 = vpop.xlane.xlu0 %967
        %v969 = vsub.f32 %v505, %v947
        %v970 = vsub.f32 %v567, %v950
        %v971 = vsub.f32 %v629, %v953
        %v972 = vsub.f32 %v691, %v956
        %v973 = vsub.f32 %v753, %v959
        %v974 = vsub.f32 %v815, %v962
        %v975 = vsub.f32 %v877, %v965
        %v976 = vsub.f32 %v939, %v968
        %v977 = vmul.f32 %v969, 1.442695
        %v978 = vpow.pop %v977
        %v979 = vmul.f32 %v970, 1.442695
        %v980 = vpow.pop %v979
        %v981 = vmul.f32 %v971, 1.442695
        %v982 = vpow.pop %v981
        %v983 = vmul.f32 %v972, 1.442695
        %v984 = vpow.pop %v983
        %v985 = vmul.f32 %v973, 1.442695
        %v986 = vpow.pop %v985
        %v987 = vmul.f32 %v974, 1.442695
        %v988 = vpow.pop %v987
        %v989 = vmul.f32 %v975, 1.442695
        %v990 = vpow.pop %v989
        %v991 = vmul.f32 %v976, 1.442695
        %v992 = vpow.pop %v991
        %v993 = vsel %vm944, %v978, 0.0
        %994 = vadd.xlane.f32.xlu0 %v993
        %v995 = vpop.xlane.xlu0 %994
        %v996 = vsel %vm944, %v980, 0.0
        %997 = vadd.xlane.f32.xlu0 %v996
        %v998 = vpop.xlane.xlu0 %997
        %v999 = vsel %vm944, %v982, 0.0
        %1000 = vadd.xlane.f32.xlu0 %v999
        %v1001 = vpop.xlane.xlu0 %1000
        %v1002 = vsel %vm944, %v984, 0.0
        %1003 = vadd.xlane.f32.xlu0 %v1002
        %v1004 = vpop.xlane.xlu0 %1003
        %v1005 = vsel %vm944, %v986, 0.0
        %1006 = vadd.xlane.f32.xlu0 %v1005
        %v1007 = vpop.xlane.xlu0 %1006
        %v1008 = vsel %vm944, %v988, 0.0
        %1009 = vadd.xlane.f32.xlu0 %v1008
        %v1010 = vpop.xlane.xlu0 %1009
        %v1011 = vsel %vm944, %v990, 0.0
        %1012 = vadd.xlane.f32.xlu0 %v1011
        %v1013 = vpop.xlane.xlu0 %1012
        %v1014 = vsel %vm944, %v992, 0.0
        %1015 = vadd.xlane.f32.xlu0 %v1014
        %v1016 = vpop.xlane.xlu0 %1015
        %v1017 = vrcp.pop %v995
        %v1018 = vrcp.pop %v998
        %v1019 = vrcp.pop %v1001
        %v1020 = vrcp.pop %v1004
        %v1021 = vrcp.pop %v1007
        %v1022 = vrcp.pop %v1010
        %v1023 = vrcp.pop %v1013
        %v1024 = vrcp.pop %v1016
        %v1025 = vmul.f32 %v978, %v1017
        %v1026 = vmul.f32 %v980, %v1018
        %v1027 = vmul.f32 %v982, %v1019
        %v1028 = vmul.f32 %v984, %v1020
        %v1029 = vmul.f32 %v986, %v1021
        %v1030 = vmul.f32 %v988, %v1022
        %v1031 = vmul.f32 %v990, %v1023
        %v1032 = vmul.f32 %v992, %v1024
        %v1033 = vpack.c.bf16 %v1025, %v1025
        %v1034 = vpack.c.bf16 %v1026, %v1026
        %v1035 = vpack.c.bf16 %v1027, %v1027
        %v1036 = vpack.c.bf16 %v1028, %v1028
        %v1037 = vpack.c.bf16 %v1029, %v1029
        %v1038 = vpack.c.bf16 %v1030, %v1030
        %v1039 = vpack.c.bf16 %v1031, %v1031
        %v1040 = vpack.c.bf16 %v1032, %v1032
        %v1043 = vunpack.c.l.s4 1983009808
        %v1044 = vunpack.c.0.s8 %v1043
        %v1045 = vlaneseq
        %v1046 = vshrl.u32 %v1045, 7
        %v1047 = vsub.s32 %v1044, %v1046
        %v1048 = vrot.slane %v440, %v1047
        %v1049 = vcombine.high %v1048, %v1048
        %vm1050 = vcmask 31744
        %v1052 = vsel %vm1050, %v1033, 0
        %vm1054 = vcmask 1041408
        %v1056 = vsel %vm1054, %v1048, 0
        %v1059 = vsel %vm1054, %v1049, 0
        %1061 = vmatprep.subr.bf16.mxu0 %v1059
        %1062 = vmatpush1.bf16.msra.mxu0 %v1056
        %1063 = vmatprep.subr.bf16.mxu0 0
        %1064 = vmatpush1.bf16.msra.mxu0 0
        %1065 = vmatprep.subr.bf16.mxu0 0
        %1066 = vmatpush1.bf16.msra.mxu0 0
        %1067 = vmatprep.subr.bf16.mxu0 0
        %1068 = vmatpush1.bf16.msra.mxu0 0
        %1069 = vmatprep.subr.bf16.mxu0 0
        %1070 = vmatpush1.bf16.msra.mxu0 0
        %1071 = vmatprep.subr.bf16.mxu0 0
        %1072 = vmatpush1.bf16.msra.mxu0 0
        %1073 = vmatprep.subr.bf16.mxu0 0
        %1074 = vmatpush1.bf16.msra.mxu0 0
        %1075 = vmatprep.subr.bf16.mxu0 0
        %1076 = vmatpush1.bf16.msra.mxu0 0
        %1077 = vmatprep.subr.bf16.mxu0 0
        %1078 = vmatpush1.bf16.msra.mxu0 0
        %1079 = vmatprep.subr.bf16.mxu0 0
        %1080 = vmatpush1.bf16.msra.mxu0 0
        %1081 = vmatprep.subr.bf16.mxu0 0
        %1082 = vmatpush1.bf16.msra.mxu0 0
        %1083 = vmatprep.subr.bf16.mxu0 0
        %1084 = vmatpush1.bf16.msra.mxu0 0
        %1085 = vmatprep.subr.bf16.mxu0 0
        %1086 = vmatpush1.bf16.msra.mxu0 0
        %1087 = vmatprep.subr.bf16.mxu0 0
        %1088 = vmatpush1.bf16.msra.mxu0 0
        %1089 = vmatprep.subr.bf16.mxu0 0
        %1090 = vmatpush1.bf16.msra.mxu0 0
        %1091 = vmatprep.subr.bf16.mxu0 0
        %1092 = vmatpush1.bf16.msra.mxu0 0
        %1093 = vmatprep.mubr.bf16.mxu0 0
        %1094 = vmatmul.mubr.bf16.gmra.mrb[0].mxu0 %v1052
        %v1095 = vpop.f32.mrb[0].mxu0
        %v1096 = vadd.f32 0.0, %v1095
        %v1097 = vpop.f32.mrb[0].mxu0
        %v1098 = vadd.f32 0.0, %v1097
        %v1099 = vpop.f32.mrb[0].mxu0
        %v1100 = vpop.f32.mrb[0].mxu0
        %1101 = vdwg.mxu0
        %v1104 = vunpack.c.l.s4 1983009808
        %v1105 = vunpack.c.0.s8 %v1104
        %v1106 = vlaneseq
        %v1107 = vshrl.u32 %v1106, 7
        %v1108 = vsub.s32 %v1105, %v1107
        %v1109 = vrot.slane %v441, %v1108
        %v1110 = vcombine.high %v1109, %v1109
        %v1112 = vsel %vm1050, %v1034, 0
        %v1115 = vsel %vm1054, %v1109, 0
        %v1118 = vsel %vm1054, %v1110, 0
        %1120 = vmatprep.subr.bf16.mxu0 %v1118
        %1121 = vmatpush1.bf16.msra.mxu0 %v1115
        %1122 = vmatprep.subr.bf16.mxu0 0
        %1123 = vmatpush1.bf16.msra.mxu0 0
        %1124 = vmatprep.subr.bf16.mxu0 0
        %1125 = vmatpush1.bf16.msra.mxu0 0
        %1126 = vmatprep.subr.bf16.mxu0 0
        %1127 = vmatpush1.bf16.msra.mxu0 0
        %1128 = vmatprep.subr.bf16.mxu0 0
        %1129 = vmatpush1.bf16.msra.mxu0 0
        %1130 = vmatprep.subr.bf16.mxu0 0
        %1131 = vmatpush1.bf16.msra.mxu0 0
        %1132 = vmatprep.subr.bf16.mxu0 0
        %1133 = vmatpush1.bf16.msra.mxu0 0
        %1134 = vmatprep.subr.bf16.mxu0 0
        %1135 = vmatpush1.bf16.msra.mxu0 0
        %1136 = vmatprep.subr.bf16.mxu0 0
        %1137 = vmatpush1.bf16.msra.mxu0 0
        %1138 = vmatprep.subr.bf16.mxu0 0
        %1139 = vmatpush1.bf16.msra.mxu0 0
        %1140 = vmatprep.subr.bf16.mxu0 0
        %1141 = vmatpush1.bf16.msra.mxu0 0
        %1142 = vmatprep.subr.bf16.mxu0 0
        %1143 = vmatpush1.bf16.msra.mxu0 0
        %1144 = vmatprep.subr.bf16.mxu0 0
        %1145 = vmatpush1.bf16.msra.mxu0 0
        %1146 = vmatprep.subr.bf16.mxu0 0
        %1147 = vmatpush1.bf16.msra.mxu0 0
        %1148 = vmatprep.subr.bf16.mxu0 0
        %1149 = vmatpush1.bf16.msra.mxu0 0
        %1150 = vmatprep.subr.bf16.mxu0 0
        %1151 = vmatpush1.bf16.msra.mxu0 0
        %1152 = vmatprep.mubr.bf16.mxu0 0
        %1153 = vmatmul.mubr.bf16.gmra.mrb[0].mxu0 %v1112
        %v1154 = vpop.f32.mrb[0].mxu0
        %v1155 = vadd.f32 0.0, %v1154
        %v1156 = vpop.f32.mrb[0].mxu0
        %v1157 = vadd.f32 0.0, %v1156
        %v1158 = vpop.f32.mrb[0].mxu0
        %v1159 = vpop.f32.mrb[0].mxu0
        %1160 = vdwg.mxu0
        %v1163 = vunpack.c.l.s4 1983009808
        %v1164 = vunpack.c.0.s8 %v1163
        %v1165 = vlaneseq
        %v1166 = vshrl.u32 %v1165, 7
        %v1167 = vsub.s32 %v1164, %v1166
        %v1168 = vrot.slane %v442, %v1167
        %v1169 = vcombine.high %v1168, %v1168
        %v1171 = vsel %vm1050, %v1035, 0
        %v1174 = vsel %vm1054, %v1168, 0
        %v1177 = vsel %vm1054, %v1169, 0
        %1179 = vmatprep.subr.bf16.mxu0 %v1177
        %1180 = vmatpush1.bf16.msra.mxu0 %v1174
        %1181 = vmatprep.subr.bf16.mxu0 0
        %1182 = vmatpush1.bf16.msra.mxu0 0
        %1183 = vmatprep.subr.bf16.mxu0 0
        %1184 = vmatpush1.bf16.msra.mxu0 0
        %1185 = vmatprep.subr.bf16.mxu0 0
        %1186 = vmatpush1.bf16.msra.mxu0 0
        %1187 = vmatprep.subr.bf16.mxu0 0
        %1188 = vmatpush1.bf16.msra.mxu0 0
        %1189 = vmatprep.subr.bf16.mxu0 0
        %1190 = vmatpush1.bf16.msra.mxu0 0
        %1191 = vmatprep.subr.bf16.mxu0 0
        %1192 = vmatpush1.bf16.msra.mxu0 0
        %1193 = vmatprep.subr.bf16.mxu0 0
        %1194 = vmatpush1.bf16.msra.mxu0 0
        %1195 = vmatprep.subr.bf16.mxu0 0
        %1196 = vmatpush1.bf16.msra.mxu0 0
        %1197 = vmatprep.subr.bf16.mxu0 0
        %1198 = vmatpush1.bf16.msra.mxu0 0
        %1199 = vmatprep.subr.bf16.mxu0 0
        %1200 = vmatpush1.bf16.msra.mxu0 0
        %1201 = vmatprep.subr.bf16.mxu0 0
        %1202 = vmatpush1.bf16.msra.mxu0 0
        %1203 = vmatprep.subr.bf16.mxu0 0
        %1204 = vmatpush1.bf16.msra.mxu0 0
        %1205 = vmatprep.subr.bf16.mxu0 0
        %1206 = vmatpush1.bf16.msra.mxu0 0
        %1207 = vmatprep.subr.bf16.mxu0 0
        %1208 = vmatpush1.bf16.msra.mxu0 0
        %1209 = vmatprep.subr.bf16.mxu0 0
        %1210 = vmatpush1.bf16.msra.mxu0 0
        %1211 = vmatprep.mubr.bf16.mxu0 0
        %1212 = vmatmul.mubr.bf16.gmra.mrb[0].mxu0 %v1171
        %v1213 = vpop.f32.mrb[0].mxu0
        %v1214 = vadd.f32 0.0, %v1213
        %v1215 = vpop.f32.mrb[0].mxu0
        %v1216 = vadd.f32 0.0, %v1215
        %v1217 = vpop.f32.mrb[0].mxu0
        %v1218 = vpop.f32.mrb[0].mxu0
        %1219 = vdwg.mxu0
        %v1222 = vunpack.c.l.s4 1983009808
        %v1223 = vunpack.c.0.s8 %v1222
        %v1224 = vlaneseq
        %v1225 = vshrl.u32 %v1224, 7
        %v1226 = vsub.s32 %v1223, %v1225
        %v1227 = vrot.slane %v443, %v1226
        %v1228 = vcombine.high %v1227, %v1227
        %v1230 = vsel %vm1050, %v1036, 0
        %v1233 = vsel %vm1054, %v1227, 0
        %v1236 = vsel %vm1054, %v1228, 0
        %1238 = vmatprep.subr.bf16.mxu0 %v1236
        %1239 = vmatpush1.bf16.msra.mxu0 %v1233
        %1240 = vmatprep.subr.bf16.mxu0 0
        %1241 = vmatpush1.bf16.msra.mxu0 0
        %1242 = vmatprep.subr.bf16.mxu0 0
        %1243 = vmatpush1.bf16.msra.mxu0 0
        %1244 = vmatprep.subr.bf16.mxu0 0
        %1245 = vmatpush1.bf16.msra.mxu0 0
        %1246 = vmatprep.subr.bf16.mxu0 0
        %1247 = vmatpush1.bf16.msra.mxu0 0
        %1248 = vmatprep.subr.bf16.mxu0 0
        %1249 = vmatpush1.bf16.msra.mxu0 0
        %1250 = vmatprep.subr.bf16.mxu0 0
        %1251 = vmatpush1.bf16.msra.mxu0 0
        %1252 = vmatprep.subr.bf16.mxu0 0
        %1253 = vmatpush1.bf16.msra.mxu0 0
        %1254 = vmatprep.subr.bf16.mxu0 0
        %1255 = vmatpush1.bf16.msra.mxu0 0
        %1256 = vmatprep.subr.bf16.mxu0 0
        %1257 = vmatpush1.bf16.msra.mxu0 0
        %1258 = vmatprep.subr.bf16.mxu0 0
        %1259 = vmatpush1.bf16.msra.mxu0 0
        %1260 = vmatprep.subr.bf16.mxu0 0
        %1261 = vmatpush1.bf16.msra.mxu0 0
        %1262 = vmatprep.subr.bf16.mxu0 0
        %1263 = vmatpush1.bf16.msra.mxu0 0
        %1264 = vmatprep.subr.bf16.mxu0 0
        %1265 = vmatpush1.bf16.msra.mxu0 0
        %1266 = vmatprep.subr.bf16.mxu0 0
        %1267 = vmatpush1.bf16.msra.mxu0 0
        %1268 = vmatprep.subr.bf16.mxu0 0
        %1269 = vmatpush1.bf16.msra.mxu0 0
        %1270 = vmatprep.mubr.bf16.mxu0 0
        %1271 = vmatmul.mubr.bf16.gmra.mrb[0].mxu0 %v1230
        %v1272 = vpop.f32.mrb[0].mxu0
        %v1273 = vadd.f32 0.0, %v1272
        %v1274 = vpop.f32.mrb[0].mxu0
        %v1275 = vadd.f32 0.0, %v1274
        %v1276 = vpop.f32.mrb[0].mxu0
        %v1277 = vpop.f32.mrb[0].mxu0
        %1278 = vdwg.mxu0
        %v1281 = vunpack.c.l.s4 1983009808
        %v1282 = vunpack.c.0.s8 %v1281
        %v1283 = vlaneseq
        %v1284 = vshrl.u32 %v1283, 7
        %v1285 = vsub.s32 %v1282, %v1284
        %v1286 = vrot.slane %v444, %v1285
        %v1287 = vcombine.high %v1286, %v1286
        %v1289 = vsel %vm1050, %v1037, 0
        %v1292 = vsel %vm1054, %v1286, 0
        %v1295 = vsel %vm1054, %v1287, 0
        %1297 = vmatprep.subr.bf16.mxu0 %v1295
        %1298 = vmatpush1.bf16.msra.mxu0 %v1292
        %1299 = vmatprep.subr.bf16.mxu0 0
        %1300 = vmatpush1.bf16.msra.mxu0 0
        %1301 = vmatprep.subr.bf16.mxu0 0
        %1302 = vmatpush1.bf16.msra.mxu0 0
        %1303 = vmatprep.subr.bf16.mxu0 0
        %1304 = vmatpush1.bf16.msra.mxu0 0
        %1305 = vmatprep.subr.bf16.mxu0 0
        %1306 = vmatpush1.bf16.msra.mxu0 0
        %1307 = vmatprep.subr.bf16.mxu0 0
        %1308 = vmatpush1.bf16.msra.mxu0 0
        %1309 = vmatprep.subr.bf16.mxu0 0
        %1310 = vmatpush1.bf16.msra.mxu0 0
        %1311 = vmatprep.subr.bf16.mxu0 0
        %1312 = vmatpush1.bf16.msra.mxu0 0
        %1313 = vmatprep.subr.bf16.mxu0 0
        %1314 = vmatpush1.bf16.msra.mxu0 0
        %1315 = vmatprep.subr.bf16.mxu0 0
        %1316 = vmatpush1.bf16.msra.mxu0 0
        %1317 = vmatprep.subr.bf16.mxu0 0
        %1318 = vmatpush1.bf16.msra.mxu0 0
        %1319 = vmatprep.subr.bf16.mxu0 0
        %1320 = vmatpush1.bf16.msra.mxu0 0
        %1321 = vmatprep.subr.bf16.mxu0 0
        %1322 = vmatpush1.bf16.msra.mxu0 0
        %1323 = vmatprep.subr.bf16.mxu0 0
        %1324 = vmatpush1.bf16.msra.mxu0 0
        %1325 = vmatprep.subr.bf16.mxu0 0
        %1326 = vmatpush1.bf16.msra.mxu0 0
        %1327 = vmatprep.subr.bf16.mxu0 0
        %1328 = vmatpush1.bf16.msra.mxu0 0
        %1329 = vmatprep.mubr.bf16.mxu0 0
        %1330 = vmatmul.mubr.bf16.gmra.mrb[0].mxu0 %v1289
        %v1331 = vpop.f32.mrb[0].mxu0
        %v1332 = vadd.f32 0.0, %v1331
        %v1333 = vpop.f32.mrb[0].mxu0
        %v1334 = vadd.f32 0.0, %v1333
        %v1335 = vpop.f32.mrb[0].mxu0
        %v1336 = vpop.f32.mrb[0].mxu0
        %1337 = vdwg.mxu0
        %v1340 = vunpack.c.l.s4 1983009808
        %v1341 = vunpack.c.0.s8 %v1340
        %v1342 = vlaneseq
        %v1343 = vshrl.u32 %v1342, 7
        %v1344 = vsub.s32 %v1341, %v1343
        %v1345 = vrot.slane %v445, %v1344
        %v1346 = vcombine.high %v1345, %v1345
        %v1348 = vsel %vm1050, %v1038, 0
        %v1351 = vsel %vm1054, %v1345, 0
        %v1354 = vsel %vm1054, %v1346, 0
        %1356 = vmatprep.subr.bf16.mxu0 %v1354
        %1357 = vmatpush1.bf16.msra.mxu0 %v1351
        %1358 = vmatprep.subr.bf16.mxu0 0
        %1359 = vmatpush1.bf16.msra.mxu0 0
        %1360 = vmatprep.subr.bf16.mxu0 0
        %1361 = vmatpush1.bf16.msra.mxu0 0
        %1362 = vmatprep.subr.bf16.mxu0 0
        %1363 = vmatpush1.bf16.msra.mxu0 0
        %1364 = vmatprep.subr.bf16.mxu0 0
        %1365 = vmatpush1.bf16.msra.mxu0 0
        %1366 = vmatprep.subr.bf16.mxu0 0
        %1367 = vmatpush1.bf16.msra.mxu0 0
        %1368 = vmatprep.subr.bf16.mxu0 0
        %1369 = vmatpush1.bf16.msra.mxu0 0
        %1370 = vmatprep.subr.bf16.mxu0 0
        %1371 = vmatpush1.bf16.msra.mxu0 0
        %1372 = vmatprep.subr.bf16.mxu0 0
        %1373 = vmatpush1.bf16.msra.mxu0 0
        %1374 = vmatprep.subr.bf16.mxu0 0
        %1375 = vmatpush1.bf16.msra.mxu0 0
        %1376 = vmatprep.subr.bf16.mxu0 0
        %1377 = vmatpush1.bf16.msra.mxu0 0
        %1378 = vmatprep.subr.bf16.mxu0 0
        %1379 = vmatpush1.bf16.msra.mxu0 0
        %1380 = vmatprep.subr.bf16.mxu0 0
        %1381 = vmatpush1.bf16.msra.mxu0 0
        %1382 = vmatprep.subr.bf16.mxu0 0
        %1383 = vmatpush1.bf16.msra.mxu0 0
        %1384 = vmatprep.subr.bf16.mxu0 0
        %1385 = vmatpush1.bf16.msra.mxu0 0
        %1386 = vmatprep.subr.bf16.mxu0 0
        %1387 = vmatpush1.bf16.msra.mxu0 0
        %1388 = vmatprep.mubr.bf16.mxu0 0
        %1389 = vmatmul.mubr.bf16.gmra.mrb[0].mxu0 %v1348
        %v1390 = vpop.f32.mrb[0].mxu0
        %v1391 = vadd.f32 0.0, %v1390
        %v1392 = vpop.f32.mrb[0].mxu0
        %v1393 = vadd.f32 0.0, %v1392
        %v1394 = vpop.f32.mrb[0].mxu0
        %v1395 = vpop.f32.mrb[0].mxu0
        %1396 = vdwg.mxu0
        %v1399 = vunpack.c.l.s4 1983009808
        %v1400 = vunpack.c.0.s8 %v1399
        %v1401 = vlaneseq
        %v1402 = vshrl.u32 %v1401, 7
        %v1403 = vsub.s32 %v1400, %v1402
        %v1404 = vrot.slane %v446, %v1403
        %v1405 = vcombine.high %v1404, %v1404
        %v1407 = vsel %vm1050, %v1039, 0
        %v1410 = vsel %vm1054, %v1404, 0
        %v1413 = vsel %vm1054, %v1405, 0
        %1415 = vmatprep.subr.bf16.mxu0 %v1413
        %1416 = vmatpush1.bf16.msra.mxu0 %v1410
        %1417 = vmatprep.subr.bf16.mxu0 0
        %1418 = vmatpush1.bf16.msra.mxu0 0
        %1419 = vmatprep.subr.bf16.mxu0 0
        %1420 = vmatpush1.bf16.msra.mxu0 0
        %1421 = vmatprep.subr.bf16.mxu0 0
        %1422 = vmatpush1.bf16.msra.mxu0 0
        %1423 = vmatprep.subr.bf16.mxu0 0
        %1424 = vmatpush1.bf16.msra.mxu0 0
        %1425 = vmatprep.subr.bf16.mxu0 0
        %1426 = vmatpush1.bf16.msra.mxu0 0
        %1427 = vmatprep.subr.bf16.mxu0 0
        %1428 = vmatpush1.bf16.msra.mxu0 0
        %1429 = vmatprep.subr.bf16.mxu0 0
        %1430 = vmatpush1.bf16.msra.mxu0 0
        %1431 = vmatprep.subr.bf16.mxu0 0
        %1432 = vmatpush1.bf16.msra.mxu0 0
        %1433 = vmatprep.subr.bf16.mxu0 0
        %1434 = vmatpush1.bf16.msra.mxu0 0
        %1435 = vmatprep.subr.bf16.mxu0 0
        %1436 = vmatpush1.bf16.msra.mxu0 0
        %1437 = vmatprep.subr.bf16.mxu0 0
        %1438 = vmatpush1.bf16.msra.mxu0 0
        %1439 = vmatprep.subr.bf16.mxu0 0
        %1440 = vmatpush1.bf16.msra.mxu0 0
        %1441 = vmatprep.subr.bf16.mxu0 0
        %1442 = vmatpush1.bf16.msra.mxu0 0
        %1443 = vmatprep.subr.bf16.mxu0 0
        %1444 = vmatpush1.bf16.msra.mxu0 0
        %1445 = vmatprep.subr.bf16.mxu0 0
        %1446 = vmatpush1.bf16.msra.mxu0 0
        %1447 = vmatprep.mubr.bf16.mxu0 0
        %1448 = vmatmul.mubr.bf16.gmra.mrb[0].mxu0 %v1407
        %v1449 = vpop.f32.mrb[0].mxu0
        %v1450 = vadd.f32 0.0, %v1449
        %v1451 = vpop.f32.mrb[0].mxu0
        %v1452 = vadd.f32 0.0, %v1451
        %v1453 = vpop.f32.mrb[0].mxu0
        %v1454 = vpop.f32.mrb[0].mxu0
        %1455 = vdwg.mxu0
        %v1458 = vunpack.c.l.s4 1983009808
        %v1459 = vunpack.c.0.s8 %v1458
        %v1460 = vlaneseq
        %v1461 = vshrl.u32 %v1460, 7
        %v1462 = vsub.s32 %v1459, %v1461
        %v1463 = vrot.slane %v447, %v1462
        %v1464 = vcombine.high %v1463, %v1463
        %v1466 = vsel %vm1050, %v1040, 0
        %v1469 = vsel %vm1054, %v1463, 0
        %v1472 = vsel %vm1054, %v1464, 0
        %1474 = vmatprep.subr.bf16.mxu0 %v1472
        %1475 = vmatpush1.bf16.msra.mxu0 %v1469
        %1476 = vmatprep.subr.bf16.mxu0 0
        %1477 = vmatpush1.bf16.msra.mxu0 0
        %1478 = vmatprep.subr.bf16.mxu0 0
        %1479 = vmatpush1.bf16.msra.mxu0 0
        %1480 = vmatprep.subr.bf16.mxu0 0
        %1481 = vmatpush1.bf16.msra.mxu0 0
        %1482 = vmatprep.subr.bf16.mxu0 0
        %1483 = vmatpush1.bf16.msra.mxu0 0
        %1484 = vmatprep.subr.bf16.mxu0 0
        %1485 = vmatpush1.bf16.msra.mxu0 0
        %1486 = vmatprep.subr.bf16.mxu0 0
        %1487 = vmatpush1.bf16.msra.mxu0 0
        %1488 = vmatprep.subr.bf16.mxu0 0
        %1489 = vmatpush1.bf16.msra.mxu0 0
        %1490 = vmatprep.subr.bf16.mxu0 0
        %1491 = vmatpush1.bf16.msra.mxu0 0
        %1492 = vmatprep.subr.bf16.mxu0 0
        %1493 = vmatpush1.bf16.msra.mxu0 0
        %1494 = vmatprep.subr.bf16.mxu0 0
        %1495 = vmatpush1.bf16.msra.mxu0 0
        %1496 = vmatprep.subr.bf16.mxu0 0
        %1497 = vmatpush1.bf16.msra.mxu0 0
        %1498 = vmatprep.subr.bf16.mxu0 0
        %1499 = vmatpush1.bf16.msra.mxu0 0
        %1500 = vmatprep.subr.bf16.mxu0 0
        %1501 = vmatpush1.bf16.msra.mxu0 0
        %1502 = vmatprep.subr.bf16.mxu0 0
        %1503 = vmatpush1.bf16.msra.mxu0 0
        %1504 = vmatprep.subr.bf16.mxu0 0
        %1505 = vmatpush1.bf16.msra.mxu0 0
        %1506 = vmatprep.mubr.bf16.mxu0 0
        %1507 = vmatmul.mubr.bf16.gmra.mrb[0].mxu0 %v1466
        %v1508 = vpop.f32.mrb[0].mxu0
        %v1509 = vadd.f32 0.0, %v1508
        %v1510 = vpop.f32.mrb[0].mxu0
        %v1511 = vadd.f32 0.0, %v1510
        %v1512 = vpop.f32.mrb[0].mxu0
        %v1513 = vpop.f32.mrb[0].mxu0
        %1514 = vdwg.mxu0
        %v1531 = vcombine.low %v1096, %v1098
        %v1532 = vcombine.low %v1155, %v1157
        %v1533 = vcombine.low %v1214, %v1216
        %v1534 = vcombine.low %v1273, %v1275
        %v1535 = vcombine.low %v1332, %v1334
        %v1536 = vcombine.low %v1391, %v1393
        %v1537 = vcombine.low %v1450, %v1452
        %v1538 = vcombine.low %v1509, %v1511
        %1547 = vst [vmem:[%s422] sm:$0xff] %v1531
        %1548 = vst [vmem:[%s422 + $0x8] sm:$0xff] %v1532
        %1549 = vst [vmem:[%s422 + $0x10] sm:$0xff] %v1533
        %1550 = vst [vmem:[%s422 + $0x18] sm:$0xff] %v1534
        %1551 = vst [vmem:[%s422 + $0x20] sm:$0xff] %v1535
        %1552 = vst [vmem:[%s422 + $0x28] sm:$0xff] %v1536
        %1553 = vst [vmem:[%s422 + $0x30] sm:$0xff] %v1537
        %1554 = vst [vmem:[%s422 + $0x38] sm:$0xff] %v1538
        %p1555 = scmp.lt.s32.totalorder %s14, 1
        %s1556 = scalar_select %p1555, %s14, 1
        %s1557 = smul.addr %s1556, 16
        %s1558 = smul.addr %s1557, 4
        %s1559 = scalar_lea.vmem %s3, %s1558
        // Predicated region
        $region156: #{conv_self_attention_forward.8} parent=142 // pred_check
          %p1560 = pneg %p110
        $region157: #{conv_self_attention_forward.8} parent=142 // pred_check_branch
          %1562 = sbr.rel (%p1560) target = $region159
        $region158: #{conv_self_attention_forward.8} parent=142 // pred_region
          _
        $region159: #{conv_self_attention_forward.8} parent=142 // pred_fallthru
          _
      $region143: #{conv_self_attention_forward.8} parent=5 // pred_fallthru
        _
      %p1563 = scmp.le.s32.totalorder 2, %s9
      // Predicated region
      $region160: #{conv_self_attention_forward.8} parent=5 // pred_check
        %p1564 = pneg %p1563
      $region161: #{conv_self_attention_forward.8} parent=5 // pred_check_branch
        %1566 = sbr.rel (%p1564) target = $region163
      $region162: #{conv_self_attention_forward.8} parent=5 // pred_region
        %s1567 = ssub.s32 %s9, 2
        // Predicated region
        $region164: #{conv_self_attention_forward.8} parent=162 // pred_check
          %p1568 = pneg %p116
        $region165: #{conv_self_attention_forward.8} parent=162 // pred_check_branch
          %1570 = sbr.rel (%p1568) target = $region167
        $region166: #{conv_self_attention_forward.8} parent=162 // pred_region
          %p1571 = scmp.lt.s32.totalorder %s15, 1
          %s1572 = scalar_select %p1571, %s15, 1
          %s1573 = smul.addr %s1572, 16
          %s1574 = smul.addr %s1573, 4
          %s1575 = scalar_lea.vmem %s3, %s1574
        $region167: #{conv_self_attention_forward.8} parent=162 // pred_fallthru
          _
      $region163: #{conv_self_attention_forward.8} parent=5 // pred_fallthru
        _
    $region6: #{conv_self_attention_forward.8} parent=1 // loop_footer
      %s13 = sadd.s32 1, %s9
    $region7: #{conv_self_attention_forward.8} parent=1 // loop_footer_branch
      %8 = sbr.rel target = $region3
    $region8: #{conv_self_attention_forward.8} parent=1 // loop_exit
      _

// kernel: conv_self_attention_forward.9
$region0: #{conv_self_attention_forward.9}
  #allocation0 [shape = 'u32[]', space=smem, size = 0x4, offset = 0x4, fixed_abs, tag = 'smem constant byte address 0x4 - core index']
  #allocation1 [shape = 'u32[144,128]{1,0:T(1,128)}', space=vmem, size = 0x12000, scoped, tag = 'internal scratch']
  %s0 = inlined_call_operand.vmem [shape: bf16[108,2048], index: 0, kind: input, shape index: {}]
  %s1 = inlined_call_operand.vmem [shape: bf16[8,108], index: 1, kind: input, shape index: {}]
  %s2 = inlined_call_operand.vmem [shape: f32[8,1], index: 2, kind: input, shape index: {}]
  %s3 = inlined_call_operand.vmem [shape: f32[8,2048], index: 3, kind: output, shape index: {}]
  %s4 = sld [smem:[#allocation0]]
  $region83: #{conv_self_attention_forward.9} parent=0
    _
  %s6 = ssub.s32 1, %s4
  %s7 = scalar_select 0, %s6, %s4
  $region1: #{conv_self_attention_forward.9} parent=0
    #allocation2 [shape = 'u8[114688]{0}', space=vmem, size = 0x1c000, scoped, tag = 'input window, operand 0']
    loop: start=0, step=1, limit=10
    $region2: #{conv_self_attention_forward.9} parent=1 // loop_pre_header
      _
    $region3: #{conv_self_attention_forward.9} parent=1 // loop_header
      %s9 = sphi 0, %s13
      %p10 = scmp.ge.s32.totalorder %s9, 10
      %s19 = sphi 0, %s21
      %s22 = sphi 0, %s19
      %s23 = sphi 0, %s22
      %s39 = sphi 0, %s23
      %s43 = sphi 0, %s43
      %s45 = sphi 0, %s43
      %s46 = sphi 0, %s45
      %s60 = sphi 0, %s46
      %s64 = sphi 0, %s64
      %s66 = sphi 0, %s64
      %s67 = sphi 0, %s66
      %s81 = sphi 0, %s67
      %s87 = sphi 0, %s89
      %s90 = sphi 0, %s87
      %s91 = sphi 0, %s90
      %s107 = sphi 0, %s91
    $region4: #{conv_self_attention_forward.9} parent=1 // loop_header_branch
      %12 = sbr.rel (%p10) target = $region8
    $region5: #{conv_self_attention_forward.9} parent=1 // loop_body
      %s14 = ssub.s32 %s9, 1
      %s15 = ssub.s32 %s9, 2
      %s16 = sadd.s32 %s9, 1
      %s17 = ssub.s32 %s9, %s16
      %p18 = scmp.eq.s32.totalorder %s17, 0
      %s20 = sadd.s32 %s19, 1
      %s21 = scalar_select %p18, %s19, %s20
      %p24 = pneg %p18
      %p25 = scmp.eq.s32.totalorder %s9, 7
      %p26 = por %p24, %p25
      %p27 = scmp.ne.s32.totalorder %s19, %s22
      %p28 = scmp.eq.s32.totalorder %s9, 0
      %p29 = por %p27, %p28
      %p30 = scmp.ne.s32.totalorder %s19, %s22
      %p31 = scmp.eq.s32.totalorder %s14, 7
      %p32 = por %p30, %p31
      %p33 = scmp.ne.s32.totalorder %s22, %s23
      %p34 = scmp.eq.s32.totalorder %s14, 0
      %p35 = por %p33, %p34
      %p36 = scmp.ne.s32.totalorder %s22, %s23
      %p37 = scmp.eq.s32.totalorder %s15, 7
      %p38 = por %p36, %p37
      %p40 = scmp.ne.s32.totalorder %s23, %s39
      %p41 = scmp.eq.s32.totalorder %s15, 0
      %p42 = por %p40, %p41
      %s44 = sadd.s32 %s43, 1
      %p47 = scmp.eq.s32.totalorder %s9, 7
      %p48 = scmp.ne.s32.totalorder %s43, %s45
      %p49 = scmp.eq.s32.totalorder %s9, 0
      %p50 = por %p48, %p49
      %p51 = scmp.ne.s32.totalorder %s43, %s45
      %p52 = scmp.eq.s32.totalorder %s14, 7
      %p53 = por %p51, %p52
      %p54 = scmp.ne.s32.totalorder %s45, %s46
      %p55 = scmp.eq.s32.totalorder %s14, 0
      %p56 = por %p54, %p55
      %p57 = scmp.ne.s32.totalorder %s45, %s46
      %p58 = scmp.eq.s32.totalorder %s15, 7
      %p59 = por %p57, %p58
      %p61 = scmp.ne.s32.totalorder %s46, %s60
      %p62 = scmp.eq.s32.totalorder %s15, 0
      %p63 = por %p61, %p62
      %s65 = sadd.s32 %s64, 1
      %p68 = scmp.eq.s32.totalorder %s9, 7
      %p69 = scmp.ne.s32.totalorder %s64, %s66
      %p70 = scmp.eq.s32.totalorder %s9, 0
      %p71 = por %p69, %p70
      %p72 = scmp.ne.s32.totalorder %s64, %s66
      %p73 = scmp.eq.s32.totalorder %s14, 7
      %p74 = por %p72, %p73
      %p75 = scmp.ne.s32.totalorder %s66, %s67
      %p76 = scmp.eq.s32.totalorder %s14, 0
      %p77 = por %p75, %p76
      %p78 = scmp.ne.s32.totalorder %s66, %s67
      %p79 = scmp.eq.s32.totalorder %s15, 7
      %p80 = por %p78, %p79
      %p82 = scmp.ne.s32.totalorder %s67, %s81
      %p83 = scmp.eq.s32.totalorder %s15, 0
      %p84 = por %p82, %p83
      %s85 = ssub.s32 %s9, %s16
      %p86 = scmp.eq.s32.totalorder %s85, 0
      %s88 = sadd.s32 %s87, 1
      %s89 = scalar_select %p86, %s87, %s88
      %p92 = pneg %p86
      %p93 = scmp.eq.s32.totalorder %s9, 7
      %p94 = por %p92, %p93
      %p95 = scmp.ne.s32.totalorder %s87, %s90
      %p96 = scmp.eq.s32.totalorder %s9, 0
      %p97 = por %p95, %p96
      %p98 = scmp.ne.s32.totalorder %s87, %s90
      %p99 = scmp.eq.s32.totalorder %s14, 7
      %p100 = por %p98, %p99
      %p101 = scmp.ne.s32.totalorder %s90, %s91
      %p102 = scmp.eq.s32.totalorder %s14, 0
      %p103 = por %p101, %p102
      %p104 = scmp.ne.s32.totalorder %s90, %s91
      %p105 = scmp.eq.s32.totalorder %s15, 7
      %p106 = por %p104, %p105
      %p108 = scmp.ne.s32.totalorder %s91, %s107
      %p109 = scmp.eq.s32.totalorder %s15, 0
      %p110 = por %p108, %p109
      %p111 = scmp.le.s32.totalorder 1, %s9
      %p112 = scmp.lt.s32.totalorder %s9, 9
      %p113 = pnand %p111, %p112
      %p114 = pneg %p113
      // Predicated region
      $region9: #{conv_self_attention_forward.9} parent=5 // pred_check
        _
      $region10: #{conv_self_attention_forward.9} parent=5 // pred_check_branch
        %116 = sbr.rel (%p113) target = $region12
      $region11: #{conv_self_attention_forward.9} parent=5 // pred_region
        %s117 = ssub.s32 %s9, 1
        // Predicated region
        $region13: #{conv_self_attention_forward.9} parent=11 // pred_check
          %p118 = pneg %p56
        $region14: #{conv_self_attention_forward.9} parent=11 // pred_check_branch
          %120 = sbr.rel (%p118) target = $region16
        $region15: #{conv_self_attention_forward.9} parent=11 // pred_region
          _
        $region16: #{conv_self_attention_forward.9} parent=11 // pred_fallthru
          _
        // Predicated region
        $region17: #{conv_self_attention_forward.9} parent=11 // pred_check
          %p121 = pneg %p77
        $region18: #{conv_self_attention_forward.9} parent=11 // pred_check_branch
          %123 = sbr.rel (%p121) target = $region20
        $region19: #{conv_self_attention_forward.9} parent=11 // pred_region
          _
        $region20: #{conv_self_attention_forward.9} parent=11 // pred_fallthru
          _
      $region12: #{conv_self_attention_forward.9} parent=5 // pred_fallthru
        _
      %p124 = scmp.lt.s32.totalorder %s9, 8
      // Predicated region
      $region21: #{conv_self_attention_forward.9} parent=5 // pred_check
        %p125 = pneg %p124
      $region22: #{conv_self_attention_forward.9} parent=5 // pred_check_branch
        %127 = sbr.rel (%p125) target = $region24
      $region23: #{conv_self_attention_forward.9} parent=5 // pred_region
        // Predicated region
        $region25: #{conv_self_attention_forward.9} parent=23 // pred_check
          %p128 = pneg %p29
        $region26: #{conv_self_attention_forward.9} parent=23 // pred_check_branch
          %130 = sbr.rel (%p128) target = $region28
        $region27: #{conv_self_attention_forward.9} parent=23 // pred_region
          %s131 = sand.u32 %s19, 1
          %s132 = sand.u32 %s19, 1
          %s133 = smul.addr %s132, 112
          %s134 = scalar_lea.vmem [#allocation2], %s133
          %s135 = smul.u32 2, %s9
          %s136 = smul.addr %s135, 4
          %s137 = scalar_lea.vmem %s0, %s136
          // Predicated region
          $region29: #{conv_self_attention_forward.9} parent=27 // pred_check
            _
          $region30: #{conv_self_attention_forward.9} parent=27 // pred_check_branch
            %139 = sbr.rel (0) target = $region32
          $region31: #{conv_self_attention_forward.9} parent=27 // pred_region
            // Predicated region
            $region33: #{conv_self_attention_forward.9} parent=31 // pred_check
              _
            $region34: #{conv_self_attention_forward.9} parent=31 // pred_check_branch
              %141 = sbr.rel (0) target = $region36
            $region35: #{conv_self_attention_forward.9} parent=31 // pred_region
              // Predicated region
              $region48: #{conv_self_attention_forward.9} parent=35 // pred_check
                _
              $region49: #{conv_self_attention_forward.9} parent=35 // pred_check_branch
                %182 = sbr.rel (0) target = $region51
              $region50: #{conv_self_attention_forward.9} parent=35 // pred_region
                loop: start=0, step=1, limit=1
                $region52: #{conv_self_attention_forward.9} parent=50 // loop_pre_header
                  _
                $region53: #{conv_self_attention_forward.9} parent=50 // loop_header
                  %s184 = sphi 0, %s188
                  %p185 = scmp.ge.s32.totalorder %s184, 1
                  %s189 = sphi %s137, %s137
                  %s190 = sphi %s134, %s134
                $region54: #{conv_self_attention_forward.9} parent=50 // loop_header_branch
                  %187 = sbr.rel (%p185) target = $region58
                $region55: #{conv_self_attention_forward.9} parent=50 // loop_body
                  %v191 = vld [vmem:[%s189] sm:$0xff]
                  %192 = vst [vmem:[%s190] sm:$0xff] %v191
                  %v193 = vld [vmem:[%s189 + $0x40] sm:$0xff]
                  %194 = vst [vmem:[%s190 + $0x8] sm:$0xff] %v193
                  %v195 = vld [vmem:[%s189 + $0x80] sm:$0xff]
                  %196 = vst [vmem:[%s190 + $0x10] sm:$0xff] %v195
                  %v197 = vld [vmem:[%s189 + $0xc0] sm:$0xff]
                  %198 = vst [vmem:[%s190 + $0x18] sm:$0xff] %v197
                  %v199 = vld [vmem:[%s189 + $0x100] sm:$0xff]
                  %200 = vst [vmem:[%s190 + $0x20] sm:$0xff] %v199
                  %v201 = vld [vmem:[%s189 + $0x140] sm:$0xff]
                  %202 = vst [vmem:[%s190 + $0x28] sm:$0xff] %v201
                  %v203 = vld [vmem:[%s189 + $0x180] sm:$0xff]
                  %204 = vst [vmem:[%s190 + $0x30] sm:$0xff] %v203
                  %v205 = vld [vmem:[%s189 + $0x1c0] sm:$0xff]
                  %206 = vst [vmem:[%s190 + $0x38] sm:$0xff] %v205
                  %v207 = vld [vmem:[%s189 + $0x200] sm:$0xff]
                  %208 = vst [vmem:[%s190 + $0x40] sm:$0xff] %v207
                  %v209 = vld [vmem:[%s189 + $0x240] sm:$0xff]
                  %210 = vst [vmem:[%s190 + $0x48] sm:$0xff] %v209
                  %v211 = vld [vmem:[%s189 + $0x280] sm:$0xff]
                  %212 = vst [vmem:[%s190 + $0x50] sm:$0xff] %v211
                  %v213 = vld [vmem:[%s189 + $0x2c0] sm:$0xff]
                  %214 = vst [vmem:[%s190 + $0x58] sm:$0xff] %v213
                  %v215 = vld [vmem:[%s189 + $0x300] sm:$0xff]
                  %216 = vst [vmem:[%s190 + $0x60] sm:$0xff] %v215
                  %v217 = vld [vmem:[%s189 + $0x340] sm:$0xff]
                  %218 = vst [vmem:[%s190 + $0x68] sm:$0xff] %v217
                $region56: #{conv_self_attention_forward.9} parent=50 // loop_footer
                  %s188 = sadd.s32 1, %s184
                $region57: #{conv_self_attention_forward.9} parent=50 // loop_footer_branch
                  %183 = sbr.rel target = $region53
                $region58: #{conv_self_attention_forward.9} parent=50 // loop_exit
                  _
              $region51: #{conv_self_attention_forward.9} parent=35 // pred_fallthru
                _
              // Predicated region
              $region59: #{conv_self_attention_forward.9} parent=35 // pred_check
                _
              $region60: #{conv_self_attention_forward.9} parent=35 // pred_check_branch
                %220 = sbr.rel target = $region62
              $region61: #{conv_self_attention_forward.9} parent=35 // pred_region
                _
              $region62: #{conv_self_attention_forward.9} parent=35 // pred_fallthru
                _
            $region36: #{conv_self_attention_forward.9} parent=31 // pred_fallthru
              _
            // Predicated region
            $region37: #{conv_self_attention_forward.9} parent=31 // pred_check
              _
            $region38: #{conv_self_attention_forward.9} parent=31 // pred_check_branch
              %143 = sbr.rel target = $region40
            $region39: #{conv_self_attention_forward.9} parent=31 // pred_region
              loop: start=0, step=1, limit=1
              $region41: #{conv_self_attention_forward.9} parent=39 // loop_pre_header
                _
              $region42: #{conv_self_attention_forward.9} parent=39 // loop_header
                %s146 = sphi 0, %s150
                %p147 = scmp.ge.s32.totalorder %s146, 1
                %s151 = sphi %s137, %s137
                %s152 = sphi %s134, %s134
              $region43: #{conv_self_attention_forward.9} parent=39 // loop_header_branch
                %149 = sbr.rel (%p147) target = $region47
              $region44: #{conv_self_attention_forward.9} parent=39 // loop_body
                %v153 = vld [vmem:[%s151] sm:$0xff]
                %154 = vst [vmem:[%s152] sm:$0xff] %v153
                %v155 = vld [vmem:[%s151 + $0x40] sm:$0xff]
                %156 = vst [vmem:[%s152 + $0x8] sm:$0xff] %v155
                %v157 = vld [vmem:[%s151 + $0x80] sm:$0xff]
                %158 = vst [vmem:[%s152 + $0x10] sm:$0xff] %v157
                %v159 = vld [vmem:[%s151 + $0xc0] sm:$0xff]
                %160 = vst [vmem:[%s152 + $0x18] sm:$0xff] %v159
                %v161 = vld [vmem:[%s151 + $0x100] sm:$0xff]
                %162 = vst [vmem:[%s152 + $0x20] sm:$0xff] %v161
                %v163 = vld [vmem:[%s151 + $0x140] sm:$0xff]
                %164 = vst [vmem:[%s152 + $0x28] sm:$0xff] %v163
                %v165 = vld [vmem:[%s151 + $0x180] sm:$0xff]
                %166 = vst [vmem:[%s152 + $0x30] sm:$0xff] %v165
                %v167 = vld [vmem:[%s151 + $0x1c0] sm:$0xff]
                %168 = vst [vmem:[%s152 + $0x38] sm:$0xff] %v167
                %v169 = vld [vmem:[%s151 + $0x200] sm:$0xff]
                %170 = vst [vmem:[%s152 + $0x40] sm:$0xff] %v169
                %v171 = vld [vmem:[%s151 + $0x240] sm:$0xff]
                %172 = vst [vmem:[%s152 + $0x48] sm:$0xff] %v171
                %v173 = vld [vmem:[%s151 + $0x280] sm:$0xff]
                %174 = vst [vmem:[%s152 + $0x50] sm:$0xff] %v173
                %v175 = vld [vmem:[%s151 + $0x2c0] sm:$0xff]
                %176 = vst [vmem:[%s152 + $0x58] sm:$0xff] %v175
                %v177 = vld [vmem:[%s151 + $0x300] sm:$0xff]
                %178 = vst [vmem:[%s152 + $0x60] sm:$0xff] %v177
                %v179 = vld [vmem:[%s151 + $0x340] sm:$0xff]
                %180 = vst [vmem:[%s152 + $0x68] sm:$0xff] %v179
              $region45: #{conv_self_attention_forward.9} parent=39 // loop_footer
                %s150 = sadd.s32 1, %s146
              $region46: #{conv_self_attention_forward.9} parent=39 // loop_footer_branch
                %145 = sbr.rel target = $region42
              $region47: #{conv_self_attention_forward.9} parent=39 // loop_exit
                _
            $region40: #{conv_self_attention_forward.9} parent=31 // pred_fallthru
              _
          $region32: #{conv_self_attention_forward.9} parent=27 // pred_fallthru
            _
          %221 = vnop
        $region28: #{conv_self_attention_forward.9} parent=23 // pred_fallthru
          _
      $region24: #{conv_self_attention_forward.9} parent=5 // pred_fallthru
        _
      %p222 = scmp.le.s32.totalorder 1, %s9
      %p223 = scmp.lt.s32.totalorder %s9, 9
      %p224 = pnand %p222, %p223
      %p225 = pneg %p224
      // Predicated region
      $region63: #{conv_self_attention_forward.9} parent=5 // pred_check
        _
      $region64: #{conv_self_attention_forward.9} parent=5 // pred_check_branch
        %227 = sbr.rel (%p224) target = $region66
      $region65: #{conv_self_attention_forward.9} parent=5 // pred_region
        %s228 = ssub.s32 %s9, 1
        %s229 = sand.u32 %s22, 1
        %s230 = sand.u32 %s22, 1
        %s231 = smul.addr %s230, 112
        %s232 = scalar_lea.vmem [#allocation2], %s231
        // Predicated region
        $region67: #{conv_self_attention_forward.9} parent=65 // pred_check
          %p233 = pneg %p35
        $region68: #{conv_self_attention_forward.9} parent=65 // pred_check_branch
          %235 = sbr.rel (%p233) target = $region70
        $region69: #{conv_self_attention_forward.9} parent=65 // pred_region
          _
        $region70: #{conv_self_attention_forward.9} parent=65 // pred_fallthru
          _
        %s236 = sand.u32 %s22, 1
        %s237 = sand.u32 %s22, 1
        %s238 = smul.addr %s237, 112
        %s239 = scalar_lea.vmem [#allocation2], %s238
        %p240 = pneg %p35
        %p241 = pneg %p32
        %p242 = pneg %p56
        %p243 = pneg %p53
        %p244 = pneg %p77
        %p245 = pneg %p74
        %p246 = pneg %p103
        %p247 = pneg %p100
        %s248 = smul.u32 2, %s14
        %p249 = scmp.lt.s32.totalorder %s248, 15
        %s250 = scalar_select %p249, %s248, 15
        %s251 = smul.addr %s250, 8
        %s252 = scalar_lea.vmem %s3, %s251
        %s253 = smul.u32 2, %s14
        %s254 = smul.u32 2, %s14
        %p255 = scmp.lt.s32.totalorder %s254, 15
        %s256 = scalar_select %p255, %s254, 15
        %s257 = smul.addr %s256, 8
        %s258 = scalar_lea.vmem %s3, %s257
        %s259 = smul.u32 2, %s14
        %v261 = vld [vmem:[%s1] sm:$0xf]
        %v262 = vld [vmem:[%s232] sm:$0xff]
        %v263 = vld [vmem:[%s232 + $0x8] sm:$0xff]
        %v264 = vld [vmem:[%s232 + $0x10] sm:$0xff]
        %v265 = vld [vmem:[%s232 + $0x18] sm:$0xff]
        %v266 = vld [vmem:[%s232 + $0x20] sm:$0xff]
        %v267 = vld [vmem:[%s232 + $0x28] sm:$0xff]
        %v268 = vld [vmem:[%s232 + $0x30] sm:$0xff]
        %v269 = vld [vmem:[%s232 + $0x38] sm:$0xff]
        %v270 = vld [vmem:[%s232 + $0x40] sm:$0xff]
        %v271 = vld [vmem:[%s232 + $0x48] sm:$0xff]
        %v272 = vld [vmem:[%s232 + $0x50] sm:$0xff]
        %v273 = vld [vmem:[%s232 + $0x58] sm:$0xff]
        %v274 = vld [vmem:[%s232 + $0x60] sm:$0xff]
        %v275 = vld [vmem:[%s232 + $0x68] sm:$0x33]
        %v276 = vld [vmem:[%s2] sm:$0xff]
        %278 = vset.pattern.permute.xlu0 0
        %279 = vperm.xlu0 %278, %v276
        %v280 = vpop.permute.xlu0 %279
        %v296 = vunpack.c.l.b16 %v262
        %v297 = vunpack.c.h.b16 %v262
        %v298 = vunpack.c.l.b16 %v263
        %v299 = vunpack.c.h.b16 %v263
        %v300 = vunpack.c.l.b16 %v264
        %v301 = vunpack.c.h.b16 %v264
        %v302 = vunpack.c.l.b16 %v265
        %v303 = vunpack.c.h.b16 %v265
        %v304 = vunpack.c.l.b16 %v266
        %v305 = vunpack.c.h.b16 %v266
        %v306 = vunpack.c.l.b16 %v267
        %v307 = vunpack.c.h.b16 %v267
        %v308 = vunpack.c.l.b16 %v268
        %v309 = vunpack.c.h.b16 %v268
        %v310 = vunpack.c.l.b16 %v269
        %v311 = vunpack.c.h.b16 %v269
        %v312 = vunpack.c.l.b16 %v270
        %v313 = vunpack.c.h.b16 %v270
        %v314 = vunpack.c.l.b16 %v271
        %v315 = vunpack.c.h.b16 %v271
        %v316 = vunpack.c.l.b16 %v272
        %v317 = vunpack.c.h.b16 %v272
        %v318 = vunpack.c.l.b16 %v273
        %v319 = vunpack.c.h.b16 %v273
        %v320 = vunpack.c.l.b16 %v274
        %v321 = vunpack.c.h.b16 %v274
        %v322 = vunpack.c.l.b16 %v275
        %v323 = vunpack.c.h.b16 %v275
        %v324 = vpack.c.b16 %v298, %v296
        %v325 = vpack.c.b16 %v299, %v297
        %v326 = vpack.c.b16 %v302, %v300
        %v327 = vpack.c.b16 %v303, %v301
        %v328 = vpack.c.b16 %v306, %v304
        %v329 = vpack.c.b16 %v307, %v305
        %v330 = vpack.c.b16 %v310, %v308
        %v331 = vpack.c.b16 %v311, %v309
        %v332 = vpack.c.b16 %v314, %v312
        %v333 = vpack.c.b16 %v315, %v313
        %v334 = vpack.c.b16 %v318, %v316
        %v335 = vpack.c.b16 %v319, %v317
        %v336 = vpack.c.b16 %v322, %v320
        %v337 = vpack.c.b16 %v323, %v321
        %vm350 = vcmask 883712
        %v352 = vsel %vm350, %v261, 0
        %vm354 = vcmask 1045504
        %v356 = vsel %vm354, %v336, 0
        %v359 = vsel %vm354, %v337, 0
        %361 = vmatprep.subr.bf16.mxu0 %v325
        %362 = vmatpush1.bf16.msra.mxu0 %v324
        %363 = vmatprep.subr.bf16.mxu0 %v327
        %364 = vmatpush1.bf16.msra.mxu0 %v326
        %365 = vmatprep.subr.bf16.mxu0 %v329
        %366 = vmatpush1.bf16.msra.mxu0 %v328
        %367 = vmatprep.subr.bf16.mxu0 %v331
        %368 = vmatpush1.bf16.msra.mxu0 %v330
        %369 = vmatprep.subr.bf16.mxu0 %v333
        %370 = vmatpush1.bf16.msra.mxu0 %v332
        %371 = vmatprep.subr.bf16.mxu0 %v335
        %372 = vmatpush1.bf16.msra.mxu0 %v334
        %373 = vmatprep.subr.bf16.mxu0 %v359
        %374 = vmatpush1.bf16.msra.mxu0 %v356
        %375 = vmatprep.subr.bf16.mxu0 0
        %376 = vmatpush1.bf16.msra.mxu0 0
        %377 = vmatprep.subr.bf16.mxu0 0
        %378 = vmatpush1.bf16.msra.mxu0 0
        %379 = vmatprep.subr.bf16.mxu0 0
        %380 = vmatpush1.bf16.msra.mxu0 0
        %381 = vmatprep.subr.bf16.mxu0 0
        %382 = vmatpush1.bf16.msra.mxu0 0
        %383 = vmatprep.subr.bf16.mxu0 0
        %384 = vmatpush1.bf16.msra.mxu0 0
        %385 = vmatprep.subr.bf16.mxu0 0
        %386 = vmatpush1.bf16.msra.mxu0 0
        %387 = vmatprep.subr.bf16.mxu0 0
        %388 = vmatpush1.bf16.msra.mxu0 0
        %389 = vmatprep.subr.bf16.mxu0 0
        %390 = vmatpush1.bf16.msra.mxu0 0
        %391 = vmatprep.subr.bf16.mxu0 0
        %392 = vmatpush1.bf16.msra.mxu0 0
        %393 = vmatprep.mubr.bf16.mxu0 0
        %394 = vmatmul.mubr.bf16.gmra.mrb[0].mxu0 %v352
        %v395 = vpop.f32.mrb[0].mxu0
        %v396 = vadd.f32 %v280, %v395
        %v397 = vpop.f32.mrb[0].mxu0
        %v398 = vadd.f32 %v280, %v397
        %v399 = vpop.f32.mrb[0].mxu0
        %v400 = vpop.f32.mrb[0].mxu0
        %401 = vdwg.mxu0
        %402 = vst [vmem:[%s258] sm:$0xff] %v396
        %403 = vst [vmem:[%s258 + $0x8] sm:$0xff] %v398
        %s404 = smul.u32 2, %s14
        %p405 = scmp.lt.s32.totalorder %s404, 15
        %s406 = scalar_select %p405, %s404, 15
        %s407 = smul.addr %s406, 8
        %s408 = scalar_lea.vmem %s3, %s407
        // Predicated region
        $region71: #{conv_self_attention_forward.9} parent=65 // pred_check
          %p409 = pneg %p100
        $region72: #{conv_self_attention_forward.9} parent=65 // pred_check_branch
          %411 = sbr.rel (%p409) target = $region74
        $region73: #{conv_self_attention_forward.9} parent=65 // pred_region
          %s412 = smul.u32 2, %s14
        $region74: #{conv_self_attention_forward.9} parent=65 // pred_fallthru
          _
      $region66: #{conv_self_attention_forward.9} parent=5 // pred_fallthru
        _
      %p413 = scmp.le.s32.totalorder 2, %s9
      // Predicated region
      $region75: #{conv_self_attention_forward.9} parent=5 // pred_check
        %p414 = pneg %p413
      $region76: #{conv_self_attention_forward.9} parent=5 // pred_check_branch
        %416 = sbr.rel (%p414) target = $region78
      $region77: #{conv_self_attention_forward.9} parent=5 // pred_region
        %s417 = ssub.s32 %s9, 2
        // Predicated region
        $region79: #{conv_self_attention_forward.9} parent=77 // pred_check
          %p418 = pneg %p106
        $region80: #{conv_self_attention_forward.9} parent=77 // pred_check_branch
          %420 = sbr.rel (%p418) target = $region82
        $region81: #{conv_self_attention_forward.9} parent=77 // pred_region
          %s421 = smul.u32 2, %s15
          %p422 = scmp.lt.s32.totalorder %s421, 15
          %s423 = scalar_select %p422, %s421, 15
          %s424 = smul.addr %s423, 8
          %s425 = scalar_lea.vmem %s3, %s424
        $region82: #{conv_self_attention_forward.9} parent=77 // pred_fallthru
          _
      $region78: #{conv_self_attention_forward.9} parent=5 // pred_fallthru
        _
    $region6: #{conv_self_attention_forward.9} parent=1 // loop_footer
      %s13 = sadd.s32 1, %s9
    $region7: #{conv_self_attention_forward.9} parent=1 // loop_footer_branch
      %8 = sbr.rel target = $region3
    $region8: #{conv_self_attention_forward.9} parent=1 // loop_exit
      _

// kernel: conv_self_attention_forward.10
$region0: #{conv_self_attention_forward.10}
  #allocation0 [shape = 'u32[]', space=smem, size = 0x4, offset = 0x4, fixed_abs, tag = 'smem constant byte address 0x4 - core index']
  #allocation1 [shape = 'u32[144,128]{1,0:T(1,128)}', space=vmem, size = 0x12000, scoped, tag = 'internal scratch']
  %s0 = inlined_call_operand.vmem [shape: f32[8,2048], index: 0, kind: input, shape index: {}]
  %s1 = inlined_call_operand.vmem [shape: f32[1,2048], index: 1, kind: input, shape index: {}]
  %s2 = inlined_call_operand.vmem [shape: f32[1,2048], index: 2, kind: input, shape index: {}]
  %s3 = inlined_call_operand.vmem [shape: f32[8,2048], index: 3, kind: output, shape index: {}]
  %s4 = sld [smem:[#allocation0]]
  $region22: #{conv_self_attention_forward.10} parent=0
    _
  %s6 = ssub.s32 1, %s4
  %s7 = scalar_select 0, %s6, %s4
  // Predicated region
  $region2: #{conv_self_attention_forward.10} parent=0 // pred_check
    _
  $region3: #{conv_self_attention_forward.10} parent=0 // pred_check_branch
    %9 = sbr.rel (0) target = $region5
  $region4: #{conv_self_attention_forward.10} parent=0 // pred_region
    _
  $region5: #{conv_self_attention_forward.10} parent=0 // pred_fallthru
    _
  // Predicated region
  $region6: #{conv_self_attention_forward.10} parent=0 // pred_check
    _
  $region7: #{conv_self_attention_forward.10} parent=0 // pred_check_branch
    %11 = sbr.rel (0) target = $region9
  $region8: #{conv_self_attention_forward.10} parent=0 // pred_region
    _
  $region9: #{conv_self_attention_forward.10} parent=0 // pred_fallthru
    _
  // Predicated region
  $region10: #{conv_self_attention_forward.10} parent=0 // pred_check
    _
  $region11: #{conv_self_attention_forward.10} parent=0 // pred_check_branch
    %13 = sbr.rel (0) target = $region13
  $region12: #{conv_self_attention_forward.10} parent=0 // pred_region
    _
  $region13: #{conv_self_attention_forward.10} parent=0 // pred_fallthru
    _
  %v14 = vld [vmem:[%s0] sm:$0xff]
  %v15 = vld [vmem:[%s0 + $0x8] sm:$0xff]
  %v16 = vld [vmem:[%s0 + $0x10] sm:$0xff]
  %v17 = vld [vmem:[%s0 + $0x18] sm:$0xff]
  %v18 = vld [vmem:[%s0 + $0x20] sm:$0xff]
  %v19 = vld [vmem:[%s0 + $0x28] sm:$0xff]
  %v20 = vld [vmem:[%s0 + $0x30] sm:$0xff]
  %v21 = vld [vmem:[%s0 + $0x38] sm:$0xff]
  %v22 = vld [vmem:[%s0 + $0x40] sm:$0xff]
  %v23 = vld [vmem:[%s0 + $0x48] sm:$0xff]
  %v24 = vld [vmem:[%s0 + $0x50] sm:$0xff]
  %v25 = vld [vmem:[%s0 + $0x58] sm:$0xff]
  %v26 = vld [vmem:[%s0 + $0x60] sm:$0xff]
  %v27 = vld [vmem:[%s0 + $0x68] sm:$0xff]
  %v28 = vld [vmem:[%s0 + $0x70] sm:$0xff]
  %v29 = vld [vmem:[%s0 + $0x78] sm:$0xff]
  %v30 = vadd.f32 %v14, %v15
  %v31 = vadd.f32 %v30, %v16
  %v32 = vadd.f32 %v31, %v17
  %v33 = vadd.f32 %v32, %v18
  %v34 = vadd.f32 %v33, %v19
  %v35 = vadd.f32 %v34, %v20
  %v36 = vadd.f32 %v35, %v21
  %v37 = vadd.f32 %v36, %v22
  %v38 = vadd.f32 %v37, %v23
  %v39 = vadd.f32 %v38, %v24
  %v40 = vadd.f32 %v39, %v25
  %v41 = vadd.f32 %v40, %v26
  %v42 = vadd.f32 %v41, %v27
  %v43 = vadd.f32 %v42, %v28
  %v44 = vadd.f32 %v43, %v29
  %45 = vadd.xlane.f32.xlu0 %v44
  %v46 = vpop.xlane.xlu0 %45
  %v47 = vrcp.pop 2048.0
  %v48 = vmul.f32 %v46, %v47
  %v49 = vsub.f32 %v14, %v48
  %v50 = vsub.f32 %v15, %v48
  %v51 = vsub.f32 %v16, %v48
  %v52 = vsub.f32 %v17, %v48
  %v53 = vsub.f32 %v18, %v48
  %v54 = vsub.f32 %v19, %v48
  %v55 = vsub.f32 %v20, %v48
  %v56 = vsub.f32 %v21, %v48
  %v57 = vsub.f32 %v22, %v48
  %v58 = vsub.f32 %v23, %v48
  %v59 = vsub.f32 %v24, %v48
  %v60 = vsub.f32 %v25, %v48
  %v61 = vsub.f32 %v26, %v48
  %v62 = vsub.f32 %v27, %v48
  %v63 = vsub.f32 %v28, %v48
  %v64 = vsub.f32 %v29, %v48
  %v65 = vmul.f32 %v49, %v49
  %v66 = vmul.f32 %v50, %v50
  %v67 = vmul.f32 %v51, %v51
  %v68 = vmul.f32 %v52, %v52
  %v69 = vmul.f32 %v53, %v53
  %v70 = vmul.f32 %v54, %v54
  %v71 = vmul.f32 %v55, %v55
  %v72 = vmul.f32 %v56, %v56
  %v73 = vmul.f32 %v57, %v57
  %v74 = vmul.f32 %v58, %v58
  %v75 = vmul.f32 %v59, %v59
  %v76 = vmul.f32 %v60, %v60
  %v77 = vmul.f32 %v61, %v61
  %v78 = vmul.f32 %v62, %v62
  %v79 = vmul.f32 %v63, %v63
  %v80 = vmul.f32 %v64, %v64
  %v81 = vadd.f32 %v65, %v66
  %v82 = vadd.f32 %v81, %v67
  %v83 = vadd.f32 %v82, %v68
  %v84 = vadd.f32 %v83, %v69
  %v85 = vadd.f32 %v84, %v70
  %v86 = vadd.f32 %v85, %v71
  %v87 = vadd.f32 %v86, %v72
  %v88 = vadd.f32 %v87, %v73
  %v89 = vadd.f32 %v88, %v74
  %v90 = vadd.f32 %v89, %v75
  %v91 = vadd.f32 %v90, %v76
  %v92 = vadd.f32 %v91, %v77
  %v93 = vadd.f32 %v92, %v78
  %v94 = vadd.f32 %v93, %v79
  %v95 = vadd.f32 %v94, %v80
  %96 = vadd.xlane.f32.xlu0 %v95
  %v97 = vpop.xlane.xlu0 %96
  %v98 = vmul.f32 %v97, %v47
  %v99 = vadd.f32 %v98, 1e-05
  %v100 = vrsqrt.pop %v99
  %v101 = vmul.f32 %v49, %v100
  %v102 = vmul.f32 %v50, %v100
  %v103 = vmul.f32 %v51, %v100
  %v104 = vmul.f32 %v52, %v100
  %v105 = vmul.f32 %v53, %v100
  %v106 = vmul.f32 %v54, %v100
  %v107 = vmul.f32 %v55, %v100
  %v108 = vmul.f32 %v56, %v100
  %v109 = vmul.f32 %v57, %v100
  %v110 = vmul.f32 %v58, %v100
  %v111 = vmul.f32 %v59, %v100
  %v112 = vmul.f32 %v60, %v100
  %v113 = vmul.f32 %v61, %v100
  %v114 = vmul.f32 %v62, %v100
  %v115 = vmul.f32 %v63, %v100
  %v116 = vmul.f32 %v64, %v100
  %v117 = vld [vmem:[%s1] sm:$0xff]
  %v118 = vld [vmem:[%s1 + $0x8] sm:$0xff]
  %v121 = vlaneseq
  %v122 = vshrl.u32 %v121, 7
  %v123 = vsub.s32 0, %v122
  %v124 = vrot.slane %v117, %v123
  %v125 = vlaneseq
  %v126 = vshrl.u32 %v125, 7
  %v127 = vsub.s32 1, %v126
  %v128 = vrot.slane %v117, %v127
  %v129 = vlaneseq
  %v130 = vshrl.u32 %v129, 7
  %v131 = vsub.s32 2, %v130
  %v132 = vrot.slane %v117, %v131
  %v133 = vlaneseq
  %v134 = vshrl.u32 %v133, 7
  %v135 = vsub.s32 3, %v134
  %v136 = vrot.slane %v117, %v135
  %v137 = vlaneseq
  %v138 = vshrl.u32 %v137, 7
  %v139 = vsub.s32 4, %v138
  %v140 = vrot.slane %v117, %v139
  %v141 = vlaneseq
  %v142 = vshrl.u32 %v141, 7
  %v143 = vsub.s32 5, %v142
  %v144 = vrot.slane %v117, %v143
  %v145 = vlaneseq
  %v146 = vshrl.u32 %v145, 7
  %v147 = vsub.s32 6, %v146
  %v148 = vrot.slane %v117, %v147
  %v149 = vlaneseq
  %v150 = vshrl.u32 %v149, 7
  %v151 = vsub.s32 7, %v150
  %v152 = vrot.slane %v117, %v151
  %v153 = vlaneseq
  %v154 = vshrl.u32 %v153, 7
  %v155 = vsub.s32 0, %v154
  %v156 = vrot.slane %v118, %v155
  %v157 = vlaneseq
  %v158 = vshrl.u32 %v157, 7
  %v159 = vsub.s32 1, %v158
  %v160 = vrot.slane %v118, %v159
  %v161 = vlaneseq
  %v162 = vshrl.u32 %v161, 7
  %v163 = vsub.s32 2, %v162
  %v164 = vrot.slane %v118, %v163
  %v165 = vlaneseq
  %v166 = vshrl.u32 %v165, 7
  %v167 = vsub.s32 3, %v166
  %v168 = vrot.slane %v118, %v167
  %v169 = vlaneseq
  %v170 = vshrl.u32 %v169, 7
  %v171 = vsub.s32 4, %v170
  %v172 = vrot.slane %v118, %v171
  %v173 = vlaneseq
  %v174 = vshrl.u32 %v173, 7
  %v175 = vsub.s32 5, %v174
  %v176 = vrot.slane %v118, %v175
  %v177 = vlaneseq
  %v178 = vshrl.u32 %v177, 7
  %v179 = vsub.s32 6, %v178
  %v180 = vrot.slane %v118, %v179
  %v181 = vlaneseq
  %v182 = vshrl.u32 %v181, 7
  %v183 = vsub.s32 7, %v182
  %v184 = vrot.slane %v118, %v183
  %v201 = vmul.f32 %v101, %v124
  %v202 = vmul.f32 %v102, %v128
  %v203 = vmul.f32 %v103, %v132
  %v204 = vmul.f32 %v104, %v136
  %v205 = vmul.f32 %v105, %v140
  %v206 = vmul.f32 %v106, %v144
  %v207 = vmul.f32 %v107, %v148
  %v208 = vmul.f32 %v108, %v152
  %v209 = vmul.f32 %v109, %v156
  %v210 = vmul.f32 %v110, %v160
  %v211 = vmul.f32 %v111, %v164
  %v212 = vmul.f32 %v112, %v168
  %v213 = vmul.f32 %v113, %v172
  %v214 = vmul.f32 %v114, %v176
  %v215 = vmul.f32 %v115, %v180
  %v216 = vmul.f32 %v116, %v184
  %v217 = vld [vmem:[%s2] sm:$0xff]
  %v218 = vld [vmem:[%s2 + $0x8] sm:$0xff]
  %v221 = vlaneseq
  %v222 = vshrl.u32 %v221, 7
  %v223 = vsub.s32 0, %v222
  %v224 = vrot.slane %v217, %v223
  %v225 = vlaneseq
  %v226 = vshrl.u32 %v225, 7
  %v227 = vsub.s32 1, %v226
  %v228 = vrot.slane %v217, %v227
  %v229 = vlaneseq
  %v230 = vshrl.u32 %v229, 7
  %v231 = vsub.s32 2, %v230
  %v232 = vrot.slane %v217, %v231
  %v233 = vlaneseq
  %v234 = vshrl.u32 %v233, 7
  %v235 = vsub.s32 3, %v234
  %v236 = vrot.slane %v217, %v235
  %v237 = vlaneseq
  %v238 = vshrl.u32 %v237, 7
  %v239 = vsub.s32 4, %v238
  %v240 = vrot.slane %v217, %v239
  %v241 = vlaneseq
  %v242 = vshrl.u32 %v241, 7
  %v243 = vsub.s32 5, %v242
  %v244 = vrot.slane %v217, %v243
  %v245 = vlaneseq
  %v246 = vshrl.u32 %v245, 7
  %v247 = vsub.s32 6, %v246
  %v248 = vrot.slane %v217, %v247
  %v249 = vlaneseq
  %v250 = vshrl.u32 %v249, 7
  %v251 = vsub.s32 7, %v250
  %v252 = vrot.slane %v217, %v251
  %v253 = vlaneseq
  %v254 = vshrl.u32 %v253, 7
  %v255 = vsub.s32 0, %v254
  %v256 = vrot.slane %v218, %v255
  %v257 = vlaneseq
  %v258 = vshrl.u32 %v257, 7
  %v259 = vsub.s32 1, %v258
  %v260 = vrot.slane %v218, %v259
  %v261 = vlaneseq
  %v262 = vshrl.u32 %v261, 7
  %v263 = vsub.s32 2, %v262
  %v264 = vrot.slane %v218, %v263
  %v265 = vlaneseq
  %v266 = vshrl.u32 %v265, 7
  %v267 = vsub.s32 3, %v266
  %v268 = vrot.slane %v218, %v267
  %v269 = vlaneseq
  %v270 = vshrl.u32 %v269, 7
  %v271 = vsub.s32 4, %v270
  %v272 = vrot.slane %v218, %v271
  %v273 = vlaneseq
  %v274 = vshrl.u32 %v273, 7
  %v275 = vsub.s32 5, %v274
  %v276 = vrot.slane %v218, %v275
  %v277 = vlaneseq
  %v278 = vshrl.u32 %v277, 7
  %v279 = vsub.s32 6, %v278
  %v280 = vrot.slane %v218, %v279
  %v281 = vlaneseq
  %v282 = vshrl.u32 %v281, 7
  %v283 = vsub.s32 7, %v282
  %v284 = vrot.slane %v218, %v283
  %v301 = vadd.f32 %v201, %v224
  %v302 = vadd.f32 %v202, %v228
  %v303 = vadd.f32 %v203, %v232
  %v304 = vadd.f32 %v204, %v236
  %v305 = vadd.f32 %v205, %v240
  %v306 = vadd.f32 %v206, %v244
  %v307 = vadd.f32 %v207, %v248
  %v308 = vadd.f32 %v208, %v252
  %v309 = vadd.f32 %v209, %v256
  %v310 = vadd.f32 %v210, %v260
  %v311 = vadd.f32 %v211, %v264
  %v312 = vadd.f32 %v212, %v268
  %v313 = vadd.f32 %v213, %v272
  %v314 = vadd.f32 %v214, %v276
  %v315 = vadd.f32 %v215, %v280
  %v316 = vadd.f32 %v216, %v284
  %317 = vst [vmem:[%s3] sm:$0xff] %v301
  %318 = vst [vmem:[%s3 + $0x8] sm:$0xff] %v302
  %319 = vst [vmem:[%s3 + $0x10] sm:$0xff] %v303
  %320 = vst [vmem:[%s3 + $0x18] sm:$0xff] %v304
  %321 = vst [vmem:[%s3 + $0x20] sm:$0xff] %v305
  %322 = vst [vmem:[%s3 + $0x28] sm:$0xff] %v306
  %323 = vst [vmem:[%s3 + $0x30] sm:$0xff] %v307
  %324 = vst [vmem:[%s3 + $0x38] sm:$0xff] %v308
  %325 = vst [vmem:[%s3 + $0x40] sm:$0xff] %v309
  %326 = vst [vmem:[%s3 + $0x48] sm:$0xff] %v310
  %327 = vst [vmem:[%s3 + $0x50] sm:$0xff] %v311
  %328 = vst [vmem:[%s3 + $0x58] sm:$0xff] %v312
  %329 = vst [vmem:[%s3 + $0x60] sm:$0xff] %v313
  %330 = vst [vmem:[%s3 + $0x68] sm:$0xff] %v314
  %331 = vst [vmem:[%s3 + $0x70] sm:$0xff] %v315
  %332 = vst [vmem:[%s3 + $0x78] sm:$0xff] %v316
  // Predicated region
  $region14: #{conv_self_attention_forward.10} parent=0 // pred_check
    _
  $region15: #{conv_self_attention_forward.10} parent=0 // pred_check_branch
    %334 = sbr.rel (0) target = $region17
  $region16: #{conv_self_attention_forward.10} parent=0 // pred_region
    _
  $region17: #{conv_self_attention_forward.10} parent=0 // pred_fallthru
    _
  // Predicated region
  $region18: #{conv_self_attention_forward.10} parent=0 // pred_check
    _
  $region19: #{conv_self_attention_forward.10} parent=0 // pred_check_branch
    %336 = sbr.rel (0) target = $region21
  $region20: #{conv_self_attention_forward.10} parent=0 // pred_region
    _
  $region21: #{conv_self_attention_forward.10} parent=0 // pred_fallthru
    _

// kernel: conv_self_attention_forward.11
$region0: #{conv_self_attention_forward.11}
  #allocation0 [shape = 'u32[]', space=smem, size = 0x4, offset = 0x4, fixed_abs, tag = 'smem constant byte address 0x4 - core index']
  #allocation1 [shape = 'u32[144,128]{1,0:T(1,128)}', space=vmem, size = 0x12000, scoped, tag = 'internal scratch']
  %s0 = inlined_call_operand.vmem [shape: bf16[72,512], index: 0, kind: input, shape index: {}]
  %s1 = inlined_call_operand.vmem [shape: bf16[4,72], index: 1, kind: input, shape index: {}]
  %s2 = inlined_call_operand.vmem [shape: f32[4,1], index: 2, kind: input, shape index: {}]
  %s3 = inlined_call_operand.vmem [shape: f32[4,512], index: 3, kind: output, shape index: {}]
  %s4 = sld [smem:[#allocation0]]
  $region83: #{conv_self_attention_forward.11} parent=0
    _
  %s6 = ssub.s32 1, %s4
  %s7 = scalar_select 0, %s6, %s4
  $region1: #{conv_self_attention_forward.11} parent=0
    #allocation2 [shape = 'u8[73728]{0}', space=vmem, size = 0x12000, scoped, tag = 'input window, operand 0']
    loop: start=0, step=1, limit=4
    $region2: #{conv_self_attention_forward.11} parent=1 // loop_pre_header
      _
    $region3: #{conv_self_attention_forward.11} parent=1 // loop_header
      %s9 = sphi 0, %s13
      %p10 = scmp.ge.s32.totalorder %s9, 4
      %s19 = sphi 0, %s21
      %s22 = sphi 0, %s19
      %s23 = sphi 0, %s22
      %s39 = sphi 0, %s23
      %s43 = sphi 0, %s43
      %s45 = sphi 0, %s43
      %s46 = sphi 0, %s45
      %s60 = sphi 0, %s46
      %s64 = sphi 0, %s64
      %s66 = sphi 0, %s64
      %s67 = sphi 0, %s66
      %s81 = sphi 0, %s67
      %s87 = sphi 0, %s89
      %s90 = sphi 0, %s87
      %s91 = sphi 0, %s90
      %s107 = sphi 0, %s91
    $region4: #{conv_self_attention_forward.11} parent=1 // loop_header_branch
      %12 = sbr.rel (%p10) target = $region8
    $region5: #{conv_self_attention_forward.11} parent=1 // loop_body
      %s14 = ssub.s32 %s9, 1
      %s15 = ssub.s32 %s9, 2
      %s16 = sadd.s32 %s9, 1
      %s17 = ssub.s32 %s9, %s16
      %p18 = scmp.eq.s32.totalorder %s17, 0
      %s20 = sadd.s32 %s19, 1
      %s21 = scalar_select %p18, %s19, %s20
      %p24 = pneg %p18
      %p25 = scmp.eq.s32.totalorder %s9, 1
      %p26 = por %p24, %p25
      %p27 = scmp.ne.s32.totalorder %s19, %s22
      %p28 = scmp.eq.s32.totalorder %s9, 0
      %p29 = por %p27, %p28
      %p30 = scmp.ne.s32.totalorder %s19, %s22
      %p31 = scmp.eq.s32.totalorder %s14, 1
      %p32 = por %p30, %p31
      %p33 = scmp.ne.s32.totalorder %s22, %s23
      %p34 = scmp.eq.s32.totalorder %s14, 0
      %p35 = por %p33, %p34
      %p36 = scmp.ne.s32.totalorder %s22, %s23
      %p37 = scmp.eq.s32.totalorder %s15, 1
      %p38 = por %p36, %p37
      %p40 = scmp.ne.s32.totalorder %s23, %s39
      %p41 = scmp.eq.s32.totalorder %s15, 0
      %p42 = por %p40, %p41
      %s44 = sadd.s32 %s43, 1
      %p47 = scmp.eq.s32.totalorder %s9, 1
      %p48 = scmp.ne.s32.totalorder %s43, %s45
      %p49 = scmp.eq.s32.totalorder %s9, 0
      %p50 = por %p48, %p49
      %p51 = scmp.ne.s32.totalorder %s43, %s45
      %p52 = scmp.eq.s32.totalorder %s14, 1
      %p53 = por %p51, %p52
      %p54 = scmp.ne.s32.totalorder %s45, %s46
      %p55 = scmp.eq.s32.totalorder %s14, 0
      %p56 = por %p54, %p55
      %p57 = scmp.ne.s32.totalorder %s45, %s46
      %p58 = scmp.eq.s32.totalorder %s15, 1
      %p59 = por %p57, %p58
      %p61 = scmp.ne.s32.totalorder %s46, %s60
      %p62 = scmp.eq.s32.totalorder %s15, 0
      %p63 = por %p61, %p62
      %s65 = sadd.s32 %s64, 1
      %p68 = scmp.eq.s32.totalorder %s9, 1
      %p69 = scmp.ne.s32.totalorder %s64, %s66
      %p70 = scmp.eq.s32.totalorder %s9, 0
      %p71 = por %p69, %p70
      %p72 = scmp.ne.s32.totalorder %s64, %s66
      %p73 = scmp.eq.s32.totalorder %s14, 1
      %p74 = por %p72, %p73
      %p75 = scmp.ne.s32.totalorder %s66, %s67
      %p76 = scmp.eq.s32.totalorder %s14, 0
      %p77 = por %p75, %p76
      %p78 = scmp.ne.s32.totalorder %s66, %s67
      %p79 = scmp.eq.s32.totalorder %s15, 1
      %p80 = por %p78, %p79
      %p82 = scmp.ne.s32.totalorder %s67, %s81
      %p83 = scmp.eq.s32.totalorder %s15, 0
      %p84 = por %p82, %p83
      %s85 = ssub.s32 %s9, %s16
      %p86 = scmp.eq.s32.totalorder %s85, 0
      %s88 = sadd.s32 %s87, 1
      %s89 = scalar_select %p86, %s87, %s88
      %p92 = pneg %p86
      %p93 = scmp.eq.s32.totalorder %s9, 1
      %p94 = por %p92, %p93
      %p95 = scmp.ne.s32.totalorder %s87, %s90
      %p96 = scmp.eq.s32.totalorder %s9, 0
      %p97 = por %p95, %p96
      %p98 = scmp.ne.s32.totalorder %s87, %s90
      %p99 = scmp.eq.s32.totalorder %s14, 1
      %p100 = por %p98, %p99
      %p101 = scmp.ne.s32.totalorder %s90, %s91
      %p102 = scmp.eq.s32.totalorder %s14, 0
      %p103 = por %p101, %p102
      %p104 = scmp.ne.s32.totalorder %s90, %s91
      %p105 = scmp.eq.s32.totalorder %s15, 1
      %p106 = por %p104, %p105
      %p108 = scmp.ne.s32.totalorder %s91, %s107
      %p109 = scmp.eq.s32.totalorder %s15, 0
      %p110 = por %p108, %p109
      %p111 = scmp.le.s32.totalorder 1, %s9
      %p112 = scmp.lt.s32.totalorder %s9, 3
      %p113 = pnand %p111, %p112
      %p114 = pneg %p113
      // Predicated region
      $region9: #{conv_self_attention_forward.11} parent=5 // pred_check
        _
      $region10: #{conv_self_attention_forward.11} parent=5 // pred_check_branch
        %116 = sbr.rel (%p113) target = $region12
      $region11: #{conv_self_attention_forward.11} parent=5 // pred_region
        %s117 = ssub.s32 %s9, 1
        // Predicated region
        $region13: #{conv_self_attention_forward.11} parent=11 // pred_check
          %p118 = pneg %p56
        $region14: #{conv_self_attention_forward.11} parent=11 // pred_check_branch
          %120 = sbr.rel (%p118) target = $region16
        $region15: #{conv_self_attention_forward.11} parent=11 // pred_region
          _
        $region16: #{conv_self_attention_forward.11} parent=11 // pred_fallthru
          _
        // Predicated region
        $region17: #{conv_self_attention_forward.11} parent=11 // pred_check
          %p121 = pneg %p77
        $region18: #{conv_self_attention_forward.11} parent=11 // pred_check_branch
          %123 = sbr.rel (%p121) target = $region20
        $region19: #{conv_self_attention_forward.11} parent=11 // pred_region
          _
        $region20: #{conv_self_attention_forward.11} parent=11 // pred_fallthru
          _
      $region12: #{conv_self_attention_forward.11} parent=5 // pred_fallthru
        _
      %p124 = scmp.lt.s32.totalorder %s9, 2
      // Predicated region
      $region21: #{conv_self_attention_forward.11} parent=5 // pred_check
        %p125 = pneg %p124
      $region22: #{conv_self_attention_forward.11} parent=5 // pred_check_branch
        %127 = sbr.rel (%p125) target = $region24
      $region23: #{conv_self_attention_forward.11} parent=5 // pred_region
        // Predicated region
        $region25: #{conv_self_attention_forward.11} parent=23 // pred_check
          %p128 = pneg %p29
        $region26: #{conv_self_attention_forward.11} parent=23 // pred_check_branch
          %130 = sbr.rel (%p128) target = $region28
        $region27: #{conv_self_attention_forward.11} parent=23 // pred_region
          %s131 = sand.u32 %s19, 1
          %s132 = sand.u32 %s19, 1
          %s133 = smul.addr %s132, 72
          %s134 = scalar_lea.vmem [#allocation2], %s133
          %s135 = smul.u32 2, %s9
          %s136 = smul.addr %s135, 4
          %s137 = scalar_lea.vmem %s0, %s136
          // Predicated region
          $region29: #{conv_self_attention_forward.11} parent=27 // pred_check
            _
          $region30: #{conv_self_attention_forward.11} parent=27 // pred_check_branch
            %139 = sbr.rel (0) target = $region32
          $region31: #{conv_self_attention_forward.11} parent=27 // pred_region
            // Predicated region
            $region33: #{conv_self_attention_forward.11} parent=31 // pred_check
              _
            $region34: #{conv_self_attention_forward.11} parent=31 // pred_check_branch
              %141 = sbr.rel (0) target = $region36
            $region35: #{conv_self_attention_forward.11} parent=31 // pred_region
              // Predicated region
              $region48: #{conv_self_attention_forward.11} parent=35 // pred_check
                _
              $region49: #{conv_self_attention_forward.11} parent=35 // pred_check_branch
                %172 = sbr.rel (0) target = $region51
              $region50: #{conv_self_attention_forward.11} parent=35 // pred_region
                loop: start=0, step=1, limit=1
                $region52: #{conv_self_attention_forward.11} parent=50 // loop_pre_header
                  _
                $region53: #{conv_self_attention_forward.11} parent=50 // loop_header
                  %s174 = sphi 0, %s178
                  %p175 = scmp.ge.s32.totalorder %s174, 1
                  %s179 = sphi %s137, %s137
                  %s180 = sphi %s134, %s134
                $region54: #{conv_self_attention_forward.11} parent=50 // loop_header_branch
                  %177 = sbr.rel (%p175) target = $region58
                $region55: #{conv_self_attention_forward.11} parent=50 // loop_body
                  %v181 = vld [vmem:[%s179] sm:$0xff]
                  %182 = vst [vmem:[%s180] sm:$0xff] %v181
                  %v183 = vld [vmem:[%s179 + $0x10] sm:$0xff]
                  %184 = vst [vmem:[%s180 + $0x8] sm:$0xff] %v183
                  %v185 = vld [vmem:[%s179 + $0x20] sm:$0xff]
                  %186 = vst [vmem:[%s180 + $0x10] sm:$0xff] %v185
                  %v187 = vld [vmem:[%s179 + $0x30] sm:$0xff]
                  %188 = vst [vmem:[%s180 + $0x18] sm:$0xff] %v187
                  %v189 = vld [vmem:[%s179 + $0x40] sm:$0xff]
                  %190 = vst [vmem:[%s180 + $0x20] sm:$0xff] %v189
                  %v191 = vld [vmem:[%s179 + $0x50] sm:$0xff]
                  %192 = vst [vmem:[%s180 + $0x28] sm:$0xff] %v191
                  %v193 = vld [vmem:[%s179 + $0x60] sm:$0xff]
                  %194 = vst [vmem:[%s180 + $0x30] sm:$0xff] %v193
                  %v195 = vld [vmem:[%s179 + $0x70] sm:$0xff]
                  %196 = vst [vmem:[%s180 + $0x38] sm:$0xff] %v195
                  %v197 = vld [vmem:[%s179 + $0x80] sm:$0xff]
                  %198 = vst [vmem:[%s180 + $0x40] sm:$0xff] %v197
                $region56: #{conv_self_attention_forward.11} parent=50 // loop_footer
                  %s178 = sadd.s32 1, %s174
                $region57: #{conv_self_attention_forward.11} parent=50 // loop_footer_branch
                  %173 = sbr.rel target = $region53
                $region58: #{conv_self_attention_forward.11} parent=50 // loop_exit
                  _
              $region51: #{conv_self_attention_forward.11} parent=35 // pred_fallthru
                _
              // Predicated region
              $region59: #{conv_self_attention_forward.11} parent=35 // pred_check
                _
              $region60: #{conv_self_attention_forward.11} parent=35 // pred_check_branch
                %200 = sbr.rel target = $region62
              $region61: #{conv_self_attention_forward.11} parent=35 // pred_region
                _
              $region62: #{conv_self_attention_forward.11} parent=35 // pred_fallthru
                _
            $region36: #{conv_self_attention_forward.11} parent=31 // pred_fallthru
              _
            // Predicated region
            $region37: #{conv_self_attention_forward.11} parent=31 // pred_check
              _
            $region38: #{conv_self_attention_forward.11} parent=31 // pred_check_branch
              %143 = sbr.rel target = $region40
            $region39: #{conv_self_attention_forward.11} parent=31 // pred_region
              loop: start=0, step=1, limit=1
              $region41: #{conv_self_attention_forward.11} parent=39 // loop_pre_header
                _
              $region42: #{conv_self_attention_forward.11} parent=39 // loop_header
                %s146 = sphi 0, %s150
                %p147 = scmp.ge.s32.totalorder %s146, 1
                %s151 = sphi %s137, %s137
                %s152 = sphi %s134, %s134
              $region43: #{conv_self_attention_forward.11} parent=39 // loop_header_branch
                %149 = sbr.rel (%p147) target = $region47
              $region44: #{conv_self_attention_forward.11} parent=39 // loop_body
                %v153 = vld [vmem:[%s151] sm:$0xff]
                %154 = vst [vmem:[%s152] sm:$0xff] %v153
                %v155 = vld [vmem:[%s151 + $0x10] sm:$0xff]
                %156 = vst [vmem:[%s152 + $0x8] sm:$0xff] %v155
                %v157 = vld [vmem:[%s151 + $0x20] sm:$0xff]
                %158 = vst [vmem:[%s152 + $0x10] sm:$0xff] %v157
                %v159 = vld [vmem:[%s151 + $0x30] sm:$0xff]
                %160 = vst [vmem:[%s152 + $0x18] sm:$0xff] %v159
                %v161 = vld [vmem:[%s151 + $0x40] sm:$0xff]
                %162 = vst [vmem:[%s152 + $0x20] sm:$0xff] %v161
                %v163 = vld [vmem:[%s151 + $0x50] sm:$0xff]
                %164 = vst [vmem:[%s152 + $0x28] sm:$0xff] %v163
                %v165 = vld [vmem:[%s151 + $0x60] sm:$0xff]
                %166 = vst [vmem:[%s152 + $0x30] sm:$0xff] %v165
                %v167 = vld [vmem:[%s151 + $0x70] sm:$0xff]
                %168 = vst [vmem:[%s152 + $0x38] sm:$0xff] %v167
                %v169 = vld [vmem:[%s151 + $0x80] sm:$0xff]
                %170 = vst [vmem:[%s152 + $0x40] sm:$0xff] %v169
              $region45: #{conv_self_attention_forward.11} parent=39 // loop_footer
                %s150 = sadd.s32 1, %s146
              $region46: #{conv_self_attention_forward.11} parent=39 // loop_footer_branch
                %145 = sbr.rel target = $region42
              $region47: #{conv_self_attention_forward.11} parent=39 // loop_exit
                _
            $region40: #{conv_self_attention_forward.11} parent=31 // pred_fallthru
              _
          $region32: #{conv_self_attention_forward.11} parent=27 // pred_fallthru
            _
          %201 = vnop
        $region28: #{conv_self_attention_forward.11} parent=23 // pred_fallthru
          _
      $region24: #{conv_self_attention_forward.11} parent=5 // pred_fallthru
        _
      %p202 = scmp.le.s32.totalorder 1, %s9
      %p203 = scmp.lt.s32.totalorder %s9, 3
      %p204 = pnand %p202, %p203
      %p205 = pneg %p204
      // Predicated region
      $region63: #{conv_self_attention_forward.11} parent=5 // pred_check
        _
      $region64: #{conv_self_attention_forward.11} parent=5 // pred_check_branch
        %207 = sbr.rel (%p204) target = $region66
      $region65: #{conv_self_attention_forward.11} parent=5 // pred_region
        %s208 = ssub.s32 %s9, 1
        %s209 = sand.u32 %s22, 1
        %s210 = sand.u32 %s22, 1
        %s211 = smul.addr %s210, 72
        %s212 = scalar_lea.vmem [#allocation2], %s211
        // Predicated region
        $region67: #{conv_self_attention_forward.11} parent=65 // pred_check
          %p213 = pneg %p35
        $region68: #{conv_self_attention_forward.11} parent=65 // pred_check_branch
          %215 = sbr.rel (%p213) target = $region70
        $region69: #{conv_self_attention_forward.11} parent=65 // pred_region
          _
        $region70: #{conv_self_attention_forward.11} parent=65 // pred_fallthru
          _
        %s216 = sand.u32 %s22, 1
        %s217 = sand.u32 %s22, 1
        %s218 = smul.addr %s217, 72
        %s219 = scalar_lea.vmem [#allocation2], %s218
        %p220 = pneg %p35
        %p221 = pneg %p32
        %p222 = pneg %p56
        %p223 = pneg %p53
        %p224 = pneg %p77
        %p225 = pneg %p74
        %p226 = pneg %p103
        %p227 = pneg %p100
        %s228 = smul.u32 2, %s14
        %p229 = scmp.lt.s32.totalorder %s228, 3
        %s230 = scalar_select %p229, %s228, 3
        %s231 = smul.addr %s230, 4
        %s232 = scalar_lea.vmem %s3, %s231
        %s233 = smul.u32 2, %s14
        %s234 = smul.u32 2, %s14
        %p235 = scmp.lt.s32.totalorder %s234, 3
        %s236 = scalar_select %p235, %s234, 3
        %s237 = smul.addr %s236, 4
        %s238 = scalar_lea.vmem %s3, %s237
        %s239 = smul.u32 2, %s14
        %v241 = vld [vmem:[%s1] sm:$0x3]
        %v242 = vld [vmem:[%s212] sm:$0xff]
        %v243 = vld [vmem:[%s212 + $0x8] sm:$0xff]
        %v244 = vld [vmem:[%s212 + $0x10] sm:$0xff]
        %v245 = vld [vmem:[%s212 + $0x18] sm:$0xff]
        %v246 = vld [vmem:[%s212 + $0x20] sm:$0xff]
        %v247 = vld [vmem:[%s212 + $0x28] sm:$0xff]
        %v248 = vld [vmem:[%s212 + $0x30] sm:$0xff]
        %v249 = vld [vmem:[%s212 + $0x38] sm:$0xff]
        %v250 = vld [vmem:[%s212 + $0x40] sm:$0xff]
        %v251 = vld [vmem:[%s2] sm:$0xf]
        %253 = vset.pattern.permute.xlu0 0
        %254 = vperm.xlu0 %253, %v251
        %v255 = vpop.permute.xlu0 %254
        %v266 = vunpack.c.l.b16 %v242
        %v267 = vunpack.c.h.b16 %v242
        %v268 = vunpack.c.l.b16 %v243
        %v269 = vunpack.c.h.b16 %v243
        %v270 = vunpack.c.l.b16 %v244
        %v271 = vunpack.c.h.b16 %v244
        %v272 = vunpack.c.l.b16 %v245
        %v273 = vunpack.c.h.b16 %v245
        %v274 = vunpack.c.l.b16 %v246
        %v275 = vunpack.c.h.b16 %v246
        %v276 = vunpack.c.l.b16 %v247
        %v277 = vunpack.c.h.b16 %v247
        %v278 = vunpack.c.l.b16 %v248
        %v279 = vunpack.c.h.b16 %v248
        %v280 = vunpack.c.l.b16 %v249
        %v281 = vunpack.c.h.b16 %v249
        %v282 = vunpack.c.l.b16 %v250
        %v283 = vunpack.c.h.b16 %v250
        %v284 = vpack.c.b16 %v268, %v266
        %v285 = vpack.c.b16 %v269, %v267
        %v286 = vpack.c.b16 %v272, %v270
        %v287 = vpack.c.b16 %v273, %v271
        %v288 = vpack.c.b16 %v276, %v274
        %v289 = vpack.c.b16 %v277, %v275
        %v290 = vpack.c.b16 %v280, %v278
        %v291 = vpack.c.b16 %v281, %v279
        %v292 = vpack.c.b16 %v282, %v282
        %v293 = vpack.c.b16 %v283, %v283
        %vm302 = vcmask 588800
        %v304 = vsel %vm302, %v241, 0
        %vm306 = vcmask 1043456
        %v308 = vsel %vm306, %v292, 0
        %v311 = vsel %vm306, %v293, 0
        %313 = vmatprep.subr.bf16.mxu0 %v285
        %314 = vmatpush1.bf16.msra.mxu0 %v284
        %315 = vmatprep.subr.bf16.mxu0 %v287
        %316 = vmatpush1.bf16.msra.mxu0 %v286
        %317 = vmatprep.subr.bf16.mxu0 %v289
        %318 = vmatpush1.bf16.msra.mxu0 %v288
        %319 = vmatprep.subr.bf16.mxu0 %v291
        %320 = vmatpush1.bf16.msra.mxu0 %v290
        %321 = vmatprep.subr.bf16.mxu0 %v311
        %322 = vmatpush1.bf16.msra.mxu0 %v308
        %323 = vmatprep.subr.bf16.mxu0 0
        %324 = vmatpush1.bf16.msra.mxu0 0
        %325 = vmatprep.subr.bf16.mxu0 0
        %326 = vmatpush1.bf16.msra.mxu0 0
        %327 = vmatprep.subr.bf16.mxu0 0
        %328 = vmatpush1.bf16.msra.mxu0 0
        %329 = vmatprep.subr.bf16.mxu0 0
        %330 = vmatpush1.bf16.msra.mxu0 0
        %331 = vmatprep.subr.bf16.mxu0 0
        %332 = vmatpush1.bf16.msra.mxu0 0
        %333 = vmatprep.subr.bf16.mxu0 0
        %334 = vmatpush1.bf16.msra.mxu0 0
        %335 = vmatprep.subr.bf16.mxu0 0
        %336 = vmatpush1.bf16.msra.mxu0 0
        %337 = vmatprep.subr.bf16.mxu0 0
        %338 = vmatpush1.bf16.msra.mxu0 0
        %339 = vmatprep.subr.bf16.mxu0 0
        %340 = vmatpush1.bf16.msra.mxu0 0
        %341 = vmatprep.subr.bf16.mxu0 0
        %342 = vmatpush1.bf16.msra.mxu0 0
        %343 = vmatprep.subr.bf16.mxu0 0
        %344 = vmatpush1.bf16.msra.mxu0 0
        %345 = vmatprep.mubr.bf16.mxu0 0
        %346 = vmatmul.mubr.bf16.gmra.mrb[0].mxu0 %v304
        %v347 = vpop.f32.mrb[0].mxu0
        %v348 = vadd.f32 %v255, %v347
        %v349 = vpop.f32.mrb[0].mxu0
        %v350 = vadd.f32 %v255, %v349
        %v351 = vpop.f32.mrb[0].mxu0
        %v352 = vpop.f32.mrb[0].mxu0
        %353 = vdwg.mxu0
        %v356 = vcombine.low %v348, %v350
        %358 = vst [vmem:[%s238] sm:$0xff] %v356
        %s359 = smul.u32 2, %s14
        %p360 = scmp.lt.s32.totalorder %s359, 3
        %s361 = scalar_select %p360, %s359, 3
        %s362 = smul.addr %s361, 4
        %s363 = scalar_lea.vmem %s3, %s362
        // Predicated region
        $region71: #{conv_self_attention_forward.11} parent=65 // pred_check
          %p364 = pneg %p100
        $region72: #{conv_self_attention_forward.11} parent=65 // pred_check_branch
          %366 = sbr.rel (%p364) target = $region74
        $region73: #{conv_self_attention_forward.11} parent=65 // pred_region
          %s367 = smul.u32 2, %s14
        $region74: #{conv_self_attention_forward.11} parent=65 // pred_fallthru
          _
      $region66: #{conv_self_attention_forward.11} parent=5 // pred_fallthru
        _
      %p368 = scmp.le.s32.totalorder 2, %s9
      // Predicated region
      $region75: #{conv_self_attention_forward.11} parent=5 // pred_check
        %p369 = pneg %p368
      $region76: #{conv_self_attention_forward.11} parent=5 // pred_check_branch
        %371 = sbr.rel (%p369) target = $region78
      $region77: #{conv_self_attention_forward.11} parent=5 // pred_region
        %s372 = ssub.s32 %s9, 2
        // Predicated region
        $region79: #{conv_self_attention_forward.11} parent=77 // pred_check
          %p373 = pneg %p106
        $region80: #{conv_self_attention_forward.11} parent=77 // pred_check_branch
          %375 = sbr.rel (%p373) target = $region82
        $region81: #{conv_self_attention_forward.11} parent=77 // pred_region
          %s376 = smul.u32 2, %s15
          %p377 = scmp.lt.s32.totalorder %s376, 3
          %s378 = scalar_select %p377, %s376, 3
          %s379 = smul.addr %s378, 4
          %s380 = scalar_lea.vmem %s3, %s379
        $region82: #{conv_self_attention_forward.11} parent=77 // pred_fallthru
          _
      $region78: #{conv_self_attention_forward.11} parent=5 // pred_fallthru
        _
    $region6: #{conv_self_attention_forward.11} parent=1 // loop_footer
      %s13 = sadd.s32 1, %s9
    $region7: #{conv_self_attention_forward.11} parent=1 // loop_footer_branch
      %8 = sbr.rel target = $region3
    $region8: #{conv_self_attention_forward.11} parent=1 // loop_exit
      _

</llo_original>
